<compile_context>
chip_gen: v7x
topology: tpu7x:2x2x1
jax: 0.10.0
libtpu: 0.0.40
codegen_flags: <defaults>
</compile_context>

<pallas_src>
import functools

import jax
import jax.numpy as jnp
from jax.experimental import pallas as pl
from jax.experimental.pallas import tpu as pltpu

LEAKY_SLOPE = 0.01  # nn.LeakyReLU() default


def _leaky_relu(x, slope):
    # slope < 1  =>  max(x, slope*x) == leaky_relu(x); saves a compare+select.
    return jnp.maximum(x, slope * x)


def _down_block_kernel(xph_ref, w1_ref, b1_ref, w2_ref, b2_ref, o_ref,
                       p1_ref, mid_ref, p2_ref, *, Ho, Wo, slope):
    """Fused DownBlock for one batch element (NHWC, im2col formulation).

    xph_ref: (1, 4, Ho+1, Wo+1, Cin) bf16  phase-split zero-padded input;
             phase index p*2+q holds x_pad[2i+p, 2j+q, :]
    w1_ref : (9*Cin, Cout)  bf16   taps flattened in (ky, kx, cin) order
    b1_ref : (1, Cout)      f32
    w2_ref : (9*Cout, Cout) bf16
    b2_ref : (1, Cout)      f32
    o_ref  : (1, Ho, Wo, Cout)
    p1_ref : (Ho*Wo, 9*Cin)     bf16 VMEM im2col patch for conv1
    mid_ref: (Ho+2, Wo+2, Cout) bf16 VMEM zero-padded intermediate
    p2_ref : (Ho*Wo, 9*Cout)    bf16 VMEM im2col patch for conv2
    """
    Cin = xph_ref.shape[-1]
    Cout = o_ref.shape[-1]

    # ---- conv1: 3x3 stride-2, phase-decomposed taps -> im2col -> ONE matmul
    for ky in range(3):
        for kx in range(3):
            tap = ky * 3 + kx
            p1_ref[:, tap * Cin:(tap + 1) * Cin] = xph_ref[
                0, (ky % 2) * 2 + (kx % 2),
                ky // 2:ky // 2 + Ho,
                kx // 2:kx // 2 + Wo, :].reshape(Ho * Wo, Cin)
    y1 = jnp.dot(p1_ref[...], w1_ref[...], preferred_element_type=jnp.float32)
    y1 = _leaky_relu(y1 + b1_ref[...], slope)            # f32, in vregs

    # ---- zero only the 1-pixel halo of mid; interior is overwritten below
    mid_ref[0:1, :, :] = jnp.zeros((1, Wo + 2, Cout), mid_ref.dtype)
    mid_ref[Ho + 1:Ho + 2, :, :] = jnp.zeros((1, Wo + 2, Cout), mid_ref.dtype)
    mid_ref[:, 0:1, :] = jnp.zeros((Ho + 2, 1, Cout), mid_ref.dtype)
    mid_ref[:, Wo + 1:Wo + 2, :] = jnp.zeros((Ho + 2, 1, Cout), mid_ref.dtype)
    mid_ref[1:Ho + 1, 1:Wo + 1, :] = (
        y1.reshape(Ho, Wo, Cout).astype(mid_ref.dtype))

    # ---- conv2: 3x3 stride-1 -> im2col -> ONE matmul ----
    for ky in range(3):
        for kx in range(3):
            tap = ky * 3 + kx
            p2_ref[:, tap * Cout:(tap + 1) * Cout] = mid_ref[
                ky:ky + Ho, kx:kx + Wo, :].reshape(Ho * Wo, Cout)
    y2 = jnp.dot(p2_ref[...], w2_ref[...], preferred_element_type=jnp.float32)
    y2 = _leaky_relu(y2 + b2_ref[...], slope)

    o_ref[...] = y2.reshape(1, Ho, Wo, Cout).astype(o_ref.dtype)


def _vmem_limit_bytes(Hp, Wp, Ho, Wo, Cin, Cout):
    bf, f4 = 2, 4
    xph_tile = 2 * 4 * Hp * Wp * Cin * bf                       # double-buffered
    weights = 2 * (9 * Cin * Cout + 9 * Cout * Cout) * bf
    biases = 2 * 2 * Cout * f4
    out_tile = 2 * Ho * Wo * Cout * f4
    scratch = (Ho * Wo * 9 * Cin + (Ho + 2) * (Wo + 2) * Cout
               + Ho * Wo * 9 * Cout) * bf
    need = xph_tile + weights + biases + out_tile + scratch
    return int(min(100 * 2 ** 20, max(32 * 2 ** 20, 2 * need)))


def down_block_forward(x_nchw, params, *, slope=LEAKY_SLOPE):
    """DownBlock(down='conv').forward. x_nchw: (N, Cin, H, W), H and W even."""
    w1, b1, w2, b2 = params
    # Cast to bf16 FIRST so the pad / phase-split passes move half the bytes.
    x = jnp.transpose(x_nchw.astype(jnp.bfloat16), (0, 2, 3, 1))  # NCHW->NHWC
    N, H, W, Cin = x.shape
    Cout = w1.shape[-1]
    Ho, Wo = H // 2, W // 2
    Hp, Wp = Ho + 1, Wo + 1

    # zero pad (Conv2d padding=1, 'zeros') + stride-2 phase split, once, bf16
    xp = jnp.pad(x, ((0, 0), (1, 1), (1, 1), (0, 0)))
    xph = xp.reshape(N, Hp, 2, Wp, 2, Cin).transpose(0, 2, 4, 1, 3, 5)
    xph = xph.reshape(N, 4, Hp, Wp, Cin)

    # im2col weight layout: (3,3,C,Cout) -> (9*C, Cout), tap order (ky,kx,c)
    w1m = w1.astype(jnp.bfloat16).reshape(9 * Cin, Cout)
    w2m = w2.astype(jnp.bfloat16).reshape(9 * Cout, Cout)
    b1r = b1.reshape(1, Cout).astype(jnp.float32)
    b2r = b2.reshape(1, Cout).astype(jnp.float32)

    kern = functools.partial(_down_block_kernel, Ho=Ho, Wo=Wo, slope=slope)
    out_nhwc = pl.pallas_call(
        kern,
        out_shape=jax.ShapeDtypeStruct((N, Ho, Wo, Cout), x_nchw.dtype),
        grid=(N,),
        in_specs=[
            pl.BlockSpec((1, 4, Hp, Wp, Cin), lambda n: (n, 0, 0, 0, 0)),
            pl.BlockSpec((9 * Cin, Cout), lambda n: (0, 0)),
            pl.BlockSpec((1, Cout), lambda n: (0, 0)),
            pl.BlockSpec((9 * Cout, Cout), lambda n: (0, 0)),
            pl.BlockSpec((1, Cout), lambda n: (0, 0)),
        ],
        out_specs=pl.BlockSpec((1, Ho, Wo, Cout), lambda n: (n, 0, 0, 0)),
        scratch_shapes=[
            pltpu.VMEM((Ho * Wo, 9 * Cin), jnp.bfloat16),
            pltpu.VMEM((Ho + 2, Wo + 2, Cout), jnp.bfloat16),
            pltpu.VMEM((Ho * Wo, 9 * Cout), jnp.bfloat16),
        ],
        compiler_params=pltpu.CompilerParams(
            dimension_semantics=("parallel",),
            vmem_limit_bytes=_vmem_limit_bytes(Hp, Wp, Ho, Wo, Cin, Cout)),
    )(xph, w1m, b1r, w2m, b2r)
    # TODO(synk): for realistic VGG resolutions (e.g. Ho=Wo=112) add a spatial
    # row-tile grid axis (N, num_row_tiles) with a 1-row conv2 halo so the
    # working set fits v7x's 64 MiB VMEM and the pipeline has enough steps.
    return jnp.transpose(out_nhwc, (0, 3, 1, 2))               # NHWC -> NCHW


def down_block_reference(x_nchw, params, *, slope=LEAKY_SLOPE):
    """Pure-JAX (lax conv) f32 reference."""
    w1, b1, w2, b2 = params
    x = jnp.transpose(x_nchw, (0, 2, 3, 1))
    y = jax.lax.conv_general_dilated(
        x, w1, window_strides=(2, 2), padding=((1, 1), (1, 1)),
        dimension_numbers=("NHWC", "HWIO", "NHWC"))
    y = jnp.maximum(y + b1, slope * (y + b1))
    y = jax.lax.conv_general_dilated(
        y, w2, window_strides=(1, 1), padding=((1, 1), (1, 1)),
        dimension_numbers=("NHWC", "HWIO", "NHWC"))
    y = jnp.maximum(y + b2, slope * (y + b2))
    return jnp.transpose(y, (0, 3, 1, 2))


def init_params(key, cin, cout):
    def conv_init(kw, kb, ci, co):
        fan_in = ci * 9
        bound = 1.0 / (fan_in ** 0.5)
        w = jax.random.uniform(kw, (3, 3, ci, co), jnp.float32, -bound, bound)
        b = jax.random.uniform(kb, (co,), jnp.float32, -bound, bound)
        return w, b
    k1, k2, k3, k4 = jax.random.split(key, 4)
    w1, b1 = conv_init(k1, k2, cin, cout)
    w2, b2 = conv_init(k3, k4, cout, cout)
    return (w1, b1, w2, b2)


# TODO(synk): the down='mean' branch (nn.AvgPool2d(2)) is not implemented;
# only the default down='conv' path is translated.

if __name__ == "__main__":
    key = jax.random.PRNGKey(0)
    k_params, k_x = jax.random.split(key)

    N, Cin, Cout, H, W = 2, 64, 128, 16, 16
    params = init_params(k_params, Cin, Cout)
    x = jax.random.normal(k_x, (N, Cin, H, W), dtype=jnp.float32)

    out = jax.block_until_ready(down_block_forward(x, params))
    assert out.shape == (N, Cout, H // 2, W // 2), out.shape

    ref = jax.block_until_ready(down_block_reference(x, params))
    max_err = float(jnp.max(jnp.abs(out - ref)))
    # bf16 MXU operands with f32 accumulation -> slightly relaxed tolerance.
    assert jnp.allclose(out, ref, rtol=3e-2, atol=3e-2), max_err

    print("KERNEL_OK")
</pallas_src>

<mosaic_0001>
module attributes {stable_mosaic.version = 11 : i64} {
  func.func @_down_block_kernel(%arg0: i32, %arg1: memref<1x4x9x9x64xbf16, #tpu.memory_space<vmem>>, %arg2: memref<576x128xbf16, #tpu.memory_space<vmem>>, %arg3: memref<1x128xf32, #tpu.memory_space<vmem>>, %arg4: memref<1152x128xbf16, #tpu.memory_space<vmem>>, %arg5: memref<1x128xf32, #tpu.memory_space<vmem>>, %arg6: memref<1x8x8x128xf32, #tpu.memory_space<vmem>>, %arg7: memref<64x576xbf16, #tpu.memory_space<vmem>>, %arg8: memref<10x10x128xbf16, #tpu.memory_space<vmem>>, %arg9: memref<64x1152xbf16, #tpu.memory_space<vmem>>) attributes {dimension_semantics = [#tpu.dimension_semantics<parallel>], iteration_bounds = array<i64: 2>, scalar_prefetch = 0 : i64, scratch_operands = 3 : i64, tpu.core_type = #tpu.core_type<tc>, window_params = [{transform_indices = @transform_0, window_bounds = array<i64: 1, 4, 9, 9, 64>}, {pipeline_mode = #tpu.pipeline_mode<synchronous>, transform_indices = @transform_1, window_bounds = array<i64: 576, 128>}, {pipeline_mode = #tpu.pipeline_mode<synchronous>, transform_indices = @transform_2, window_bounds = array<i64: 1, 128>}, {pipeline_mode = #tpu.pipeline_mode<synchronous>, transform_indices = @transform_3, window_bounds = array<i64: 1152, 128>}, {pipeline_mode = #tpu.pipeline_mode<synchronous>, transform_indices = @transform_4, window_bounds = array<i64: 1, 128>}, {transform_indices = @transform_5, window_bounds = array<i64: 1, 8, 8, 128>}]} {
    %c0 = arith.constant 0 : index
    %c0_0 = arith.constant 0 : index
    %c0_1 = arith.constant 0 : index
    %c0_2 = arith.constant 0 : index
    %c0_3 = arith.constant 0 : index
    %0 = vector.load %arg1[%c0, %c0_0, %c0_1, %c0_2, %c0_3] : memref<1x4x9x9x64xbf16, #tpu.memory_space<vmem>>, vector<1x1x8x8x64xbf16>
    %1 = vector.shape_cast %0 : vector<1x1x8x8x64xbf16> to vector<8x8x64xbf16>
    %2 = vector.shape_cast %1 : vector<8x8x64xbf16> to vector<64x64xbf16>
    %c0_4 = arith.constant 0 : index
    %c0_5 = arith.constant 0 : index
    %3 = vector.load %arg7[%c0_4, %c0_5] : memref<64x576xbf16, #tpu.memory_space<vmem>>, vector<64x64xbf16>
    tpu.vector_store %arg7[%c0_4, %c0_5], %2 {strides = array<i32>} : memref<64x576xbf16, #tpu.memory_space<vmem>>, vector<64x64xbf16>,
    %c0_6 = arith.constant 0 : index
    %c1 = arith.constant 1 : index
    %c0_7 = arith.constant 0 : index
    %c0_8 = arith.constant 0 : index
    %c0_9 = arith.constant 0 : index
    %4 = vector.load %arg1[%c0_6, %c1, %c0_7, %c0_8, %c0_9] : memref<1x4x9x9x64xbf16, #tpu.memory_space<vmem>>, vector<1x1x8x8x64xbf16>
    %5 = vector.shape_cast %4 : vector<1x1x8x8x64xbf16> to vector<8x8x64xbf16>
    %6 = vector.shape_cast %5 : vector<8x8x64xbf16> to vector<64x64xbf16>
    %c0_10 = arith.constant 0 : index
    %c64 = arith.constant 64 : index
    %7 = vector.load %arg7[%c0_10, %c64] : memref<64x576xbf16, #tpu.memory_space<vmem>>, vector<64x64xbf16>
    tpu.vector_store %arg7[%c0_10, %c64], %6 {strides = array<i32>} : memref<64x576xbf16, #tpu.memory_space<vmem>>, vector<64x64xbf16>,
    %c0_11 = arith.constant 0 : index
    %c0_12 = arith.constant 0 : index
    %c0_13 = arith.constant 0 : index
    %c1_14 = arith.constant 1 : index
    %c0_15 = arith.constant 0 : index
    %8 = vector.load %arg1[%c0_11, %c0_12, %c0_13, %c1_14, %c0_15] : memref<1x4x9x9x64xbf16, #tpu.memory_space<vmem>>, vector<1x1x8x8x64xbf16>
    %9 = vector.shape_cast %8 : vector<1x1x8x8x64xbf16> to vector<8x8x64xbf16>
    %10 = vector.shape_cast %9 : vector<8x8x64xbf16> to vector<64x64xbf16>
    %c0_16 = arith.constant 0 : index
    %c128 = arith.constant 128 : index
    %11 = vector.load %arg7[%c0_16, %c128] : memref<64x576xbf16, #tpu.memory_space<vmem>>, vector<64x64xbf16>
    tpu.vector_store %arg7[%c0_16, %c128], %10 {strides = array<i32>} : memref<64x576xbf16, #tpu.memory_space<vmem>>, vector<64x64xbf16>,
    %c0_17 = arith.constant 0 : index
    %c2 = arith.constant 2 : index
    %c0_18 = arith.constant 0 : index
    %c0_19 = arith.constant 0 : index
    %c0_20 = arith.constant 0 : index
    %12 = vector.load %arg1[%c0_17, %c2, %c0_18, %c0_19, %c0_20] : memref<1x4x9x9x64xbf16, #tpu.memory_space<vmem>>, vector<1x1x8x8x64xbf16>
    %13 = vector.shape_cast %12 : vector<1x1x8x8x64xbf16> to vector<8x8x64xbf16>
    %14 = vector.shape_cast %13 : vector<8x8x64xbf16> to vector<64x64xbf16>
    %c0_21 = arith.constant 0 : index
    %c192 = arith.constant 192 : index
    %15 = vector.load %arg7[%c0_21, %c192] : memref<64x576xbf16, #tpu.memory_space<vmem>>, vector<64x64xbf16>
    tpu.vector_store %arg7[%c0_21, %c192], %14 {strides = array<i32>} : memref<64x576xbf16, #tpu.memory_space<vmem>>, vector<64x64xbf16>,
    %c0_22 = arith.constant 0 : index
    %c3 = arith.constant 3 : index
    %c0_23 = arith.constant 0 : index
    %c0_24 = arith.constant 0 : index
    %c0_25 = arith.constant 0 : index
    %16 = vector.load %arg1[%c0_22, %c3, %c0_23, %c0_24, %c0_25] : memref<1x4x9x9x64xbf16, #tpu.memory_space<vmem>>, vector<1x1x8x8x64xbf16>
    %17 = vector.shape_cast %16 : vector<1x1x8x8x64xbf16> to vector<8x8x64xbf16>
    %18 = vector.shape_cast %17 : vector<8x8x64xbf16> to vector<64x64xbf16>
    %c0_26 = arith.constant 0 : index
    %c256 = arith.constant 256 : index
    %19 = vector.load %arg7[%c0_26, %c256] : memref<64x576xbf16, #tpu.memory_space<vmem>>, vector<64x64xbf16>
    tpu.vector_store %arg7[%c0_26, %c256], %18 {strides = array<i32>} : memref<64x576xbf16, #tpu.memory_space<vmem>>, vector<64x64xbf16>,
    %c0_27 = arith.constant 0 : index
    %c2_28 = arith.constant 2 : index
    %c0_29 = arith.constant 0 : index
    %c1_30 = arith.constant 1 : index
    %c0_31 = arith.constant 0 : index
    %20 = vector.load %arg1[%c0_27, %c2_28, %c0_29, %c1_30, %c0_31] : memref<1x4x9x9x64xbf16, #tpu.memory_space<vmem>>, vector<1x1x8x8x64xbf16>
    %21 = vector.shape_cast %20 : vector<1x1x8x8x64xbf16> to vector<8x8x64xbf16>
    %22 = vector.shape_cast %21 : vector<8x8x64xbf16> to vector<64x64xbf16>
    %c0_32 = arith.constant 0 : index
    %c320 = arith.constant 320 : index
    %23 = vector.load %arg7[%c0_32, %c320] : memref<64x576xbf16, #tpu.memory_space<vmem>>, vector<64x64xbf16>
    tpu.vector_store %arg7[%c0_32, %c320], %22 {strides = array<i32>} : memref<64x576xbf16, #tpu.memory_space<vmem>>, vector<64x64xbf16>,
    %c0_33 = arith.constant 0 : index
    %c0_34 = arith.constant 0 : index
    %c1_35 = arith.constant 1 : index
    %c0_36 = arith.constant 0 : index
    %c0_37 = arith.constant 0 : index
    %24 = vector.load %arg1[%c0_33, %c0_34, %c1_35, %c0_36, %c0_37] : memref<1x4x9x9x64xbf16, #tpu.memory_space<vmem>>, vector<1x1x8x8x64xbf16>
    %25 = vector.shape_cast %24 : vector<1x1x8x8x64xbf16> to vector<8x8x64xbf16>
    %26 = vector.shape_cast %25 : vector<8x8x64xbf16> to vector<64x64xbf16>
    %c0_38 = arith.constant 0 : index
    %c384 = arith.constant 384 : index
    %27 = vector.load %arg7[%c0_38, %c384] : memref<64x576xbf16, #tpu.memory_space<vmem>>, vector<64x64xbf16>
    tpu.vector_store %arg7[%c0_38, %c384], %26 {strides = array<i32>} : memref<64x576xbf16, #tpu.memory_space<vmem>>, vector<64x64xbf16>,
    %c0_39 = arith.constant 0 : index
    %c1_40 = arith.constant 1 : index
    %c1_41 = arith.constant 1 : index
    %c0_42 = arith.constant 0 : index
    %c0_43 = arith.constant 0 : index
    %28 = vector.load %arg1[%c0_39, %c1_40, %c1_41, %c0_42, %c0_43] : memref<1x4x9x9x64xbf16, #tpu.memory_space<vmem>>, vector<1x1x8x8x64xbf16>
    %29 = vector.shape_cast %28 : vector<1x1x8x8x64xbf16> to vector<8x8x64xbf16>
    %30 = vector.shape_cast %29 : vector<8x8x64xbf16> to vector<64x64xbf16>
    %c0_44 = arith.constant 0 : index
    %c448 = arith.constant 448 : index
    %31 = vector.load %arg7[%c0_44, %c448] : memref<64x576xbf16, #tpu.memory_space<vmem>>, vector<64x64xbf16>
    tpu.vector_store %arg7[%c0_44, %c448], %30 {strides = array<i32>} : memref<64x576xbf16, #tpu.memory_space<vmem>>, vector<64x64xbf16>,
    %c0_45 = arith.constant 0 : index
    %c0_46 = arith.constant 0 : index
    %c1_47 = arith.constant 1 : index
    %c1_48 = arith.constant 1 : index
    %c0_49 = arith.constant 0 : index
    %32 = vector.load %arg1[%c0_45, %c0_46, %c1_47, %c1_48, %c0_49] : memref<1x4x9x9x64xbf16, #tpu.memory_space<vmem>>, vector<1x1x8x8x64xbf16>
    %33 = vector.shape_cast %32 : vector<1x1x8x8x64xbf16> to vector<8x8x64xbf16>
    %34 = vector.shape_cast %33 : vector<8x8x64xbf16> to vector<64x64xbf16>
    %c0_50 = arith.constant 0 : index
    %c512 = arith.constant 512 : index
    %35 = vector.load %arg7[%c0_50, %c512] : memref<64x576xbf16, #tpu.memory_space<vmem>>, vector<64x64xbf16>
    tpu.vector_store %arg7[%c0_50, %c512], %34 {strides = array<i32>} : memref<64x576xbf16, #tpu.memory_space<vmem>>, vector<64x64xbf16>,
    %c0_51 = arith.constant 0 : index
    %c0_52 = arith.constant 0 : index
    %36 = vector.load %arg7[%c0_51, %c0_52] : memref<64x576xbf16, #tpu.memory_space<vmem>>, vector<64x576xbf16>
    %c0_53 = arith.constant 0 : index
    %c0_54 = arith.constant 0 : index
    %37 = vector.load %arg2[%c0_53, %c0_54] : memref<576x128xbf16, #tpu.memory_space<vmem>>, vector<576x128xbf16>
    %cst = arith.constant dense<0.000000e+00> : vector<64x128xf32>
    %38 = tpu.matmul %36, %37, %cst {dimension_numbers = #tpu.dot_dimension_numbers<[1], [0], [0], [1], [0, 0, 1, 1], [], []>} : vector<64x576xbf16>, vector<576x128xbf16>, vector<64x128xf32> -> vector<64x128xf32>
    %c0_55 = arith.constant 0 : index
    %c0_56 = arith.constant 0 : index
    %39 = vector.load %arg3[%c0_55, %c0_56] : memref<1x128xf32, #tpu.memory_space<vmem>>, vector<1x128xf32>
    %40 = vector.broadcast %39 : vector<1x128xf32> to vector<64x128xf32>
    %41 = arith.addf %38, %40 : vector<64x128xf32>
    %cst_57 = arith.constant 0.00999999977 : f32
    %42 = vector.broadcast %cst_57 : f32 to vector<64x128xf32>
    %43 = arith.mulf %42, %41 : vector<64x128xf32>
    %44 = arith.maximumf %41, %43 : vector<64x128xf32>
    %cst_58 = arith.constant 0.000000e+00 : bf16
    %45 = vector.broadcast %cst_58 : bf16 to vector<1x10x128xbf16>
    %c0_59 = arith.constant 0 : index
    %c0_60 = arith.constant 0 : index
    %c0_61 = arith.constant 0 : index
    %46 = vector.load %arg8[%c0_59, %c0_60, %c0_61] : memref<10x10x128xbf16, #tpu.memory_space<vmem>>, vector<1x10x128xbf16>
    tpu.vector_store %arg8[%c0_59, %c0_60, %c0_61], %45 {strides = array<i32>} : memref<10x10x128xbf16, #tpu.memory_space<vmem>>, vector<1x10x128xbf16>,
    %cst_62 = arith.constant 0.000000e+00 : bf16
    %47 = vector.broadcast %cst_62 : bf16 to vector<1x10x128xbf16>
    %c9 = arith.constant 9 : index
    %c0_63 = arith.constant 0 : index
    %c0_64 = arith.constant 0 : index
    %48 = vector.load %arg8[%c9, %c0_63, %c0_64] : memref<10x10x128xbf16, #tpu.memory_space<vmem>>, vector<1x10x128xbf16>
    tpu.vector_store %arg8[%c9, %c0_63, %c0_64], %47 {strides = array<i32>} : memref<10x10x128xbf16, #tpu.memory_space<vmem>>, vector<1x10x128xbf16>,
    %cst_65 = arith.constant 0.000000e+00 : bf16
    %49 = vector.broadcast %cst_65 : bf16 to vector<10x1x128xbf16>
    %c0_66 = arith.constant 0 : index
    %c0_67 = arith.constant 0 : index
    %c0_68 = arith.constant 0 : index
    %50 = vector.load %arg8[%c0_66, %c0_67, %c0_68] : memref<10x10x128xbf16, #tpu.memory_space<vmem>>, vector<10x1x128xbf16>
    tpu.vector_store %arg8[%c0_66, %c0_67, %c0_68], %49 {strides = array<i32>} : memref<10x10x128xbf16, #tpu.memory_space<vmem>>, vector<10x1x128xbf16>,
    %cst_69 = arith.constant 0.000000e+00 : bf16
    %51 = vector.broadcast %cst_69 : bf16 to vector<10x1x128xbf16>
    %c0_70 = arith.constant 0 : index
    %c9_71 = arith.constant 9 : index
    %c0_72 = arith.constant 0 : index
    %52 = vector.load %arg8[%c0_70, %c9_71, %c0_72] : memref<10x10x128xbf16, #tpu.memory_space<vmem>>, vector<10x1x128xbf16>
    tpu.vector_store %arg8[%c0_70, %c9_71, %c0_72], %51 {strides = array<i32>} : memref<10x10x128xbf16, #tpu.memory_space<vmem>>, vector<10x1x128xbf16>,
    %53 = vector.shape_cast %44 : vector<64x128xf32> to vector<8x8x128xf32>
    %54 = arith.truncf %53 : vector<8x8x128xf32> to vector<8x8x128xbf16>
    %c1_73 = arith.constant 1 : index
    %c1_74 = arith.constant 1 : index
    %c0_75 = arith.constant 0 : index
    %55 = vector.load %arg8[%c1_73, %c1_74, %c0_75] : memref<10x10x128xbf16, #tpu.memory_space<vmem>>, vector<8x8x128xbf16>
    tpu.vector_store %arg8[%c1_73, %c1_74, %c0_75], %54 {strides = array<i32>} : memref<10x10x128xbf16, #tpu.memory_space<vmem>>, vector<8x8x128xbf16>,
    %c0_76 = arith.constant 0 : index
    %c0_77 = arith.constant 0 : index
    %c0_78 = arith.constant 0 : index
    %56 = vector.load %arg8[%c0_76, %c0_77, %c0_78] : memref<10x10x128xbf16, #tpu.memory_space<vmem>>, vector<8x8x128xbf16>
    %57 = vector.shape_cast %56 : vector<8x8x128xbf16> to vector<64x128xbf16>
    %c0_79 = arith.constant 0 : index
    %c0_80 = arith.constant 0 : index
    %58 = vector.load %arg9[%c0_79, %c0_80] : memref<64x1152xbf16, #tpu.memory_space<vmem>>, vector<64x128xbf16>
    tpu.vector_store %arg9[%c0_79, %c0_80], %57 {strides = array<i32>} : memref<64x1152xbf16, #tpu.memory_space<vmem>>, vector<64x128xbf16>,
    %c0_81 = arith.constant 0 : index
    %c1_82 = arith.constant 1 : index
    %c0_83 = arith.constant 0 : index
    %59 = vector.load %arg8[%c0_81, %c1_82, %c0_83] : memref<10x10x128xbf16, #tpu.memory_space<vmem>>, vector<8x8x128xbf16>
    %60 = vector.shape_cast %59 : vector<8x8x128xbf16> to vector<64x128xbf16>
    %c0_84 = arith.constant 0 : index
    %c128_85 = arith.constant 128 : index
    %61 = vector.load %arg9[%c0_84, %c128_85] : memref<64x1152xbf16, #tpu.memory_space<vmem>>, vector<64x128xbf16>
    tpu.vector_store %arg9[%c0_84, %c128_85], %60 {strides = array<i32>} : memref<64x1152xbf16, #tpu.memory_space<vmem>>, vector<64x128xbf16>,
    %c0_86 = arith.constant 0 : index
    %c2_87 = arith.constant 2 : index
    %c0_88 = arith.constant 0 : index
    %62 = vector.load %arg8[%c0_86, %c2_87, %c0_88] : memref<10x10x128xbf16, #tpu.memory_space<vmem>>, vector<8x8x128xbf16>
    %63 = vector.shape_cast %62 : vector<8x8x128xbf16> to vector<64x128xbf16>
    %c0_89 = arith.constant 0 : index
    %c256_90 = arith.constant 256 : index
    %64 = vector.load %arg9[%c0_89, %c256_90] : memref<64x1152xbf16, #tpu.memory_space<vmem>>, vector<64x128xbf16>
    tpu.vector_store %arg9[%c0_89, %c256_90], %63 {strides = array<i32>} : memref<64x1152xbf16, #tpu.memory_space<vmem>>, vector<64x128xbf16>,
    %c1_91 = arith.constant 1 : index
    %c0_92 = arith.constant 0 : index
    %c0_93 = arith.constant 0 : index
    %65 = vector.load %arg8[%c1_91, %c0_92, %c0_93] : memref<10x10x128xbf16, #tpu.memory_space<vmem>>, vector<8x8x128xbf16>
    %66 = vector.shape_cast %65 : vector<8x8x128xbf16> to vector<64x128xbf16>
    %c0_94 = arith.constant 0 : index
    %c384_95 = arith.constant 384 : index
    %67 = vector.load %arg9[%c0_94, %c384_95] : memref<64x1152xbf16, #tpu.memory_space<vmem>>, vector<64x128xbf16>
    tpu.vector_store %arg9[%c0_94, %c384_95], %66 {strides = array<i32>} : memref<64x1152xbf16, #tpu.memory_space<vmem>>, vector<64x128xbf16>,
    %c1_96 = arith.constant 1 : index
    %c1_97 = arith.constant 1 : index
    %c0_98 = arith.constant 0 : index
    %68 = vector.load %arg8[%c1_96, %c1_97, %c0_98] : memref<10x10x128xbf16, #tpu.memory_space<vmem>>, vector<8x8x128xbf16>
    %69 = vector.shape_cast %68 : vector<8x8x128xbf16> to vector<64x128xbf16>
    %c0_99 = arith.constant 0 : index
    %c512_100 = arith.constant 512 : index
    %70 = vector.load %arg9[%c0_99, %c512_100] : memref<64x1152xbf16, #tpu.memory_space<vmem>>, vector<64x128xbf16>
    tpu.vector_store %arg9[%c0_99, %c512_100], %69 {strides = array<i32>} : memref<64x1152xbf16, #tpu.memory_space<vmem>>, vector<64x128xbf16>,
    %c1_101 = arith.constant 1 : index
    %c2_102 = arith.constant 2 : index
    %c0_103 = arith.constant 0 : index
    %71 = vector.load %arg8[%c1_101, %c2_102, %c0_103] : memref<10x10x128xbf16, #tpu.memory_space<vmem>>, vector<8x8x128xbf16>
    %72 = vector.shape_cast %71 : vector<8x8x128xbf16> to vector<64x128xbf16>
    %c0_104 = arith.constant 0 : index
    %c640 = arith.constant 640 : index
    %73 = vector.load %arg9[%c0_104, %c640] : memref<64x1152xbf16, #tpu.memory_space<vmem>>, vector<64x128xbf16>
    tpu.vector_store %arg9[%c0_104, %c640], %72 {strides = array<i32>} : memref<64x1152xbf16, #tpu.memory_space<vmem>>, vector<64x128xbf16>,
    %c2_105 = arith.constant 2 : index
    %c0_106 = arith.constant 0 : index
    %c0_107 = arith.constant 0 : index
    %74 = vector.load %arg8[%c2_105, %c0_106, %c0_107] : memref<10x10x128xbf16, #tpu.memory_space<vmem>>, vector<8x8x128xbf16>
    %75 = vector.shape_cast %74 : vector<8x8x128xbf16> to vector<64x128xbf16>
    %c0_108 = arith.constant 0 : index
    %c768 = arith.constant 768 : index
    %76 = vector.load %arg9[%c0_108, %c768] : memref<64x1152xbf16, #tpu.memory_space<vmem>>, vector<64x128xbf16>
    tpu.vector_store %arg9[%c0_108, %c768], %75 {strides = array<i32>} : memref<64x1152xbf16, #tpu.memory_space<vmem>>, vector<64x128xbf16>,
    %c2_109 = arith.constant 2 : index
    %c1_110 = arith.constant 1 : index
    %c0_111 = arith.constant 0 : index
    %77 = vector.load %arg8[%c2_109, %c1_110, %c0_111] : memref<10x10x128xbf16, #tpu.memory_space<vmem>>, vector<8x8x128xbf16>
    %78 = vector.shape_cast %77 : vector<8x8x128xbf16> to vector<64x128xbf16>
    %c0_112 = arith.constant 0 : index
    %c896 = arith.constant 896 : index
    %79 = vector.load %arg9[%c0_112, %c896] : memref<64x1152xbf16, #tpu.memory_space<vmem>>, vector<64x128xbf16>
    tpu.vector_store %arg9[%c0_112, %c896], %78 {strides = array<i32>} : memref<64x1152xbf16, #tpu.memory_space<vmem>>, vector<64x128xbf16>,
    %c2_113 = arith.constant 2 : index
    %c2_114 = arith.constant 2 : index
    %c0_115 = arith.constant 0 : index
    %80 = vector.load %arg8[%c2_113, %c2_114, %c0_115] : memref<10x10x128xbf16, #tpu.memory_space<vmem>>, vector<8x8x128xbf16>
    %81 = vector.shape_cast %80 : vector<8x8x128xbf16> to vector<64x128xbf16>
    %c0_116 = arith.constant 0 : index
    %c1024 = arith.constant 1024 : index
    %82 = vector.load %arg9[%c0_116, %c1024] : memref<64x1152xbf16, #tpu.memory_space<vmem>>, vector<64x128xbf16>
    tpu.vector_store %arg9[%c0_116, %c1024], %81 {strides = array<i32>} : memref<64x1152xbf16, #tpu.memory_space<vmem>>, vector<64x128xbf16>,
    %c0_117 = arith.constant 0 : index
    %c0_118 = arith.constant 0 : index
    %83 = vector.load %arg9[%c0_117, %c0_118] : memref<64x1152xbf16, #tpu.memory_space<vmem>>, vector<64x1152xbf16>
    %c0_119 = arith.constant 0 : index
    %c0_120 = arith.constant 0 : index
    %84 = vector.load %arg4[%c0_119, %c0_120] : memref<1152x128xbf16, #tpu.memory_space<vmem>>, vector<1152x128xbf16>
    %cst_121 = arith.constant dense<0.000000e+00> : vector<64x128xf32>
    %85 = tpu.matmul %83, %84, %cst_121 {dimension_numbers = #tpu.dot_dimension_numbers<[1], [0], [0], [1], [0, 0, 1, 1], [], []>} : vector<64x1152xbf16>, vector<1152x128xbf16>, vector<64x128xf32> -> vector<64x128xf32>
    %c0_122 = arith.constant 0 : index
    %c0_123 = arith.constant 0 : index
    %86 = vector.load %arg5[%c0_122, %c0_123] : memref<1x128xf32, #tpu.memory_space<vmem>>, vector<1x128xf32>
    %87 = vector.broadcast %86 : vector<1x128xf32> to vector<64x128xf32>
    %88 = arith.addf %85, %87 : vector<64x128xf32>
    %cst_124 = arith.constant 0.00999999977 : f32
    %89 = vector.broadcast %cst_124 : f32 to vector<64x128xf32>
    %90 = arith.mulf %89, %88 : vector<64x128xf32>
    %91 = arith.maximumf %88, %90 : vector<64x128xf32>
    %92 = vector.shape_cast %91 : vector<64x128xf32> to vector<1x8x8x128xf32>
    %c0_125 = arith.constant 0 : index
    %c0_126 = arith.constant 0 : index
    %c0_127 = arith.constant 0 : index
    %c0_128 = arith.constant 0 : index
    %93 = vector.load %arg6[%c0_125, %c0_126, %c0_127, %c0_128] : memref<1x8x8x128xf32, #tpu.memory_space<vmem>>, vector<1x8x8x128xf32>
    tpu.vector_store %arg6[%c0_125, %c0_126, %c0_127, %c0_128], %92 {strides = array<i32>} : memref<1x8x8x128xf32, #tpu.memory_space<vmem>>, vector<1x8x8x128xf32>,
    return
  }
  func.func @transform_0(%arg0: i32) -> (i32, i32, i32, i32, i32) {
    %c0_i32 = arith.constant 0 : i32
    %c0_i32_0 = arith.constant 0 : i32
    %c0_i32_1 = arith.constant 0 : i32
    %c0_i32_2 = arith.constant 0 : i32
    %c0_i32_3 = arith.constant 0 : i32
    return %arg0, %c0_i32, %c0_i32_0, %c0_i32_1, %c0_i32_2 : i32, i32, i32, i32, i32
  }
  func.func @transform_1(%arg0: i32) -> (i32, i32) {
    %c0_i32 = arith.constant 0 : i32
    %c0_i32_0 = arith.constant 0 : i32
    %c0_i32_1 = arith.constant 0 : i32
    return %c0_i32, %c0_i32_0 : i32, i32
  }
  func.func @transform_2(%arg0: i32) -> (i32, i32) {
    %c0_i32 = arith.constant 0 : i32
    %c0_i32_0 = arith.constant 0 : i32
    %c0_i32_1 = arith.constant 0 : i32
    return %c0_i32, %c0_i32_0 : i32, i32
  }
  func.func @transform_3(%arg0: i32) -> (i32, i32) {
    %c0_i32 = arith.constant 0 : i32
    %c0_i32_0 = arith.constant 0 : i32
    %c0_i32_1 = arith.constant 0 : i32
    return %c0_i32, %c0_i32_0 : i32, i32
  }
  func.func @transform_4(%arg0: i32) -> (i32, i32) {
    %c0_i32 = arith.constant 0 : i32
    %c0_i32_0 = arith.constant 0 : i32
    %c0_i32_1 = arith.constant 0 : i32
    return %c0_i32, %c0_i32_0 : i32, i32
  }
  func.func @transform_5(%arg0: i32) -> (i32, i32, i32, i32) {
    %c0_i32 = arith.constant 0 : i32
    %c0_i32_0 = arith.constant 0 : i32
    %c0_i32_1 = arith.constant 0 : i32
    %c0_i32_2 = arith.constant 0 : i32
    return %arg0, %c0_i32, %c0_i32_0, %c0_i32_1 : i32, i32, i32, i32
  }
}

</mosaic_0001>

<llo_original>
// kernel: tpu_custom_call.1
$region0: #{tpu_custom_call.1}
  #allocation0 [shape = 'u32[]', space=smem, size = 0x4, offset = 0x4, fixed_abs, tag = 'smem constant byte address 0x4 - core index']
  #allocation1 [shape = 'u32[144,128]{1,0:T(1,128)}', space=vmem, size = 0x12000, scoped, tag = 'internal scratch']
  #allocation2 [shape = 'bf16[64,576]{1,0:T(16,128)(2,1)}', space=vmem, size = 0x14000, scoped, tag = 'scratch operand']
  #allocation3 [shape = 'bf16[10,10,128]{2,1,0:T(8,128)(2,1)}', space=vmem, size = 0xa000, scoped, tag = 'scratch operand']
  #allocation4 [shape = 'bf16[64,1152]{1,0:T(16,128)(2,1)}', space=vmem, size = 0x24000, scoped, tag = 'scratch operand']
  %s0 = inlined_call_operand.vmem [shape: bf16[2,4,9,9,64], index: 0, kind: input, shape index: {}]
  %s1 = inlined_call_operand.vmem [shape: bf16[576,128], index: 1, kind: input, shape index: {}]
  %s2 = inlined_call_operand.vmem [shape: f32[1,128], index: 2, kind: input, shape index: {}]
  %s3 = inlined_call_operand.vmem [shape: bf16[1152,128], index: 3, kind: input, shape index: {}]
  %s4 = inlined_call_operand.vmem [shape: f32[1,128], index: 4, kind: input, shape index: {}]
  %s5 = inlined_call_operand.hbm [shape: f32[2,8,8,128], index: 5, kind: output, shape index: {}]
  %s6 = sld [smem:[#allocation0]]
  $region53: #{tpu_custom_call.1} parent=0
    _
  %s8 = ssub.s32 1, %s6
  %s9 = scalar_select 0, %s8, %s6
  $region1: #{tpu_custom_call.1} parent=0
    #allocation5 [shape = 'u8[65536]{0}', space=vmem, size = 0x10000, scoped, tag = 'output window, operand 0']
    #allocation6 [shape = 's32[2]{0}', space=sflag, size = 0x8, scoped, tag = 'scoped memory for tpu_custom_call.1']
    %10 = vsyncpa [#allocation6], 0
    %s11 = scalar_lea.sflag [#allocation6], 1
    %12 = vsyncpa %s11, 0
    loop: start=0, step=1, limit=4
    $region2: #{tpu_custom_call.1} parent=1 // loop_pre_header
      _
    $region3: #{tpu_custom_call.1} parent=1 // loop_header
      %s14 = sphi 0, %s18
      %p15 = scmp.ge.s32.totalorder %s14, 4
      %s24 = sphi 0, %s26
      %s27 = sphi 0, %s24
      %s28 = sphi 0, %s27
      %s44 = sphi 0, %s28
      %s48 = sphi 0, %s48
      %s50 = sphi 0, %s48
      %s51 = sphi 0, %s50
      %s65 = sphi 0, %s51
      %s69 = sphi 0, %s69
      %s71 = sphi 0, %s69
      %s72 = sphi 0, %s71
      %s86 = sphi 0, %s72
      %s90 = sphi 0, %s90
      %s92 = sphi 0, %s90
      %s93 = sphi 0, %s92
      %s107 = sphi 0, %s93
      %s111 = sphi 0, %s111
      %s113 = sphi 0, %s111
      %s114 = sphi 0, %s113
      %s128 = sphi 0, %s114
      %s134 = sphi 0, %s136
      %s137 = sphi 0, %s134
      %s138 = sphi 0, %s137
      %s154 = sphi 0, %s138
    $region4: #{tpu_custom_call.1} parent=1 // loop_header_branch
      %17 = sbr.rel (%p15) target = $region8
    $region5: #{tpu_custom_call.1} parent=1 // loop_body
      %s19 = ssub.s32 %s14, 1
      %s20 = ssub.s32 %s14, 2
      %s21 = sadd.s32 %s14, 1
      %s22 = ssub.s32 %s14, %s21
      %p23 = scmp.eq.s32.totalorder %s22, 0
      %s25 = sadd.s32 %s24, 1
      %s26 = scalar_select %p23, %s24, %s25
      %p29 = pneg %p23
      %p30 = scmp.eq.s32.totalorder %s14, 1
      %p31 = por %p29, %p30
      %p32 = scmp.ne.s32.totalorder %s24, %s27
      %p33 = scmp.eq.s32.totalorder %s14, 0
      %p34 = por %p32, %p33
      %p35 = scmp.ne.s32.totalorder %s24, %s27
      %p36 = scmp.eq.s32.totalorder %s19, 1
      %p37 = por %p35, %p36
      %p38 = scmp.ne.s32.totalorder %s27, %s28
      %p39 = scmp.eq.s32.totalorder %s19, 0
      %p40 = por %p38, %p39
      %p41 = scmp.ne.s32.totalorder %s27, %s28
      %p42 = scmp.eq.s32.totalorder %s20, 1
      %p43 = por %p41, %p42
      %p45 = scmp.ne.s32.totalorder %s28, %s44
      %p46 = scmp.eq.s32.totalorder %s20, 0
      %p47 = por %p45, %p46
      %s49 = sadd.s32 %s48, 1
      %p52 = scmp.eq.s32.totalorder %s14, 1
      %p53 = scmp.ne.s32.totalorder %s48, %s50
      %p54 = scmp.eq.s32.totalorder %s14, 0
      %p55 = por %p53, %p54
      %p56 = scmp.ne.s32.totalorder %s48, %s50
      %p57 = scmp.eq.s32.totalorder %s19, 1
      %p58 = por %p56, %p57
      %p59 = scmp.ne.s32.totalorder %s50, %s51
      %p60 = scmp.eq.s32.totalorder %s19, 0
      %p61 = por %p59, %p60
      %p62 = scmp.ne.s32.totalorder %s50, %s51
      %p63 = scmp.eq.s32.totalorder %s20, 1
      %p64 = por %p62, %p63
      %p66 = scmp.ne.s32.totalorder %s51, %s65
      %p67 = scmp.eq.s32.totalorder %s20, 0
      %p68 = por %p66, %p67
      %s70 = sadd.s32 %s69, 1
      %p73 = scmp.eq.s32.totalorder %s14, 1
      %p74 = scmp.ne.s32.totalorder %s69, %s71
      %p75 = scmp.eq.s32.totalorder %s14, 0
      %p76 = por %p74, %p75
      %p77 = scmp.ne.s32.totalorder %s69, %s71
      %p78 = scmp.eq.s32.totalorder %s19, 1
      %p79 = por %p77, %p78
      %p80 = scmp.ne.s32.totalorder %s71, %s72
      %p81 = scmp.eq.s32.totalorder %s19, 0
      %p82 = por %p80, %p81
      %p83 = scmp.ne.s32.totalorder %s71, %s72
      %p84 = scmp.eq.s32.totalorder %s20, 1
      %p85 = por %p83, %p84
      %p87 = scmp.ne.s32.totalorder %s72, %s86
      %p88 = scmp.eq.s32.totalorder %s20, 0
      %p89 = por %p87, %p88
      %s91 = sadd.s32 %s90, 1
      %p94 = scmp.eq.s32.totalorder %s14, 1
      %p95 = scmp.ne.s32.totalorder %s90, %s92
      %p96 = scmp.eq.s32.totalorder %s14, 0
      %p97 = por %p95, %p96
      %p98 = scmp.ne.s32.totalorder %s90, %s92
      %p99 = scmp.eq.s32.totalorder %s19, 1
      %p100 = por %p98, %p99
      %p101 = scmp.ne.s32.totalorder %s92, %s93
      %p102 = scmp.eq.s32.totalorder %s19, 0
      %p103 = por %p101, %p102
      %p104 = scmp.ne.s32.totalorder %s92, %s93
      %p105 = scmp.eq.s32.totalorder %s20, 1
      %p106 = por %p104, %p105
      %p108 = scmp.ne.s32.totalorder %s93, %s107
      %p109 = scmp.eq.s32.totalorder %s20, 0
      %p110 = por %p108, %p109
      %s112 = sadd.s32 %s111, 1
      %p115 = scmp.eq.s32.totalorder %s14, 1
      %p116 = scmp.ne.s32.totalorder %s111, %s113
      %p117 = scmp.eq.s32.totalorder %s14, 0
      %p118 = por %p116, %p117
      %p119 = scmp.ne.s32.totalorder %s111, %s113
      %p120 = scmp.eq.s32.totalorder %s19, 1
      %p121 = por %p119, %p120
      %p122 = scmp.ne.s32.totalorder %s113, %s114
      %p123 = scmp.eq.s32.totalorder %s19, 0
      %p124 = por %p122, %p123
      %p125 = scmp.ne.s32.totalorder %s113, %s114
      %p126 = scmp.eq.s32.totalorder %s20, 1
      %p127 = por %p125, %p126
      %p129 = scmp.ne.s32.totalorder %s114, %s128
      %p130 = scmp.eq.s32.totalorder %s20, 0
      %p131 = por %p129, %p130
      %s132 = ssub.s32 %s14, %s21
      %p133 = scmp.eq.s32.totalorder %s132, 0
      %s135 = sadd.s32 %s134, 1
      %s136 = scalar_select %p133, %s134, %s135
      %p139 = pneg %p133
      %p140 = scmp.eq.s32.totalorder %s14, 1
      %p141 = por %p139, %p140
      %p142 = scmp.ne.s32.totalorder %s134, %s137
      %p143 = scmp.eq.s32.totalorder %s14, 0
      %p144 = por %p142, %p143
      %p145 = scmp.ne.s32.totalorder %s134, %s137
      %p146 = scmp.eq.s32.totalorder %s19, 1
      %p147 = por %p145, %p146
      %p148 = scmp.ne.s32.totalorder %s137, %s138
      %p149 = scmp.eq.s32.totalorder %s19, 0
      %p150 = por %p148, %p149
      %p151 = scmp.ne.s32.totalorder %s137, %s138
      %p152 = scmp.eq.s32.totalorder %s20, 1
      %p153 = por %p151, %p152
      %p155 = scmp.ne.s32.totalorder %s138, %s154
      %p156 = scmp.eq.s32.totalorder %s20, 0
      %p157 = por %p155, %p156
      %p158 = scmp.le.s32.totalorder 1, %s14
      %p159 = scmp.lt.s32.totalorder %s14, 3
      %p160 = pnand %p158, %p159
      %p161 = pneg %p160
      // Predicated region
      $region9: #{tpu_custom_call.1} parent=5 // pred_check
        _
      $region10: #{tpu_custom_call.1} parent=5 // pred_check_branch
        %163 = sbr.rel (%p160) target = $region12
      $region11: #{tpu_custom_call.1} parent=5 // pred_region
        %s164 = ssub.s32 %s14, 1
        // Predicated region
        $region13: #{tpu_custom_call.1} parent=11 // pred_check
          %p165 = pneg %p61
        $region14: #{tpu_custom_call.1} parent=11 // pred_check_branch
          %167 = sbr.rel (%p165) target = $region16
        $region15: #{tpu_custom_call.1} parent=11 // pred_region
          _
        $region16: #{tpu_custom_call.1} parent=11 // pred_fallthru
          _
        // Predicated region
        $region17: #{tpu_custom_call.1} parent=11 // pred_check
          %p168 = pneg %p82
        $region18: #{tpu_custom_call.1} parent=11 // pred_check_branch
          %170 = sbr.rel (%p168) target = $region20
        $region19: #{tpu_custom_call.1} parent=11 // pred_region
          _
        $region20: #{tpu_custom_call.1} parent=11 // pred_fallthru
          _
        // Predicated region
        $region21: #{tpu_custom_call.1} parent=11 // pred_check
          %p171 = pneg %p103
        $region22: #{tpu_custom_call.1} parent=11 // pred_check_branch
          %173 = sbr.rel (%p171) target = $region24
        $region23: #{tpu_custom_call.1} parent=11 // pred_region
          _
        $region24: #{tpu_custom_call.1} parent=11 // pred_fallthru
          _
        // Predicated region
        $region25: #{tpu_custom_call.1} parent=11 // pred_check
          %p174 = pneg %p124
        $region26: #{tpu_custom_call.1} parent=11 // pred_check_branch
          %176 = sbr.rel (%p174) target = $region28
        $region27: #{tpu_custom_call.1} parent=11 // pred_region
          _
        $region28: #{tpu_custom_call.1} parent=11 // pred_fallthru
          _
      $region12: #{tpu_custom_call.1} parent=5 // pred_fallthru
        _
      %p177 = scmp.lt.s32.totalorder %s14, 2
      // Predicated region
      $region29: #{tpu_custom_call.1} parent=5 // pred_check
        %p178 = pneg %p177
      $region30: #{tpu_custom_call.1} parent=5 // pred_check_branch
        %180 = sbr.rel (%p178) target = $region32
      $region31: #{tpu_custom_call.1} parent=5 // pred_region
        // Predicated region
        $region33: #{tpu_custom_call.1} parent=31 // pred_check
          %p181 = pneg %p34
        $region34: #{tpu_custom_call.1} parent=31 // pred_check_branch
          %183 = sbr.rel (%p181) target = $region36
        $region35: #{tpu_custom_call.1} parent=31 // pred_region
          %p184 = scmp.lt.s32.totalorder %s14, 1
          %s185 = scalar_select %p184, %s14, 1
          %s186 = smul.addr %s185, 72
          %s187 = smul.addr %s186, 4
          %s188 = scalar_lea.vmem %s0, %s187
        $region36: #{tpu_custom_call.1} parent=31 // pred_fallthru
          _
      $region32: #{tpu_custom_call.1} parent=5 // pred_fallthru
        _
      %p189 = scmp.le.s32.totalorder 1, %s14
      %p190 = scmp.lt.s32.totalorder %s14, 3
      %p191 = pnand %p189, %p190
      %p192 = pneg %p191
      // Predicated region
      $region37: #{tpu_custom_call.1} parent=5 // pred_check
        _
      $region38: #{tpu_custom_call.1} parent=5 // pred_check_branch
        %194 = sbr.rel (%p191) target = $region40
      $region39: #{tpu_custom_call.1} parent=5 // pred_region
        %s195 = ssub.s32 %s14, 1
        %p196 = scmp.lt.s32.totalorder %s19, 1
        %s197 = scalar_select %p196, %s19, 1
        %s198 = smul.addr %s197, 72
        %s199 = smul.addr %s198, 4
        %s200 = scalar_lea.vmem %s0, %s199
        %p201 = pneg %p40
        %p202 = pneg %p37
        %p203 = pneg %p61
        %p204 = pneg %p58
        %p205 = pneg %p82
        %p206 = pneg %p79
        %p207 = pneg %p103
        %p208 = pneg %p100
        %p209 = pneg %p124
        %p210 = pneg %p121
        %p211 = pneg %p150
        %p212 = pneg %p147
        %s213 = sand.u32 %s137, 1
        %s214 = scalar_lea.sflag [#allocation6], %s213
        %s215 = sand.u32 %s137, 1
        %s216 = smul.addr %s215, 64
        %s217 = scalar_lea.vmem [#allocation5], %s216
        %p218 = scmp.lt.s32.totalorder %s19, 1
        %s219 = scalar_select %p218, %s19, 1
        %s220 = smul.addr %s219, 72
        %s221 = smul.addr %s220, 4
        %s222 = scalar_lea.vmem %s0, %s221
        %v224 = vld [vmem:[%s222] sm:$0xf]
        %v225 = vld [vmem:[%s222 + $0x8] sm:$0xf]
        %v226 = vld [vmem:[%s222 + $0x10] sm:$0xf]
        %v227 = vld [vmem:[%s222 + $0x18] sm:$0xf]
        %v228 = vld [vmem:[%s222 + $0x20] sm:$0xf]
        %v229 = vld [vmem:[%s222 + $0x28] sm:$0xf]
        %v230 = vld [vmem:[%s222 + $0x30] sm:$0xf]
        %v231 = vld [vmem:[%s222 + $0x38] sm:$0xf]
        %v240 = vunpack.c.l.b16 %v224
        %v241 = vunpack.c.l.b16 %v225
        %v242 = vunpack.c.l.b16 %v226
        %v243 = vunpack.c.l.b16 %v227
        %v244 = vunpack.c.l.b16 %v228
        %v245 = vunpack.c.l.b16 %v229
        %v246 = vunpack.c.l.b16 %v230
        %v247 = vunpack.c.l.b16 %v231
        %v248 = vpack.c.b16 %v241, %v240
        %v249 = vpack.c.b16 %v243, %v242
        %v250 = vpack.c.b16 %v245, %v244
        %v251 = vpack.c.b16 %v247, %v246
        %vm256 = vcmask 523264
        %257 = vst.msk [vmem:[#allocation2] sm:$0xff] %vm256, %v248
        %258 = vst.msk [vmem:[#allocation2 + $0x28] sm:$0xff] %vm256, %v249
        %259 = vst.msk [vmem:[#allocation2 + $0x50] sm:$0xff] %vm256, %v250
        %260 = vst.msk [vmem:[#allocation2 + $0x78] sm:$0xff] %vm256, %v251
        %s261 = scalar_lea.vmem %s222, 72
        %v262 = vld [vmem:[%s261] sm:$0xf]
        %v263 = vld [vmem:[%s261 + $0x8] sm:$0xf]
        %v264 = vld [vmem:[%s261 + $0x10] sm:$0xf]
        %v265 = vld [vmem:[%s261 + $0x18] sm:$0xf]
        %v266 = vld [vmem:[%s261 + $0x20] sm:$0xf]
        %v267 = vld [vmem:[%s261 + $0x28] sm:$0xf]
        %v268 = vld [vmem:[%s261 + $0x30] sm:$0xf]
        %v269 = vld [vmem:[%s261 + $0x38] sm:$0xf]
        %v278 = vunpack.c.l.b16 %v262
        %v279 = vunpack.c.l.b16 %v263
        %v280 = vunpack.c.l.b16 %v264
        %v281 = vunpack.c.l.b16 %v265
        %v282 = vunpack.c.l.b16 %v266
        %v283 = vunpack.c.l.b16 %v267
        %v284 = vunpack.c.l.b16 %v268
        %v285 = vunpack.c.l.b16 %v269
        %v286 = vpack.c.b16 %v279, %v278
        %v287 = vpack.c.b16 %v281, %v280
        %v288 = vpack.c.b16 %v283, %v282
        %v289 = vpack.c.b16 %v285, %v284
        %290 = vrot.lane.b32.xlu0 %v286, 64
        %v291 = vpop.permute.xlu0 %290
        %292 = vrot.lane.b32.xlu0 %v287, 64
        %v293 = vpop.permute.xlu0 %292
        %294 = vrot.lane.b32.xlu0 %v288, 64
        %v295 = vpop.permute.xlu0 %294
        %296 = vrot.lane.b32.xlu0 %v289, 64
        %v297 = vpop.permute.xlu0 %296
        %vm302 = vcmask 1048064
        %303 = vst.msk [vmem:[#allocation2] sm:$0xff] %vm302, %v291
        %304 = vst.msk [vmem:[#allocation2 + $0x28] sm:$0xff] %vm302, %v293
        %305 = vst.msk [vmem:[#allocation2 + $0x50] sm:$0xff] %vm302, %v295
        %306 = vst.msk [vmem:[#allocation2 + $0x78] sm:$0xff] %vm302, %v297
        %v307 = vld [vmem:[%s222] sm:$0xf]
        %v308 = vld [vmem:[%s222 + $0x4] sm:$0x1]
        %v309 = vld [vmem:[%s222 + $0x8] sm:$0xf]
        %v310 = vld [vmem:[%s222 + $0xc] sm:$0x1]
        %v311 = vld [vmem:[%s222 + $0x10] sm:$0xf]
        %v312 = vld [vmem:[%s222 + $0x14] sm:$0x1]
        %v313 = vld [vmem:[%s222 + $0x18] sm:$0xf]
        %v314 = vld [vmem:[%s222 + $0x1c] sm:$0x1]
        %v315 = vld [vmem:[%s222 + $0x20] sm:$0xf]
        %v316 = vld [vmem:[%s222 + $0x24] sm:$0x1]
        %v317 = vld [vmem:[%s222 + $0x28] sm:$0xf]
        %v318 = vld [vmem:[%s222 + $0x2c] sm:$0x1]
        %v319 = vld [vmem:[%s222 + $0x30] sm:$0xf]
        %v320 = vld [vmem:[%s222 + $0x34] sm:$0x1]
        %v321 = vld [vmem:[%s222 + $0x38] sm:$0xf]
        %v322 = vld [vmem:[%s222 + $0x3c] sm:$0x1]
        %vm323 = vsmask.f32 3328
        %vm324 = vsmask.f32 7440
        %vm325 = vmor %vm323, %vm324
        %v327 = vshrl.u32 %v307, 16
        %v329 = vrot.slane %v327, 4
        %v330 = vshll.u32 %v307, 16
        %v332 = vrot.slane %v330, 5
        %v333 = vor.u32 %v329, %v332
        %v334 = vrot.slane %v333, 4
        %v336 = vshll.u32 %v308, 16
        %v338 = vrot.slane %v336, 5
        %v339 = vsel %vm325, %v334, %v338
        %v341 = vshrl.u32 %v309, 16
        %v343 = vrot.slane %v341, 4
        %v344 = vshll.u32 %v309, 16
        %v346 = vrot.slane %v344, 5
        %v347 = vor.u32 %v343, %v346
        %v348 = vrot.slane %v347, 4
        %v350 = vshll.u32 %v310, 16
        %v352 = vrot.slane %v350, 5
        %v353 = vsel %vm325, %v348, %v352
        %v355 = vshrl.u32 %v311, 16
        %v357 = vrot.slane %v355, 4
        %v358 = vshll.u32 %v311, 16
        %v360 = vrot.slane %v358, 5
        %v361 = vor.u32 %v357, %v360
        %v362 = vrot.slane %v361, 4
        %v364 = vshll.u32 %v312, 16
        %v366 = vrot.slane %v364, 5
        %v367 = vsel %vm325, %v362, %v366
        %v369 = vshrl.u32 %v313, 16
        %v371 = vrot.slane %v369, 4
        %v372 = vshll.u32 %v313, 16
        %v374 = vrot.slane %v372, 5
        %v375 = vor.u32 %v371, %v374
        %v376 = vrot.slane %v375, 4
        %v378 = vshll.u32 %v314, 16
        %v380 = vrot.slane %v378, 5
        %v381 = vsel %vm325, %v376, %v380
        %v383 = vshrl.u32 %v315, 16
        %v385 = vrot.slane %v383, 4
        %v386 = vshll.u32 %v315, 16
        %v388 = vrot.slane %v386, 5
        %v389 = vor.u32 %v385, %v388
        %v390 = vrot.slane %v389, 4
        %v392 = vshll.u32 %v316, 16
        %v394 = vrot.slane %v392, 5
        %v395 = vsel %vm325, %v390, %v394
        %v397 = vshrl.u32 %v317, 16
        %v399 = vrot.slane %v397, 4
        %v400 = vshll.u32 %v317, 16
        %v402 = vrot.slane %v400, 5
        %v403 = vor.u32 %v399, %v402
        %v404 = vrot.slane %v403, 4
        %v406 = vshll.u32 %v318, 16
        %v408 = vrot.slane %v406, 5
        %v409 = vsel %vm325, %v404, %v408
        %v411 = vshrl.u32 %v319, 16
        %v413 = vrot.slane %v411, 4
        %v414 = vshll.u32 %v319, 16
        %v416 = vrot.slane %v414, 5
        %v417 = vor.u32 %v413, %v416
        %v418 = vrot.slane %v417, 4
        %v420 = vshll.u32 %v320, 16
        %v422 = vrot.slane %v420, 5
        %v423 = vsel %vm325, %v418, %v422
        %v425 = vshrl.u32 %v321, 16
        %v427 = vrot.slane %v425, 4
        %v428 = vshll.u32 %v321, 16
        %v430 = vrot.slane %v428, 5
        %v431 = vor.u32 %v427, %v430
        %v432 = vrot.slane %v431, 4
        %v434 = vshll.u32 %v322, 16
        %v436 = vrot.slane %v434, 5
        %v437 = vsel %vm325, %v432, %v436
        %v438 = vunpack.c.l.b16 %v339
        %v439 = vunpack.c.l.b16 %v353
        %v440 = vunpack.c.l.b16 %v367
        %v441 = vunpack.c.l.b16 %v381
        %v442 = vunpack.c.l.b16 %v395
        %v443 = vunpack.c.l.b16 %v409
        %v444 = vunpack.c.l.b16 %v423
        %v445 = vunpack.c.l.b16 %v437
        %v446 = vpack.c.b16 %v439, %v438
        %v447 = vpack.c.b16 %v441, %v440
        %v448 = vpack.c.b16 %v443, %v442
        %v449 = vpack.c.b16 %v445, %v444
        %454 = vst.msk [vmem:[#allocation2 + $0x8] sm:$0xff] %vm256, %v446
        %455 = vst.msk [vmem:[#allocation2 + $0x30] sm:$0xff] %vm256, %v447
        %456 = vst.msk [vmem:[#allocation2 + $0x58] sm:$0xff] %vm256, %v448
        %457 = vst.msk [vmem:[#allocation2 + $0x80] sm:$0xff] %vm256, %v449
        %s458 = scalar_lea.vmem %s222, 144
        %v459 = vld [vmem:[%s458] sm:$0xf]
        %v460 = vld [vmem:[%s458 + $0x8] sm:$0xf]
        %v461 = vld [vmem:[%s458 + $0x10] sm:$0xf]
        %v462 = vld [vmem:[%s458 + $0x18] sm:$0xf]
        %v463 = vld [vmem:[%s458 + $0x20] sm:$0xf]
        %v464 = vld [vmem:[%s458 + $0x28] sm:$0xf]
        %v465 = vld [vmem:[%s458 + $0x30] sm:$0xf]
        %v466 = vld [vmem:[%s458 + $0x38] sm:$0xf]
        %v475 = vunpack.c.l.b16 %v459
        %v476 = vunpack.c.l.b16 %v460
        %v477 = vunpack.c.l.b16 %v461
        %v478 = vunpack.c.l.b16 %v462
        %v479 = vunpack.c.l.b16 %v463
        %v480 = vunpack.c.l.b16 %v464
        %v481 = vunpack.c.l.b16 %v465
        %v482 = vunpack.c.l.b16 %v466
        %v483 = vpack.c.b16 %v476, %v475
        %v484 = vpack.c.b16 %v478, %v477
        %v485 = vpack.c.b16 %v480, %v479
        %v486 = vpack.c.b16 %v482, %v481
        %487 = vrot.lane.b32.xlu0 %v483, 64
        %v488 = vpop.permute.xlu0 %487
        %489 = vrot.lane.b32.xlu0 %v484, 64
        %v490 = vpop.permute.xlu0 %489
        %491 = vrot.lane.b32.xlu0 %v485, 64
        %v492 = vpop.permute.xlu0 %491
        %493 = vrot.lane.b32.xlu0 %v486, 64
        %v494 = vpop.permute.xlu0 %493
        %499 = vst.msk [vmem:[#allocation2 + $0x8] sm:$0xff] %vm302, %v488
        %500 = vst.msk [vmem:[#allocation2 + $0x30] sm:$0xff] %vm302, %v490
        %501 = vst.msk [vmem:[#allocation2 + $0x58] sm:$0xff] %vm302, %v492
        %502 = vst.msk [vmem:[#allocation2 + $0x80] sm:$0xff] %vm302, %v494
        %s503 = scalar_lea.vmem %s222, 216
        %v504 = vld [vmem:[%s503] sm:$0xf]
        %v505 = vld [vmem:[%s503 + $0x8] sm:$0xf]
        %v506 = vld [vmem:[%s503 + $0x10] sm:$0xf]
        %v507 = vld [vmem:[%s503 + $0x18] sm:$0xf]
        %v508 = vld [vmem:[%s503 + $0x20] sm:$0xf]
        %v509 = vld [vmem:[%s503 + $0x28] sm:$0xf]
        %v510 = vld [vmem:[%s503 + $0x30] sm:$0xf]
        %v511 = vld [vmem:[%s503 + $0x38] sm:$0xf]
        %v520 = vunpack.c.l.b16 %v504
        %v521 = vunpack.c.l.b16 %v505
        %v522 = vunpack.c.l.b16 %v506
        %v523 = vunpack.c.l.b16 %v507
        %v524 = vunpack.c.l.b16 %v508
        %v525 = vunpack.c.l.b16 %v509
        %v526 = vunpack.c.l.b16 %v510
        %v527 = vunpack.c.l.b16 %v511
        %v528 = vpack.c.b16 %v521, %v520
        %v529 = vpack.c.b16 %v523, %v522
        %v530 = vpack.c.b16 %v525, %v524
        %v531 = vpack.c.b16 %v527, %v526
        %536 = vst.msk [vmem:[#allocation2 + $0x10] sm:$0xff] %vm256, %v528
        %537 = vst.msk [vmem:[#allocation2 + $0x38] sm:$0xff] %vm256, %v529
        %538 = vst.msk [vmem:[#allocation2 + $0x60] sm:$0xff] %vm256, %v530
        %539 = vst.msk [vmem:[#allocation2 + $0x88] sm:$0xff] %vm256, %v531
        %v540 = vld [vmem:[%s458] sm:$0xf]
        %v541 = vld [vmem:[%s458 + $0x4] sm:$0x1]
        %v542 = vld [vmem:[%s458 + $0x8] sm:$0xf]
        %v543 = vld [vmem:[%s458 + $0xc] sm:$0x1]
        %v544 = vld [vmem:[%s458 + $0x10] sm:$0xf]
        %v545 = vld [vmem:[%s458 + $0x14] sm:$0x1]
        %v546 = vld [vmem:[%s458 + $0x18] sm:$0xf]
        %v547 = vld [vmem:[%s458 + $0x1c] sm:$0x1]
        %v548 = vld [vmem:[%s458 + $0x20] sm:$0xf]
        %v549 = vld [vmem:[%s458 + $0x24] sm:$0x1]
        %v550 = vld [vmem:[%s458 + $0x28] sm:$0xf]
        %v551 = vld [vmem:[%s458 + $0x2c] sm:$0x1]
        %v552 = vld [vmem:[%s458 + $0x30] sm:$0xf]
        %v553 = vld [vmem:[%s458 + $0x34] sm:$0x1]
        %v554 = vld [vmem:[%s458 + $0x38] sm:$0xf]
        %v555 = vld [vmem:[%s458 + $0x3c] sm:$0x1]
        %v557 = vshrl.u32 %v540, 16
        %v559 = vrot.slane %v557, 4
        %v560 = vshll.u32 %v540, 16
        %v562 = vrot.slane %v560, 5
        %v563 = vor.u32 %v559, %v562
        %v564 = vrot.slane %v563, 4
        %v566 = vshll.u32 %v541, 16
        %v568 = vrot.slane %v566, 5
        %v569 = vsel %vm325, %v564, %v568
        %v571 = vshrl.u32 %v542, 16
        %v573 = vrot.slane %v571, 4
        %v574 = vshll.u32 %v542, 16
        %v576 = vrot.slane %v574, 5
        %v577 = vor.u32 %v573, %v576
        %v578 = vrot.slane %v577, 4
        %v580 = vshll.u32 %v543, 16
        %v582 = vrot.slane %v580, 5
        %v583 = vsel %vm325, %v578, %v582
        %v585 = vshrl.u32 %v544, 16
        %v587 = vrot.slane %v585, 4
        %v588 = vshll.u32 %v544, 16
        %v590 = vrot.slane %v588, 5
        %v591 = vor.u32 %v587, %v590
        %v592 = vrot.slane %v591, 4
        %v594 = vshll.u32 %v545, 16
        %v596 = vrot.slane %v594, 5
        %v597 = vsel %vm325, %v592, %v596
        %v599 = vshrl.u32 %v546, 16
        %v601 = vrot.slane %v599, 4
        %v602 = vshll.u32 %v546, 16
        %v604 = vrot.slane %v602, 5
        %v605 = vor.u32 %v601, %v604
        %v606 = vrot.slane %v605, 4
        %v608 = vshll.u32 %v547, 16
        %v610 = vrot.slane %v608, 5
        %v611 = vsel %vm325, %v606, %v610
        %v613 = vshrl.u32 %v548, 16
        %v615 = vrot.slane %v613, 4
        %v616 = vshll.u32 %v548, 16
        %v618 = vrot.slane %v616, 5
        %v619 = vor.u32 %v615, %v618
        %v620 = vrot.slane %v619, 4
        %v622 = vshll.u32 %v549, 16
        %v624 = vrot.slane %v622, 5
        %v625 = vsel %vm325, %v620, %v624
        %v627 = vshrl.u32 %v550, 16
        %v629 = vrot.slane %v627, 4
        %v630 = vshll.u32 %v550, 16
        %v632 = vrot.slane %v630, 5
        %v633 = vor.u32 %v629, %v632
        %v634 = vrot.slane %v633, 4
        %v636 = vshll.u32 %v551, 16
        %v638 = vrot.slane %v636, 5
        %v639 = vsel %vm325, %v634, %v638
        %v641 = vshrl.u32 %v552, 16
        %v643 = vrot.slane %v641, 4
        %v644 = vshll.u32 %v552, 16
        %v646 = vrot.slane %v644, 5
        %v647 = vor.u32 %v643, %v646
        %v648 = vrot.slane %v647, 4
        %v650 = vshll.u32 %v553, 16
        %v652 = vrot.slane %v650, 5
        %v653 = vsel %vm325, %v648, %v652
        %v655 = vshrl.u32 %v554, 16
        %v657 = vrot.slane %v655, 4
        %v658 = vshll.u32 %v554, 16
        %v660 = vrot.slane %v658, 5
        %v661 = vor.u32 %v657, %v660
        %v662 = vrot.slane %v661, 4
        %v664 = vshll.u32 %v555, 16
        %v666 = vrot.slane %v664, 5
        %v667 = vsel %vm325, %v662, %v666
        %v668 = vunpack.c.l.b16 %v569
        %v669 = vunpack.c.l.b16 %v583
        %v670 = vunpack.c.l.b16 %v597
        %v671 = vunpack.c.l.b16 %v611
        %v672 = vunpack.c.l.b16 %v625
        %v673 = vunpack.c.l.b16 %v639
        %v674 = vunpack.c.l.b16 %v653
        %v675 = vunpack.c.l.b16 %v667
        %v676 = vpack.c.b16 %v669, %v668
        %v677 = vpack.c.b16 %v671, %v670
        %v678 = vpack.c.b16 %v673, %v672
        %v679 = vpack.c.b16 %v675, %v674
        %680 = vrot.lane.b32.xlu0 %v676, 64
        %v681 = vpop.permute.xlu0 %680
        %682 = vrot.lane.b32.xlu0 %v677, 64
        %v683 = vpop.permute.xlu0 %682
        %684 = vrot.lane.b32.xlu0 %v678, 64
        %v685 = vpop.permute.xlu0 %684
        %686 = vrot.lane.b32.xlu0 %v679, 64
        %v687 = vpop.permute.xlu0 %686
        %692 = vst.msk [vmem:[#allocation2 + $0x10] sm:$0xff] %vm302, %v681
        %693 = vst.msk [vmem:[#allocation2 + $0x38] sm:$0xff] %vm302, %v683
        %694 = vst.msk [vmem:[#allocation2 + $0x60] sm:$0xff] %vm302, %v685
        %695 = vst.msk [vmem:[#allocation2 + $0x88] sm:$0xff] %vm302, %v687
        %s696 = scalar_lea.vmem %s222, 8
        %v697 = vld [vmem:[%s696] sm:$0xf]
        %v698 = vld [vmem:[%s696 + $0x8] sm:$0xf]
        %v699 = vld [vmem:[%s696 + $0x10] sm:$0xf]
        %v700 = vld [vmem:[%s696 + $0x18] sm:$0xf]
        %v701 = vld [vmem:[%s696 + $0x20] sm:$0xf]
        %v702 = vld [vmem:[%s696 + $0x28] sm:$0xf]
        %v703 = vld [vmem:[%s696 + $0x30] sm:$0xf]
        %v704 = vld [vmem:[%s696 + $0x38] sm:$0xf]
        %v713 = vunpack.c.l.b16 %v697
        %v714 = vunpack.c.l.b16 %v698
        %v715 = vunpack.c.l.b16 %v699
        %v716 = vunpack.c.l.b16 %v700
        %v717 = vunpack.c.l.b16 %v701
        %v718 = vunpack.c.l.b16 %v702
        %v719 = vunpack.c.l.b16 %v703
        %v720 = vunpack.c.l.b16 %v704
        %v721 = vpack.c.b16 %v714, %v713
        %v722 = vpack.c.b16 %v716, %v715
        %v723 = vpack.c.b16 %v718, %v717
        %v724 = vpack.c.b16 %v720, %v719
        %729 = vst.msk [vmem:[#allocation2 + $0x18] sm:$0xff] %vm256, %v721
        %730 = vst.msk [vmem:[#allocation2 + $0x40] sm:$0xff] %vm256, %v722
        %731 = vst.msk [vmem:[#allocation2 + $0x68] sm:$0xff] %vm256, %v723
        %732 = vst.msk [vmem:[#allocation2 + $0x90] sm:$0xff] %vm256, %v724
        %s733 = scalar_lea.vmem %s222, 80
        %v734 = vld [vmem:[%s733] sm:$0xf]
        %v735 = vld [vmem:[%s733 + $0x8] sm:$0xf]
        %v736 = vld [vmem:[%s733 + $0x10] sm:$0xf]
        %v737 = vld [vmem:[%s733 + $0x18] sm:$0xf]
        %v738 = vld [vmem:[%s733 + $0x20] sm:$0xf]
        %v739 = vld [vmem:[%s733 + $0x28] sm:$0xf]
        %v740 = vld [vmem:[%s733 + $0x30] sm:$0xf]
        %v741 = vld [vmem:[%s733 + $0x38] sm:$0xf]
        %v750 = vunpack.c.l.b16 %v734
        %v751 = vunpack.c.l.b16 %v735
        %v752 = vunpack.c.l.b16 %v736
        %v753 = vunpack.c.l.b16 %v737
        %v754 = vunpack.c.l.b16 %v738
        %v755 = vunpack.c.l.b16 %v739
        %v756 = vunpack.c.l.b16 %v740
        %v757 = vunpack.c.l.b16 %v741
        %v758 = vpack.c.b16 %v751, %v750
        %v759 = vpack.c.b16 %v753, %v752
        %v760 = vpack.c.b16 %v755, %v754
        %v761 = vpack.c.b16 %v757, %v756
        %762 = vrot.lane.b32.xlu0 %v758, 64
        %v763 = vpop.permute.xlu0 %762
        %764 = vrot.lane.b32.xlu0 %v759, 64
        %v765 = vpop.permute.xlu0 %764
        %766 = vrot.lane.b32.xlu0 %v760, 64
        %v767 = vpop.permute.xlu0 %766
        %768 = vrot.lane.b32.xlu0 %v761, 64
        %v769 = vpop.permute.xlu0 %768
        %774 = vst.msk [vmem:[#allocation2 + $0x18] sm:$0xff] %vm302, %v763
        %775 = vst.msk [vmem:[#allocation2 + $0x40] sm:$0xff] %vm302, %v765
        %776 = vst.msk [vmem:[#allocation2 + $0x68] sm:$0xff] %vm302, %v767
        %777 = vst.msk [vmem:[#allocation2 + $0x90] sm:$0xff] %vm302, %v769
        %v778 = vld [vmem:[%s696] sm:$0xf]
        %v779 = vld [vmem:[%s696 + $0x4] sm:$0x1]
        %v780 = vld [vmem:[%s696 + $0x8] sm:$0xf]
        %v781 = vld [vmem:[%s696 + $0xc] sm:$0x1]
        %v782 = vld [vmem:[%s696 + $0x10] sm:$0xf]
        %v783 = vld [vmem:[%s696 + $0x14] sm:$0x1]
        %v784 = vld [vmem:[%s696 + $0x18] sm:$0xf]
        %v785 = vld [vmem:[%s696 + $0x1c] sm:$0x1]
        %v786 = vld [vmem:[%s696 + $0x20] sm:$0xf]
        %v787 = vld [vmem:[%s696 + $0x24] sm:$0x1]
        %v788 = vld [vmem:[%s696 + $0x28] sm:$0xf]
        %v789 = vld [vmem:[%s696 + $0x2c] sm:$0x1]
        %v790 = vld [vmem:[%s696 + $0x30] sm:$0xf]
        %v791 = vld [vmem:[%s696 + $0x34] sm:$0x1]
        %v792 = vld [vmem:[%s696 + $0x38] sm:$0xf]
        %v793 = vld [vmem:[%s696 + $0x3c] sm:$0x1]
        %v795 = vshrl.u32 %v778, 16
        %v797 = vrot.slane %v795, 4
        %v798 = vshll.u32 %v778, 16
        %v800 = vrot.slane %v798, 5
        %v801 = vor.u32 %v797, %v800
        %v802 = vrot.slane %v801, 4
        %v804 = vshll.u32 %v779, 16
        %v806 = vrot.slane %v804, 5
        %v807 = vsel %vm325, %v802, %v806
        %v809 = vshrl.u32 %v780, 16
        %v811 = vrot.slane %v809, 4
        %v812 = vshll.u32 %v780, 16
        %v814 = vrot.slane %v812, 5
        %v815 = vor.u32 %v811, %v814
        %v816 = vrot.slane %v815, 4
        %v818 = vshll.u32 %v781, 16
        %v820 = vrot.slane %v818, 5
        %v821 = vsel %vm325, %v816, %v820
        %v823 = vshrl.u32 %v782, 16
        %v825 = vrot.slane %v823, 4
        %v826 = vshll.u32 %v782, 16
        %v828 = vrot.slane %v826, 5
        %v829 = vor.u32 %v825, %v828
        %v830 = vrot.slane %v829, 4
        %v832 = vshll.u32 %v783, 16
        %v834 = vrot.slane %v832, 5
        %v835 = vsel %vm325, %v830, %v834
        %v837 = vshrl.u32 %v784, 16
        %v839 = vrot.slane %v837, 4
        %v840 = vshll.u32 %v784, 16
        %v842 = vrot.slane %v840, 5
        %v843 = vor.u32 %v839, %v842
        %v844 = vrot.slane %v843, 4
        %v846 = vshll.u32 %v785, 16
        %v848 = vrot.slane %v846, 5
        %v849 = vsel %vm325, %v844, %v848
        %v851 = vshrl.u32 %v786, 16
        %v853 = vrot.slane %v851, 4
        %v854 = vshll.u32 %v786, 16
        %v856 = vrot.slane %v854, 5
        %v857 = vor.u32 %v853, %v856
        %v858 = vrot.slane %v857, 4
        %v860 = vshll.u32 %v787, 16
        %v862 = vrot.slane %v860, 5
        %v863 = vsel %vm325, %v858, %v862
        %v865 = vshrl.u32 %v788, 16
        %v867 = vrot.slane %v865, 4
        %v868 = vshll.u32 %v788, 16
        %v870 = vrot.slane %v868, 5
        %v871 = vor.u32 %v867, %v870
        %v872 = vrot.slane %v871, 4
        %v874 = vshll.u32 %v789, 16
        %v876 = vrot.slane %v874, 5
        %v877 = vsel %vm325, %v872, %v876
        %v879 = vshrl.u32 %v790, 16
        %v881 = vrot.slane %v879, 4
        %v882 = vshll.u32 %v790, 16
        %v884 = vrot.slane %v882, 5
        %v885 = vor.u32 %v881, %v884
        %v886 = vrot.slane %v885, 4
        %v888 = vshll.u32 %v791, 16
        %v890 = vrot.slane %v888, 5
        %v891 = vsel %vm325, %v886, %v890
        %v893 = vshrl.u32 %v792, 16
        %v895 = vrot.slane %v893, 4
        %v896 = vshll.u32 %v792, 16
        %v898 = vrot.slane %v896, 5
        %v899 = vor.u32 %v895, %v898
        %v900 = vrot.slane %v899, 4
        %v902 = vshll.u32 %v793, 16
        %v904 = vrot.slane %v902, 5
        %v905 = vsel %vm325, %v900, %v904
        %v906 = vunpack.c.l.b16 %v807
        %v907 = vunpack.c.l.b16 %v821
        %v908 = vunpack.c.l.b16 %v835
        %v909 = vunpack.c.l.b16 %v849
        %v910 = vunpack.c.l.b16 %v863
        %v911 = vunpack.c.l.b16 %v877
        %v912 = vunpack.c.l.b16 %v891
        %v913 = vunpack.c.l.b16 %v905
        %v914 = vpack.c.b16 %v907, %v906
        %v915 = vpack.c.b16 %v909, %v908
        %v916 = vpack.c.b16 %v911, %v910
        %v917 = vpack.c.b16 %v913, %v912
        %922 = vst.msk [vmem:[#allocation2 + $0x20] sm:$0xff] %vm256, %v914
        %923 = vst.msk [vmem:[#allocation2 + $0x48] sm:$0xff] %vm256, %v915
        %924 = vst.msk [vmem:[#allocation2 + $0x70] sm:$0xff] %vm256, %v916
        %925 = vst.msk [vmem:[#allocation2 + $0x98] sm:$0xff] %vm256, %v917
        %v926 = vld [vmem:[#allocation2] sm:$0xff]
        %v927 = vld [vmem:[#allocation2 + $0x8] sm:$0xff]
        %v928 = vld [vmem:[#allocation2 + $0x10] sm:$0xff]
        %v929 = vld [vmem:[#allocation2 + $0x18] sm:$0xff]
        %v930 = vld [vmem:[#allocation2 + $0x20] sm:$0xff]
        %v931 = vld [vmem:[#allocation2 + $0x28] sm:$0xff]
        %v932 = vld [vmem:[#allocation2 + $0x30] sm:$0xff]
        %v933 = vld [vmem:[#allocation2 + $0x38] sm:$0xff]
        %v934 = vld [vmem:[#allocation2 + $0x40] sm:$0xff]
        %v935 = vld [vmem:[#allocation2 + $0x48] sm:$0xff]
        %v936 = vld [vmem:[#allocation2 + $0x50] sm:$0xff]
        %v937 = vld [vmem:[#allocation2 + $0x58] sm:$0xff]
        %v938 = vld [vmem:[#allocation2 + $0x60] sm:$0xff]
        %v939 = vld [vmem:[#allocation2 + $0x68] sm:$0xff]
        %v940 = vld [vmem:[#allocation2 + $0x70] sm:$0xff]
        %v941 = vld [vmem:[#allocation2 + $0x78] sm:$0xff]
        %v942 = vld [vmem:[#allocation2 + $0x80] sm:$0xff]
        %v943 = vld [vmem:[#allocation2 + $0x88] sm:$0xff]
        %v944 = vld [vmem:[#allocation2 + $0x90] sm:$0xff]
        %v945 = vld [vmem:[#allocation2 + $0x98] sm:$0xff]
        %v946 = vld [vmem:[%s1] sm:$0xf]
        %v947 = vld [vmem:[%s1 + $0x4] sm:$0xf]
        %v948 = vld [vmem:[%s1 + $0x8] sm:$0xf]
        %v949 = vld [vmem:[%s1 + $0xc] sm:$0xf]
        %v950 = vld [vmem:[%s1 + $0x10] sm:$0xf]
        %v951 = vld [vmem:[%s1 + $0x14] sm:$0xf]
        %v952 = vld [vmem:[%s1 + $0x18] sm:$0xf]
        %v953 = vld [vmem:[%s1 + $0x1c] sm:$0xf]
        %v954 = vld [vmem:[%s1 + $0x20] sm:$0xf]
        %v955 = vld [vmem:[%s1 + $0x24] sm:$0xf]
        %v956 = vld [vmem:[%s1 + $0x28] sm:$0xf]
        %v957 = vld [vmem:[%s1 + $0x2c] sm:$0xf]
        %v958 = vld [vmem:[%s1 + $0x30] sm:$0xf]
        %v959 = vld [vmem:[%s1 + $0x34] sm:$0xf]
        %v960 = vld [vmem:[%s1 + $0x38] sm:$0xf]
        %v961 = vld [vmem:[%s1 + $0x3c] sm:$0xf]
        %v962 = vld [vmem:[%s1 + $0x40] sm:$0xf]
        %v963 = vld [vmem:[%s1 + $0x44] sm:$0xf]
        %v964 = vld [vmem:[%s1 + $0x48] sm:$0xf]
        %v965 = vld [vmem:[%s1 + $0x4c] sm:$0xf]
        %v966 = vld [vmem:[%s1 + $0x50] sm:$0xf]
        %v967 = vld [vmem:[%s1 + $0x54] sm:$0xf]
        %v968 = vld [vmem:[%s1 + $0x58] sm:$0xf]
        %v969 = vld [vmem:[%s1 + $0x5c] sm:$0xf]
        %v970 = vld [vmem:[%s1 + $0x60] sm:$0xf]
        %v971 = vld [vmem:[%s1 + $0x64] sm:$0xf]
        %v972 = vld [vmem:[%s1 + $0x68] sm:$0xf]
        %v973 = vld [vmem:[%s1 + $0x6c] sm:$0xf]
        %v974 = vld [vmem:[%s1 + $0x70] sm:$0xf]
        %v975 = vld [vmem:[%s1 + $0x74] sm:$0xf]
        %v976 = vld [vmem:[%s1 + $0x78] sm:$0xf]
        %v977 = vld [vmem:[%s1 + $0x7c] sm:$0xf]
        %v978 = vld [vmem:[%s1 + $0x80] sm:$0xf]
        %v979 = vld [vmem:[%s1 + $0x84] sm:$0xf]
        %v980 = vld [vmem:[%s1 + $0x88] sm:$0xf]
        %v981 = vld [vmem:[%s1 + $0x8c] sm:$0xf]
        %v982 = vld [vmem:[%s1 + $0x90] sm:$0xf]
        %v983 = vld [vmem:[%s1 + $0x94] sm:$0xf]
        %v984 = vld [vmem:[%s1 + $0x98] sm:$0xf]
        %v985 = vld [vmem:[%s1 + $0x9c] sm:$0xf]
        %v986 = vld [vmem:[%s1 + $0xa0] sm:$0xf]
        %v987 = vld [vmem:[%s1 + $0xa4] sm:$0xf]
        %v988 = vld [vmem:[%s1 + $0xa8] sm:$0xf]
        %v989 = vld [vmem:[%s1 + $0xac] sm:$0xf]
        %v990 = vld [vmem:[%s1 + $0xb0] sm:$0xf]
        %v991 = vld [vmem:[%s1 + $0xb4] sm:$0xf]
        %v992 = vld [vmem:[%s1 + $0xb8] sm:$0xf]
        %v993 = vld [vmem:[%s1 + $0xbc] sm:$0xf]
        %v994 = vld [vmem:[%s1 + $0xc0] sm:$0xf]
        %v995 = vld [vmem:[%s1 + $0xc4] sm:$0xf]
        %v996 = vld [vmem:[%s1 + $0xc8] sm:$0xf]
        %v997 = vld [vmem:[%s1 + $0xcc] sm:$0xf]
        %v998 = vld [vmem:[%s1 + $0xd0] sm:$0xf]
        %v999 = vld [vmem:[%s1 + $0xd4] sm:$0xf]
        %v1000 = vld [vmem:[%s1 + $0xd8] sm:$0xf]
        %v1001 = vld [vmem:[%s1 + $0xdc] sm:$0xf]
        %v1002 = vld [vmem:[%s1 + $0xe0] sm:$0xf]
        %v1003 = vld [vmem:[%s1 + $0xe4] sm:$0xf]
        %v1004 = vld [vmem:[%s1 + $0xe8] sm:$0xf]
        %v1005 = vld [vmem:[%s1 + $0xec] sm:$0xf]
        %v1006 = vld [vmem:[%s1 + $0xf0] sm:$0xf]
        %v1007 = vld [vmem:[%s1 + $0xf4] sm:$0xf]
        %v1008 = vld [vmem:[%s1 + $0xf8] sm:$0xf]
        %v1009 = vld [vmem:[%s1 + $0xfc] sm:$0xf]
        %v1010 = vld [vmem:[%s1 + $0x100] sm:$0xf]
        %v1011 = vld [vmem:[%s1 + $0x104] sm:$0xf]
        %v1012 = vld [vmem:[%s1 + $0x108] sm:$0xf]
        %v1013 = vld [vmem:[%s1 + $0x10c] sm:$0xf]
        %v1014 = vld [vmem:[%s1 + $0x110] sm:$0xf]
        %v1015 = vld [vmem:[%s1 + $0x114] sm:$0xf]
        %v1016 = vld [vmem:[%s1 + $0x118] sm:$0xf]
        %v1017 = vld [vmem:[%s1 + $0x11c] sm:$0xf]
        %v1018 = vld [vmem:[%s2] sm:$0x1]
        %v1020 = vlaneseq
        %v1021 = vshrl.u32 %v1020, 7
        %v1022 = vsub.s32 0, %v1021
        %v1023 = vrot.slane %v1018, %v1022
        %v1097 = vunpack.c.l.b16 %v946
        %v1098 = vunpack.c.l.b16 %v947
        %v1099 = vunpack.c.l.b16 %v948
        %v1100 = vunpack.c.l.b16 %v949
        %v1101 = vunpack.c.l.b16 %v950
        %v1102 = vunpack.c.l.b16 %v951
        %v1103 = vunpack.c.l.b16 %v952
        %v1104 = vunpack.c.l.b16 %v953
        %v1105 = vunpack.c.l.b16 %v954
        %v1106 = vunpack.c.l.b16 %v955
        %v1107 = vunpack.c.l.b16 %v956
        %v1108 = vunpack.c.l.b16 %v957
        %v1109 = vunpack.c.l.b16 %v958
        %v1110 = vunpack.c.l.b16 %v959
        %v1111 = vunpack.c.l.b16 %v960
        %v1112 = vunpack.c.l.b16 %v961
        %v1113 = vunpack.c.l.b16 %v962
        %v1114 = vunpack.c.l.b16 %v963
        %v1115 = vunpack.c.l.b16 %v964
        %v1116 = vunpack.c.l.b16 %v965
        %v1117 = vunpack.c.l.b16 %v966
        %v1118 = vunpack.c.l.b16 %v967
        %v1119 = vunpack.c.l.b16 %v968
        %v1120 = vunpack.c.l.b16 %v969
        %v1121 = vunpack.c.l.b16 %v970
        %v1122 = vunpack.c.l.b16 %v971
        %v1123 = vunpack.c.l.b16 %v972
        %v1124 = vunpack.c.l.b16 %v973
        %v1125 = vunpack.c.l.b16 %v974
        %v1126 = vunpack.c.l.b16 %v975
        %v1127 = vunpack.c.l.b16 %v976
        %v1128 = vunpack.c.l.b16 %v977
        %v1129 = vunpack.c.l.b16 %v978
        %v1130 = vunpack.c.l.b16 %v979
        %v1131 = vunpack.c.l.b16 %v980
        %v1132 = vunpack.c.l.b16 %v981
        %v1133 = vunpack.c.l.b16 %v982
        %v1134 = vunpack.c.l.b16 %v983
        %v1135 = vunpack.c.l.b16 %v984
        %v1136 = vunpack.c.l.b16 %v985
        %v1137 = vunpack.c.l.b16 %v986
        %v1138 = vunpack.c.l.b16 %v987
        %v1139 = vunpack.c.l.b16 %v988
        %v1140 = vunpack.c.l.b16 %v989
        %v1141 = vunpack.c.l.b16 %v990
        %v1142 = vunpack.c.l.b16 %v991
        %v1143 = vunpack.c.l.b16 %v992
        %v1144 = vunpack.c.l.b16 %v993
        %v1145 = vunpack.c.l.b16 %v994
        %v1146 = vunpack.c.l.b16 %v995
        %v1147 = vunpack.c.l.b16 %v996
        %v1148 = vunpack.c.l.b16 %v997
        %v1149 = vunpack.c.l.b16 %v998
        %v1150 = vunpack.c.l.b16 %v999
        %v1151 = vunpack.c.l.b16 %v1000
        %v1152 = vunpack.c.l.b16 %v1001
        %v1153 = vunpack.c.l.b16 %v1002
        %v1154 = vunpack.c.l.b16 %v1003
        %v1155 = vunpack.c.l.b16 %v1004
        %v1156 = vunpack.c.l.b16 %v1005
        %v1157 = vunpack.c.l.b16 %v1006
        %v1158 = vunpack.c.l.b16 %v1007
        %v1159 = vunpack.c.l.b16 %v1008
        %v1160 = vunpack.c.l.b16 %v1009
        %v1161 = vunpack.c.l.b16 %v1010
        %v1162 = vunpack.c.l.b16 %v1011
        %v1163 = vunpack.c.l.b16 %v1012
        %v1164 = vunpack.c.l.b16 %v1013
        %v1165 = vunpack.c.l.b16 %v1014
        %v1166 = vunpack.c.l.b16 %v1015
        %v1167 = vunpack.c.l.b16 %v1016
        %v1168 = vunpack.c.l.b16 %v1017
        %v1169 = vpack.c.b16 %v1098, %v1097
        %v1170 = vpack.c.b16 %v1100, %v1099
        %v1171 = vpack.c.b16 %v1102, %v1101
        %v1172 = vpack.c.b16 %v1104, %v1103
        %v1173 = vpack.c.b16 %v1106, %v1105
        %v1174 = vpack.c.b16 %v1108, %v1107
        %v1175 = vpack.c.b16 %v1110, %v1109
        %v1176 = vpack.c.b16 %v1112, %v1111
        %v1177 = vpack.c.b16 %v1114, %v1113
        %v1178 = vpack.c.b16 %v1116, %v1115
        %v1179 = vpack.c.b16 %v1118, %v1117
        %v1180 = vpack.c.b16 %v1120, %v1119
        %v1181 = vpack.c.b16 %v1122, %v1121
        %v1182 = vpack.c.b16 %v1124, %v1123
        %v1183 = vpack.c.b16 %v1126, %v1125
        %v1184 = vpack.c.b16 %v1128, %v1127
        %v1185 = vpack.c.b16 %v1130, %v1129
        %v1186 = vpack.c.b16 %v1132, %v1131
        %v1187 = vpack.c.b16 %v1134, %v1133
        %v1188 = vpack.c.b16 %v1136, %v1135
        %v1189 = vpack.c.b16 %v1138, %v1137
        %v1190 = vpack.c.b16 %v1140, %v1139
        %v1191 = vpack.c.b16 %v1142, %v1141
        %v1192 = vpack.c.b16 %v1144, %v1143
        %v1193 = vpack.c.b16 %v1146, %v1145
        %v1194 = vpack.c.b16 %v1148, %v1147
        %v1195 = vpack.c.b16 %v1150, %v1149
        %v1196 = vpack.c.b16 %v1152, %v1151
        %v1197 = vpack.c.b16 %v1154, %v1153
        %v1198 = vpack.c.b16 %v1156, %v1155
        %v1199 = vpack.c.b16 %v1158, %v1157
        %v1200 = vpack.c.b16 %v1160, %v1159
        %v1201 = vpack.c.b16 %v1162, %v1161
        %v1202 = vpack.c.b16 %v1164, %v1163
        %v1203 = vpack.c.b16 %v1166, %v1165
        %v1204 = vpack.c.b16 %v1168, %v1167
        %v1242 = vsel %vm256, %v930, 0
        %v1245 = vsel %vm256, %v935, 0
        %v1248 = vsel %vm256, %v940, 0
        %v1251 = vsel %vm256, %v945, 0
        %1253 = vmatprep.subr.bf16.mxu0 0
        %1254 = vmatpush1.bf16.msra.mxu0 %v1169
        %1255 = vmatprep.subr.bf16.mxu0 0
        %1256 = vmatpush1.bf16.msra.mxu0 %v1170
        %1257 = vmatprep.subr.bf16.mxu0 0
        %1258 = vmatpush1.bf16.msra.mxu0 %v1171
        %1259 = vmatprep.subr.bf16.mxu0 0
        %1260 = vmatpush1.bf16.msra.mxu0 %v1172
        %1261 = vmatprep.subr.bf16.mxu0 0
        %1262 = vmatpush1.bf16.msra.mxu0 %v1173
        %1263 = vmatprep.subr.bf16.mxu0 0
        %1264 = vmatpush1.bf16.msra.mxu0 %v1174
        %1265 = vmatprep.subr.bf16.mxu0 0
        %1266 = vmatpush1.bf16.msra.mxu0 %v1175
        %1267 = vmatprep.subr.bf16.mxu0 0
        %1268 = vmatpush1.bf16.msra.mxu0 %v1176
        %1269 = vmatprep.subr.bf16.mxu0 0
        %1270 = vmatpush1.bf16.msra.mxu0 %v1177
        %1271 = vmatprep.subr.bf16.mxu0 0
        %1272 = vmatpush1.bf16.msra.mxu0 %v1178
        %1273 = vmatprep.subr.bf16.mxu0 0
        %1274 = vmatpush1.bf16.msra.mxu0 %v1179
        %1275 = vmatprep.subr.bf16.mxu0 0
        %1276 = vmatpush1.bf16.msra.mxu0 %v1180
        %1277 = vmatprep.subr.bf16.mxu0 0
        %1278 = vmatpush1.bf16.msra.mxu0 %v1181
        %1279 = vmatprep.subr.bf16.mxu0 0
        %1280 = vmatpush1.bf16.msra.mxu0 %v1182
        %1281 = vmatprep.subr.bf16.mxu0 0
        %1282 = vmatpush1.bf16.msra.mxu0 %v1183
        %1283 = vmatprep.subr.bf16.mxu0 0
        %1284 = vmatpush1.bf16.msra.mxu0 %v1184
        %1285 = vmatprep.mubr.bf16.mxu0 %v927
        %1286 = vmatmul.mubr.bf16.gmra.mrb[0].mxu0 %v926
        %v1287 = vpop.f32.mrb[0].mxu0
        %v1288 = vadd.f32 %v1023, %v1287
        %v1289 = vpop.f32.mrb[0].mxu0
        %v1290 = vpop.f32.mrb[0].mxu0
        %v1291 = vadd.f32 %v1023, %v1290
        %v1292 = vpop.f32.mrb[0].mxu0
        %1293 = vmatprep.mubr.bf16.mxu0 %v932
        %1294 = vmatmul.mubr.bf16.gmra.mrb[0].mxu0 %v931
        %v1295 = vpop.f32.mrb[0].mxu0
        %v1296 = vadd.f32 %v1023, %v1295
        %v1297 = vpop.f32.mrb[0].mxu0
        %v1298 = vpop.f32.mrb[0].mxu0
        %v1299 = vadd.f32 %v1023, %v1298
        %v1300 = vpop.f32.mrb[0].mxu0
        %1301 = vmatprep.mubr.bf16.mxu0 %v937
        %1302 = vmatmul.mubr.bf16.gmra.mrb[0].mxu0 %v936
        %v1303 = vpop.f32.mrb[0].mxu0
        %v1304 = vadd.f32 %v1023, %v1303
        %v1305 = vpop.f32.mrb[0].mxu0
        %v1306 = vpop.f32.mrb[0].mxu0
        %v1307 = vadd.f32 %v1023, %v1306
        %v1308 = vpop.f32.mrb[0].mxu0
        %1309 = vmatprep.mubr.bf16.mxu0 %v942
        %1310 = vmatmul.mubr.bf16.gmra.mrb[0].mxu0 %v941
        %v1311 = vpop.f32.mrb[0].mxu0
        %v1312 = vadd.f32 %v1023, %v1311
        %v1313 = vpop.f32.mrb[0].mxu0
        %v1314 = vpop.f32.mrb[0].mxu0
        %v1315 = vadd.f32 %v1023, %v1314
        %v1316 = vpop.f32.mrb[0].mxu0
        %1317 = vdwg.mxu0
        %1318 = vmatprep.subr.bf16.mxu0 0
        %1319 = vmatpush1.bf16.msra.mxu0 %v1185
        %1320 = vmatprep.subr.bf16.mxu0 0
        %1321 = vmatpush1.bf16.msra.mxu0 %v1186
        %1322 = vmatprep.subr.bf16.mxu0 0
        %1323 = vmatpush1.bf16.msra.mxu0 %v1187
        %1324 = vmatprep.subr.bf16.mxu0 0
        %1325 = vmatpush1.bf16.msra.mxu0 %v1188
        %1326 = vmatprep.subr.bf16.mxu0 0
        %1327 = vmatpush1.bf16.msra.mxu0 %v1189
        %1328 = vmatprep.subr.bf16.mxu0 0
        %1329 = vmatpush1.bf16.msra.mxu0 %v1190
        %1330 = vmatprep.subr.bf16.mxu0 0
        %1331 = vmatpush1.bf16.msra.mxu0 %v1191
        %1332 = vmatprep.subr.bf16.mxu0 0
        %1333 = vmatpush1.bf16.msra.mxu0 %v1192
        %1334 = vmatprep.subr.bf16.mxu0 0
        %1335 = vmatpush1.bf16.msra.mxu0 %v1193
        %1336 = vmatprep.subr.bf16.mxu0 0
        %1337 = vmatpush1.bf16.msra.mxu0 %v1194
        %1338 = vmatprep.subr.bf16.mxu0 0
        %1339 = vmatpush1.bf16.msra.mxu0 %v1195
        %1340 = vmatprep.subr.bf16.mxu0 0
        %1341 = vmatpush1.bf16.msra.mxu0 %v1196
        %1342 = vmatprep.subr.bf16.mxu0 0
        %1343 = vmatpush1.bf16.msra.mxu0 %v1197
        %1344 = vmatprep.subr.bf16.mxu0 0
        %1345 = vmatpush1.bf16.msra.mxu0 %v1198
        %1346 = vmatprep.subr.bf16.mxu0 0
        %1347 = vmatpush1.bf16.msra.mxu0 %v1199
        %1348 = vmatprep.subr.bf16.mxu0 0
        %1349 = vmatpush1.bf16.msra.mxu0 %v1200
        %1350 = vmatprep.mubr.bf16.mxu0 %v929
        %1351 = vmatmul.mubr.bf16.gmra.mrb[0].mxu0 %v928
        %v1352 = vpop.f32.mrb[0].mxu0
        %v1353 = vadd.f32 %v1288, %v1352
        %v1354 = vpop.f32.mrb[0].mxu0
        %v1355 = vpop.f32.mrb[0].mxu0
        %v1356 = vadd.f32 %v1291, %v1355
        %v1357 = vpop.f32.mrb[0].mxu0
        %1358 = vmatprep.mubr.bf16.mxu0 %v934
        %1359 = vmatmul.mubr.bf16.gmra.mrb[0].mxu0 %v933
        %v1360 = vpop.f32.mrb[0].mxu0
        %v1361 = vadd.f32 %v1296, %v1360
        %v1362 = vpop.f32.mrb[0].mxu0
        %v1363 = vpop.f32.mrb[0].mxu0
        %v1364 = vadd.f32 %v1299, %v1363
        %v1365 = vpop.f32.mrb[0].mxu0
        %1366 = vmatprep.mubr.bf16.mxu0 %v939
        %1367 = vmatmul.mubr.bf16.gmra.mrb[0].mxu0 %v938
        %v1368 = vpop.f32.mrb[0].mxu0
        %v1369 = vadd.f32 %v1304, %v1368
        %v1370 = vpop.f32.mrb[0].mxu0
        %v1371 = vpop.f32.mrb[0].mxu0
        %v1372 = vadd.f32 %v1307, %v1371
        %v1373 = vpop.f32.mrb[0].mxu0
        %1374 = vmatprep.mubr.bf16.mxu0 %v944
        %1375 = vmatmul.mubr.bf16.gmra.mrb[0].mxu0 %v943
        %v1376 = vpop.f32.mrb[0].mxu0
        %v1377 = vadd.f32 %v1312, %v1376
        %v1378 = vpop.f32.mrb[0].mxu0
        %v1379 = vpop.f32.mrb[0].mxu0
        %v1380 = vadd.f32 %v1315, %v1379
        %v1381 = vpop.f32.mrb[0].mxu0
        %1382 = vdwg.mxu0
        %1383 = vmatprep.subr.bf16.mxu0 0
        %1384 = vmatpush1.bf16.msra.mxu0 %v1201
        %1385 = vmatprep.subr.bf16.mxu0 0
        %1386 = vmatpush1.bf16.msra.mxu0 %v1202
        %1387 = vmatprep.subr.bf16.mxu0 0
        %1388 = vmatpush1.bf16.msra.mxu0 %v1203
        %1389 = vmatprep.subr.bf16.mxu0 0
        %1390 = vmatpush1.bf16.msra.mxu0 %v1204
        %1391 = vmatprep.subr.bf16.mxu0 0
        %1392 = vmatpush1.bf16.msra.mxu0 0
        %1393 = vmatprep.subr.bf16.mxu0 0
        %1394 = vmatpush1.bf16.msra.mxu0 0
        %1395 = vmatprep.subr.bf16.mxu0 0
        %1396 = vmatpush1.bf16.msra.mxu0 0
        %1397 = vmatprep.subr.bf16.mxu0 0
        %1398 = vmatpush1.bf16.msra.mxu0 0
        %1399 = vmatprep.subr.bf16.mxu0 0
        %1400 = vmatpush1.bf16.msra.mxu0 0
        %1401 = vmatprep.subr.bf16.mxu0 0
        %1402 = vmatpush1.bf16.msra.mxu0 0
        %1403 = vmatprep.subr.bf16.mxu0 0
        %1404 = vmatpush1.bf16.msra.mxu0 0
        %1405 = vmatprep.subr.bf16.mxu0 0
        %1406 = vmatpush1.bf16.msra.mxu0 0
        %1407 = vmatprep.subr.bf16.mxu0 0
        %1408 = vmatpush1.bf16.msra.mxu0 0
        %1409 = vmatprep.subr.bf16.mxu0 0
        %1410 = vmatpush1.bf16.msra.mxu0 0
        %1411 = vmatprep.subr.bf16.mxu0 0
        %1412 = vmatpush1.bf16.msra.mxu0 0
        %1413 = vmatprep.subr.bf16.mxu0 0
        %1414 = vmatpush1.bf16.msra.mxu0 0
        %1415 = vmatprep.mubr.bf16.mxu0 0
        %1416 = vmatmul.mubr.bf16.gmra.mrb[0].mxu0 %v1242
        %v1417 = vpop.f32.mrb[0].mxu0
        %v1418 = vadd.f32 %v1353, %v1417
        %v1419 = vpop.f32.mrb[0].mxu0
        %v1420 = vpop.f32.mrb[0].mxu0
        %v1421 = vadd.f32 %v1356, %v1420
        %v1422 = vpop.f32.mrb[0].mxu0
        %1423 = vmatprep.mubr.bf16.mxu0 0
        %1424 = vmatmul.mubr.bf16.gmra.mrb[0].mxu0 %v1245
        %v1425 = vpop.f32.mrb[0].mxu0
        %v1426 = vadd.f32 %v1361, %v1425
        %v1427 = vpop.f32.mrb[0].mxu0
        %v1428 = vpop.f32.mrb[0].mxu0
        %v1429 = vadd.f32 %v1364, %v1428
        %v1430 = vpop.f32.mrb[0].mxu0
        %1431 = vmatprep.mubr.bf16.mxu0 0
        %1432 = vmatmul.mubr.bf16.gmra.mrb[0].mxu0 %v1248
        %v1433 = vpop.f32.mrb[0].mxu0
        %v1434 = vadd.f32 %v1369, %v1433
        %v1435 = vpop.f32.mrb[0].mxu0
        %v1436 = vpop.f32.mrb[0].mxu0
        %v1437 = vadd.f32 %v1372, %v1436
        %v1438 = vpop.f32.mrb[0].mxu0
        %1439 = vmatprep.mubr.bf16.mxu0 0
        %1440 = vmatmul.mubr.bf16.gmra.mrb[0].mxu0 %v1251
        %v1441 = vpop.f32.mrb[0].mxu0
        %v1442 = vadd.f32 %v1377, %v1441
        %v1443 = vpop.f32.mrb[0].mxu0
        %v1444 = vpop.f32.mrb[0].mxu0
        %v1445 = vadd.f32 %v1380, %v1444
        %v1446 = vpop.f32.mrb[0].mxu0
        %1447 = vdwg.mxu0
        %v1448 = vmul.f32 %v1418, 0.01
        %v1449 = vmul.f32 %v1421, 0.01
        %v1450 = vmul.f32 %v1426, 0.01
        %v1451 = vmul.f32 %v1429, 0.01
        %v1452 = vmul.f32 %v1434, 0.01
        %v1453 = vmul.f32 %v1437, 0.01
        %v1454 = vmul.f32 %v1442, 0.01
        %v1455 = vmul.f32 %v1445, 0.01
        %v1456 = vmax.f32 %v1418, %v1448
        %v1457 = vmax.f32 %v1421, %v1449
        %v1458 = vmax.f32 %v1426, %v1450
        %v1459 = vmax.f32 %v1429, %v1451
        %v1460 = vmax.f32 %v1434, %v1452
        %v1461 = vmax.f32 %v1437, %v1453
        %v1462 = vmax.f32 %v1442, %v1454
        %v1463 = vmax.f32 %v1445, %v1455
        %1464 = vst [vmem:[#allocation3] sm:$0xf] 0
        %1465 = vst [vmem:[#allocation3 + $0x4] sm:$0x1] 0
        %s1466 = scalar_lea.vmem [#allocation3], 72
        %1467 = vst [vmem:[%s1466] sm:$0xf] 0
        %1468 = vst [vmem:[%s1466 + $0x4] sm:$0x1] 0
        %vm1469 = vcmask 1040384
        %vm1470 = vsmask.f32 256
        %vm1471 = vmand %vm1469, %vm1470
        %v1472 = vld [vmem:[#allocation3] sm:$0x1]
        %v1473 = vsel %vm1471, 0, %v1472
        %1474 = vst [vmem:[#allocation3] sm:$0x1] %v1473
        %v1475 = vld [vmem:[#allocation3 + $0x8] sm:$0x1]
        %v1476 = vsel %vm1471, 0, %v1475
        %1477 = vst [vmem:[#allocation3 + $0x8] sm:$0x1] %v1476
        %v1478 = vld [vmem:[#allocation3 + $0x10] sm:$0x1]
        %v1479 = vsel %vm1471, 0, %v1478
        %1480 = vst [vmem:[#allocation3 + $0x10] sm:$0x1] %v1479
        %v1481 = vld [vmem:[#allocation3 + $0x18] sm:$0x1]
        %v1482 = vsel %vm1471, 0, %v1481
        %1483 = vst [vmem:[#allocation3 + $0x18] sm:$0x1] %v1482
        %v1484 = vld [vmem:[#allocation3 + $0x20] sm:$0x1]
        %v1485 = vsel %vm1471, 0, %v1484
        %1486 = vst [vmem:[#allocation3 + $0x20] sm:$0x1] %v1485
        %v1487 = vld [vmem:[#allocation3 + $0x28] sm:$0x1]
        %v1488 = vsel %vm1471, 0, %v1487
        %1489 = vst [vmem:[#allocation3 + $0x28] sm:$0x1] %v1488
        %v1490 = vld [vmem:[#allocation3 + $0x30] sm:$0x1]
        %v1491 = vsel %vm1471, 0, %v1490
        %1492 = vst [vmem:[#allocation3 + $0x30] sm:$0x1] %v1491
        %v1493 = vld [vmem:[#allocation3 + $0x38] sm:$0x1]
        %v1494 = vsel %vm1471, 0, %v1493
        %1495 = vst [vmem:[#allocation3 + $0x38] sm:$0x1] %v1494
        %v1496 = vld [vmem:[#allocation3 + $0x40] sm:$0x1]
        %v1497 = vsel %vm1471, 0, %v1496
        %1498 = vst [vmem:[#allocation3 + $0x40] sm:$0x1] %v1497
        %v1499 = vld [vmem:[#allocation3 + $0x48] sm:$0x1]
        %v1500 = vsel %vm1471, 0, %v1499
        %1501 = vst [vmem:[#allocation3 + $0x48] sm:$0x1] %v1500
        %vm1502 = vsmask.f32 7938
        %vm1503 = vmand %vm1469, %vm1502
        %v1504 = vld [vmem:[#allocation3 + $0x4] sm:$0x1]
        %v1505 = vsel %vm1503, 0, %v1504
        %1506 = vst [vmem:[#allocation3 + $0x4] sm:$0x1] %v1505
        %v1507 = vld [vmem:[#allocation3 + $0xc] sm:$0x1]
        %v1508 = vsel %vm1503, 0, %v1507
        %1509 = vst [vmem:[#allocation3 + $0xc] sm:$0x1] %v1508
        %v1510 = vld [vmem:[#allocation3 + $0x14] sm:$0x1]
        %v1511 = vsel %vm1503, 0, %v1510
        %1512 = vst [vmem:[#allocation3 + $0x14] sm:$0x1] %v1511
        %v1513 = vld [vmem:[#allocation3 + $0x1c] sm:$0x1]
        %v1514 = vsel %vm1503, 0, %v1513
        %1515 = vst [vmem:[#allocation3 + $0x1c] sm:$0x1] %v1514
        %v1516 = vld [vmem:[#allocation3 + $0x24] sm:$0x1]
        %v1517 = vsel %vm1503, 0, %v1516
        %1518 = vst [vmem:[#allocation3 + $0x24] sm:$0x1] %v1517
        %v1519 = vld [vmem:[#allocation3 + $0x2c] sm:$0x1]
        %v1520 = vsel %vm1503, 0, %v1519
        %1521 = vst [vmem:[#allocation3 + $0x2c] sm:$0x1] %v1520
        %v1522 = vld [vmem:[#allocation3 + $0x34] sm:$0x1]
        %v1523 = vsel %vm1503, 0, %v1522
        %1524 = vst [vmem:[#allocation3 + $0x34] sm:$0x1] %v1523
        %v1525 = vld [vmem:[#allocation3 + $0x3c] sm:$0x1]
        %v1526 = vsel %vm1503, 0, %v1525
        %1527 = vst [vmem:[#allocation3 + $0x3c] sm:$0x1] %v1526
        %v1528 = vld [vmem:[#allocation3 + $0x44] sm:$0x1]
        %v1529 = vsel %vm1503, 0, %v1528
        %1530 = vst [vmem:[#allocation3 + $0x44] sm:$0x1] %v1529
        %v1531 = vld [vmem:[#allocation3 + $0x4c] sm:$0x1]
        %v1532 = vsel %vm1503, 0, %v1531
        %1533 = vst [vmem:[#allocation3 + $0x4c] sm:$0x1] %v1532
        %v1534 = vpack.c.bf16 %v1456, %v1456
        %v1535 = vpack.c.bf16 %v1457, %v1457
        %v1536 = vpack.c.bf16 %v1458, %v1458
        %v1537 = vpack.c.bf16 %v1459, %v1459
        %v1538 = vpack.c.bf16 %v1460, %v1460
        %v1539 = vpack.c.bf16 %v1461, %v1461
        %v1540 = vpack.c.bf16 %v1462, %v1462
        %v1541 = vpack.c.bf16 %v1463, %v1463
        %v1550 = vunpack.c.l.b16 %v1534
        %v1551 = vunpack.c.l.b16 %v1535
        %v1552 = vunpack.c.l.b16 %v1536
        %v1553 = vunpack.c.l.b16 %v1537
        %v1554 = vunpack.c.l.b16 %v1538
        %v1555 = vunpack.c.l.b16 %v1539
        %v1556 = vunpack.c.l.b16 %v1540
        %v1557 = vunpack.c.l.b16 %v1541
        %v1558 = vpack.c.b16 %v1550, %v1550
        %v1559 = vpack.c.b16 %v1551, %v1551
        %v1560 = vpack.c.b16 %v1552, %v1552
        %v1561 = vpack.c.b16 %v1553, %v1553
        %v1562 = vpack.c.b16 %v1554, %v1554
        %v1563 = vpack.c.b16 %v1555, %v1555
        %v1564 = vpack.c.b16 %v1556, %v1556
        %v1565 = vpack.c.b16 %v1557, %v1557
        %v1567 = vshrl.u32 %v1558, 16
        %v1569 = vrot.slane %v1567, 7
        %v1570 = vshll.u32 %v1558, 16
        %v1572 = vor.u32 %v1569, %v1570
        %v1573 = vrot.slane %v1569, 4
        %v1575 = vshrl.u32 %v1559, 16
        %v1577 = vrot.slane %v1575, 7
        %v1578 = vshll.u32 %v1559, 16
        %v1580 = vor.u32 %v1577, %v1578
        %v1581 = vrot.slane %v1577, 4
        %v1583 = vshrl.u32 %v1560, 16
        %v1585 = vrot.slane %v1583, 7
        %v1586 = vshll.u32 %v1560, 16
        %v1588 = vor.u32 %v1585, %v1586
        %v1589 = vrot.slane %v1585, 4
        %v1591 = vshrl.u32 %v1561, 16
        %v1593 = vrot.slane %v1591, 7
        %v1594 = vshll.u32 %v1561, 16
        %v1596 = vor.u32 %v1593, %v1594
        %v1597 = vrot.slane %v1593, 4
        %v1599 = vshrl.u32 %v1562, 16
        %v1601 = vrot.slane %v1599, 7
        %v1602 = vshll.u32 %v1562, 16
        %v1604 = vor.u32 %v1601, %v1602
        %v1605 = vrot.slane %v1601, 4
        %v1607 = vshrl.u32 %v1563, 16
        %v1609 = vrot.slane %v1607, 7
        %v1610 = vshll.u32 %v1563, 16
        %v1612 = vor.u32 %v1609, %v1610
        %v1613 = vrot.slane %v1609, 4
        %v1615 = vshrl.u32 %v1564, 16
        %v1617 = vrot.slane %v1615, 7
        %v1618 = vshll.u32 %v1564, 16
        %v1620 = vor.u32 %v1617, %v1618
        %v1621 = vrot.slane %v1617, 4
        %v1623 = vshrl.u32 %v1565, 16
        %v1625 = vrot.slane %v1623, 7
        %v1626 = vshll.u32 %v1565, 16
        %v1628 = vor.u32 %v1625, %v1626
        %v1629 = vrot.slane %v1625, 4
        %s1646 = scalar_lea.vmem [#allocation3], 8
        %vm1647 = vcmask 1043456
        %vm1648 = vmand %vm1647, %vm1502
        %v1649 = vld [vmem:[%s1646] sm:$0xf]
        %v1650 = vsel %vm1648, %v1572, %v1649
        %1651 = vst [vmem:[%s1646] sm:$0xf] %v1650
        %v1652 = vld [vmem:[%s1646 + $0x4] sm:$0x1]
        %v1653 = vsel %vm1471, %v1573, %v1652
        %1654 = vst [vmem:[%s1646 + $0x4] sm:$0x1] %v1653
        %v1655 = vld [vmem:[%s1646 + $0x8] sm:$0xf]
        %v1656 = vsel %vm1648, %v1580, %v1655
        %1657 = vst [vmem:[%s1646 + $0x8] sm:$0xf] %v1656
        %v1658 = vld [vmem:[%s1646 + $0xc] sm:$0x1]
        %v1659 = vsel %vm1471, %v1581, %v1658
        %1660 = vst [vmem:[%s1646 + $0xc] sm:$0x1] %v1659
        %v1661 = vld [vmem:[%s1646 + $0x10] sm:$0xf]
        %v1662 = vsel %vm1648, %v1588, %v1661
        %1663 = vst [vmem:[%s1646 + $0x10] sm:$0xf] %v1662
        %v1664 = vld [vmem:[%s1646 + $0x14] sm:$0x1]
        %v1665 = vsel %vm1471, %v1589, %v1664
        %1666 = vst [vmem:[%s1646 + $0x14] sm:$0x1] %v1665
        %v1667 = vld [vmem:[%s1646 + $0x18] sm:$0xf]
        %v1668 = vsel %vm1648, %v1596, %v1667
        %1669 = vst [vmem:[%s1646 + $0x18] sm:$0xf] %v1668
        %v1670 = vld [vmem:[%s1646 + $0x1c] sm:$0x1]
        %v1671 = vsel %vm1471, %v1597, %v1670
        %1672 = vst [vmem:[%s1646 + $0x1c] sm:$0x1] %v1671
        %v1673 = vld [vmem:[%s1646 + $0x20] sm:$0xf]
        %v1674 = vsel %vm1648, %v1604, %v1673
        %1675 = vst [vmem:[%s1646 + $0x20] sm:$0xf] %v1674
        %v1676 = vld [vmem:[%s1646 + $0x24] sm:$0x1]
        %v1677 = vsel %vm1471, %v1605, %v1676
        %1678 = vst [vmem:[%s1646 + $0x24] sm:$0x1] %v1677
        %v1679 = vld [vmem:[%s1646 + $0x28] sm:$0xf]
        %v1680 = vsel %vm1648, %v1612, %v1679
        %1681 = vst [vmem:[%s1646 + $0x28] sm:$0xf] %v1680
        %v1682 = vld [vmem:[%s1646 + $0x2c] sm:$0x1]
        %v1683 = vsel %vm1471, %v1613, %v1682
        %1684 = vst [vmem:[%s1646 + $0x2c] sm:$0x1] %v1683
        %v1685 = vld [vmem:[%s1646 + $0x30] sm:$0xf]
        %v1686 = vsel %vm1648, %v1620, %v1685
        %1687 = vst [vmem:[%s1646 + $0x30] sm:$0xf] %v1686
        %v1688 = vld [vmem:[%s1646 + $0x34] sm:$0x1]
        %v1689 = vsel %vm1471, %v1621, %v1688
        %1690 = vst [vmem:[%s1646 + $0x34] sm:$0x1] %v1689
        %v1691 = vld [vmem:[%s1646 + $0x38] sm:$0xf]
        %v1692 = vsel %vm1648, %v1628, %v1691
        %1693 = vst [vmem:[%s1646 + $0x38] sm:$0xf] %v1692
        %v1694 = vld [vmem:[%s1646 + $0x3c] sm:$0x1]
        %v1695 = vsel %vm1471, %v1629, %v1694
        %1696 = vst [vmem:[%s1646 + $0x3c] sm:$0x1] %v1695
        %v1697 = vld [vmem:[#allocation3] sm:$0xf]
        %v1698 = vld [vmem:[#allocation3 + $0x8] sm:$0xf]
        %v1699 = vld [vmem:[#allocation3 + $0x10] sm:$0xf]
        %v1700 = vld [vmem:[#allocation3 + $0x18] sm:$0xf]
        %v1701 = vld [vmem:[#allocation3 + $0x20] sm:$0xf]
        %v1702 = vld [vmem:[#allocation3 + $0x28] sm:$0xf]
        %v1703 = vld [vmem:[#allocation3 + $0x30] sm:$0xf]
        %v1704 = vld [vmem:[#allocation3 + $0x38] sm:$0xf]
        %v1713 = vunpack.c.l.b16 %v1697
        %v1714 = vunpack.c.l.b16 %v1698
        %v1715 = vunpack.c.l.b16 %v1699
        %v1716 = vunpack.c.l.b16 %v1700
        %v1717 = vunpack.c.l.b16 %v1701
        %v1718 = vunpack.c.l.b16 %v1702
        %v1719 = vunpack.c.l.b16 %v1703
        %v1720 = vunpack.c.l.b16 %v1704
        %v1721 = vpack.c.b16 %v1714, %v1713
        %v1722 = vpack.c.b16 %v1716, %v1715
        %v1723 = vpack.c.b16 %v1718, %v1717
        %v1724 = vpack.c.b16 %v1720, %v1719
        %1729 = vst [vmem:[#allocation4] sm:$0xff] %v1721
        %1730 = vst [vmem:[#allocation4 + $0x48] sm:$0xff] %v1722
        %1731 = vst [vmem:[#allocation4 + $0x90] sm:$0xff] %v1723
        %1732 = vst [vmem:[#allocation4 + $0xd8] sm:$0xff] %v1724
        %v1733 = vld [vmem:[#allocation3] sm:$0xf]
        %v1734 = vld [vmem:[#allocation3 + $0x4] sm:$0x1]
        %v1735 = vld [vmem:[#allocation3 + $0x8] sm:$0xf]
        %v1736 = vld [vmem:[#allocation3 + $0xc] sm:$0x1]
        %v1737 = vld [vmem:[#allocation3 + $0x10] sm:$0xf]
        %v1738 = vld [vmem:[#allocation3 + $0x14] sm:$0x1]
        %v1739 = vld [vmem:[#allocation3 + $0x18] sm:$0xf]
        %v1740 = vld [vmem:[#allocation3 + $0x1c] sm:$0x1]
        %v1741 = vld [vmem:[#allocation3 + $0x20] sm:$0xf]
        %v1742 = vld [vmem:[#allocation3 + $0x24] sm:$0x1]
        %v1743 = vld [vmem:[#allocation3 + $0x28] sm:$0xf]
        %v1744 = vld [vmem:[#allocation3 + $0x2c] sm:$0x1]
        %v1745 = vld [vmem:[#allocation3 + $0x30] sm:$0xf]
        %v1746 = vld [vmem:[#allocation3 + $0x34] sm:$0x1]
        %v1747 = vld [vmem:[#allocation3 + $0x38] sm:$0xf]
        %v1748 = vld [vmem:[#allocation3 + $0x3c] sm:$0x1]
        %v1750 = vshrl.u32 %v1733, 16
        %v1752 = vrot.slane %v1750, 4
        %v1753 = vshll.u32 %v1733, 16
        %v1755 = vrot.slane %v1753, 5
        %v1756 = vor.u32 %v1752, %v1755
        %v1757 = vrot.slane %v1756, 4
        %v1759 = vshll.u32 %v1734, 16
        %v1761 = vrot.slane %v1759, 5
        %v1762 = vsel %vm325, %v1757, %v1761
        %v1764 = vshrl.u32 %v1735, 16
        %v1766 = vrot.slane %v1764, 4
        %v1767 = vshll.u32 %v1735, 16
        %v1769 = vrot.slane %v1767, 5
        %v1770 = vor.u32 %v1766, %v1769
        %v1771 = vrot.slane %v1770, 4
        %v1773 = vshll.u32 %v1736, 16
        %v1775 = vrot.slane %v1773, 5
        %v1776 = vsel %vm325, %v1771, %v1775
        %v1778 = vshrl.u32 %v1737, 16
        %v1780 = vrot.slane %v1778, 4
        %v1781 = vshll.u32 %v1737, 16
        %v1783 = vrot.slane %v1781, 5
        %v1784 = vor.u32 %v1780, %v1783
        %v1785 = vrot.slane %v1784, 4
        %v1787 = vshll.u32 %v1738, 16
        %v1789 = vrot.slane %v1787, 5
        %v1790 = vsel %vm325, %v1785, %v1789
        %v1792 = vshrl.u32 %v1739, 16
        %v1794 = vrot.slane %v1792, 4
        %v1795 = vshll.u32 %v1739, 16
        %v1797 = vrot.slane %v1795, 5
        %v1798 = vor.u32 %v1794, %v1797
        %v1799 = vrot.slane %v1798, 4
        %v1801 = vshll.u32 %v1740, 16
        %v1803 = vrot.slane %v1801, 5
        %v1804 = vsel %vm325, %v1799, %v1803
        %v1806 = vshrl.u32 %v1741, 16
        %v1808 = vrot.slane %v1806, 4
        %v1809 = vshll.u32 %v1741, 16
        %v1811 = vrot.slane %v1809, 5
        %v1812 = vor.u32 %v1808, %v1811
        %v1813 = vrot.slane %v1812, 4
        %v1815 = vshll.u32 %v1742, 16
        %v1817 = vrot.slane %v1815, 5
        %v1818 = vsel %vm325, %v1813, %v1817
        %v1820 = vshrl.u32 %v1743, 16
        %v1822 = vrot.slane %v1820, 4
        %v1823 = vshll.u32 %v1743, 16
        %v1825 = vrot.slane %v1823, 5
        %v1826 = vor.u32 %v1822, %v1825
        %v1827 = vrot.slane %v1826, 4
        %v1829 = vshll.u32 %v1744, 16
        %v1831 = vrot.slane %v1829, 5
        %v1832 = vsel %vm325, %v1827, %v1831
        %v1834 = vshrl.u32 %v1745, 16
        %v1836 = vrot.slane %v1834, 4
        %v1837 = vshll.u32 %v1745, 16
        %v1839 = vrot.slane %v1837, 5
        %v1840 = vor.u32 %v1836, %v1839
        %v1841 = vrot.slane %v1840, 4
        %v1843 = vshll.u32 %v1746, 16
        %v1845 = vrot.slane %v1843, 5
        %v1846 = vsel %vm325, %v1841, %v1845
        %v1848 = vshrl.u32 %v1747, 16
        %v1850 = vrot.slane %v1848, 4
        %v1851 = vshll.u32 %v1747, 16
        %v1853 = vrot.slane %v1851, 5
        %v1854 = vor.u32 %v1850, %v1853
        %v1855 = vrot.slane %v1854, 4
        %v1857 = vshll.u32 %v1748, 16
        %v1859 = vrot.slane %v1857, 5
        %v1860 = vsel %vm325, %v1855, %v1859
        %v1861 = vunpack.c.l.b16 %v1762
        %v1862 = vunpack.c.l.b16 %v1776
        %v1863 = vunpack.c.l.b16 %v1790
        %v1864 = vunpack.c.l.b16 %v1804
        %v1865 = vunpack.c.l.b16 %v1818
        %v1866 = vunpack.c.l.b16 %v1832
        %v1867 = vunpack.c.l.b16 %v1846
        %v1868 = vunpack.c.l.b16 %v1860
        %v1869 = vpack.c.b16 %v1862, %v1861
        %v1870 = vpack.c.b16 %v1864, %v1863
        %v1871 = vpack.c.b16 %v1866, %v1865
        %v1872 = vpack.c.b16 %v1868, %v1867
        %1877 = vst [vmem:[#allocation4 + $0x8] sm:$0xff] %v1869
        %1878 = vst [vmem:[#allocation4 + $0x50] sm:$0xff] %v1870
        %1879 = vst [vmem:[#allocation4 + $0x98] sm:$0xff] %v1871
        %1880 = vst [vmem:[#allocation4 + $0xe0] sm:$0xff] %v1872
        %v1881 = vld [vmem:[#allocation3] sm:$0xe]
        %v1882 = vld [vmem:[#allocation3 + $0x4] sm:$0x1]
        %v1883 = vld [vmem:[#allocation3 + $0x8] sm:$0xe]
        %v1884 = vld [vmem:[#allocation3 + $0xc] sm:$0x1]
        %v1885 = vld [vmem:[#allocation3 + $0x10] sm:$0xe]
        %v1886 = vld [vmem:[#allocation3 + $0x14] sm:$0x1]
        %v1887 = vld [vmem:[#allocation3 + $0x18] sm:$0xe]
        %v1888 = vld [vmem:[#allocation3 + $0x1c] sm:$0x1]
        %v1889 = vld [vmem:[#allocation3 + $0x20] sm:$0xe]
        %v1890 = vld [vmem:[#allocation3 + $0x24] sm:$0x1]
        %v1891 = vld [vmem:[#allocation3 + $0x28] sm:$0xe]
        %v1892 = vld [vmem:[#allocation3 + $0x2c] sm:$0x1]
        %v1893 = vld [vmem:[#allocation3 + $0x30] sm:$0xe]
        %v1894 = vld [vmem:[#allocation3 + $0x34] sm:$0x1]
        %v1895 = vld [vmem:[#allocation3 + $0x38] sm:$0xe]
        %v1896 = vld [vmem:[#allocation3 + $0x3c] sm:$0x1]
        %vm1913 = vcmask 1042432
        %vm1914 = vcmask 1046532
        %vm1915 = vmor %vm1913, %vm1914
        %v1916 = vrot.slane %v1881, 5
        %v1917 = vrot.slane %v1916, 4
        %v1918 = vrot.slane %v1882, 5
        %v1919 = vsel %vm1915, %v1917, %v1918
        %v1920 = vrot.slane %v1883, 5
        %v1921 = vrot.slane %v1920, 4
        %v1922 = vrot.slane %v1884, 5
        %v1923 = vsel %vm1915, %v1921, %v1922
        %v1924 = vrot.slane %v1885, 5
        %v1925 = vrot.slane %v1924, 4
        %v1926 = vrot.slane %v1886, 5
        %v1927 = vsel %vm1915, %v1925, %v1926
        %v1928 = vrot.slane %v1887, 5
        %v1929 = vrot.slane %v1928, 4
        %v1930 = vrot.slane %v1888, 5
        %v1931 = vsel %vm1915, %v1929, %v1930
        %v1932 = vrot.slane %v1889, 5
        %v1933 = vrot.slane %v1932, 4
        %v1934 = vrot.slane %v1890, 5
        %v1935 = vsel %vm1915, %v1933, %v1934
        %v1936 = vrot.slane %v1891, 5
        %v1937 = vrot.slane %v1936, 4
        %v1938 = vrot.slane %v1892, 5
        %v1939 = vsel %vm1915, %v1937, %v1938
        %v1940 = vrot.slane %v1893, 5
        %v1941 = vrot.slane %v1940, 4
        %v1942 = vrot.slane %v1894, 5
        %v1943 = vsel %vm1915, %v1941, %v1942
        %v1944 = vrot.slane %v1895, 5
        %v1945 = vrot.slane %v1944, 4
        %v1946 = vrot.slane %v1896, 5
        %v1947 = vsel %vm1915, %v1945, %v1946
        %v1948 = vunpack.c.l.b16 %v1919
        %v1949 = vunpack.c.l.b16 %v1923
        %v1950 = vunpack.c.l.b16 %v1927
        %v1951 = vunpack.c.l.b16 %v1931
        %v1952 = vunpack.c.l.b16 %v1935
        %v1953 = vunpack.c.l.b16 %v1939
        %v1954 = vunpack.c.l.b16 %v1943
        %v1955 = vunpack.c.l.b16 %v1947
        %v1956 = vpack.c.b16 %v1949, %v1948
        %v1957 = vpack.c.b16 %v1951, %v1950
        %v1958 = vpack.c.b16 %v1953, %v1952
        %v1959 = vpack.c.b16 %v1955, %v1954
        %1964 = vst [vmem:[#allocation4 + $0x10] sm:$0xff] %v1956
        %1965 = vst [vmem:[#allocation4 + $0x58] sm:$0xff] %v1957
        %1966 = vst [vmem:[#allocation4 + $0xa0] sm:$0xff] %v1958
        %1967 = vst [vmem:[#allocation4 + $0xe8] sm:$0xff] %v1959
        %v1968 = vld [vmem:[%s1646] sm:$0xf]
        %v1969 = vld [vmem:[%s1646 + $0x8] sm:$0xf]
        %v1970 = vld [vmem:[%s1646 + $0x10] sm:$0xf]
        %v1971 = vld [vmem:[%s1646 + $0x18] sm:$0xf]
        %v1972 = vld [vmem:[%s1646 + $0x20] sm:$0xf]
        %v1973 = vld [vmem:[%s1646 + $0x28] sm:$0xf]
        %v1974 = vld [vmem:[%s1646 + $0x30] sm:$0xf]
        %v1975 = vld [vmem:[%s1646 + $0x38] sm:$0xf]
        %v1984 = vunpack.c.l.b16 %v1968
        %v1985 = vunpack.c.l.b16 %v1969
        %v1986 = vunpack.c.l.b16 %v1970
        %v1987 = vunpack.c.l.b16 %v1971
        %v1988 = vunpack.c.l.b16 %v1972
        %v1989 = vunpack.c.l.b16 %v1973
        %v1990 = vunpack.c.l.b16 %v1974
        %v1991 = vunpack.c.l.b16 %v1975
        %v1992 = vpack.c.b16 %v1985, %v1984
        %v1993 = vpack.c.b16 %v1987, %v1986
        %v1994 = vpack.c.b16 %v1989, %v1988
        %v1995 = vpack.c.b16 %v1991, %v1990
        %2000 = vst [vmem:[#allocation4 + $0x18] sm:$0xff] %v1992
        %2001 = vst [vmem:[#allocation4 + $0x60] sm:$0xff] %v1993
        %2002 = vst [vmem:[#allocation4 + $0xa8] sm:$0xff] %v1994
        %2003 = vst [vmem:[#allocation4 + $0xf0] sm:$0xff] %v1995
        %v2004 = vld [vmem:[%s1646] sm:$0xf]
        %v2005 = vld [vmem:[%s1646 + $0x4] sm:$0x1]
        %v2006 = vld [vmem:[%s1646 + $0x8] sm:$0xf]
        %v2007 = vld [vmem:[%s1646 + $0xc] sm:$0x1]
        %v2008 = vld [vmem:[%s1646 + $0x10] sm:$0xf]
        %v2009 = vld [vmem:[%s1646 + $0x14] sm:$0x1]
        %v2010 = vld [vmem:[%s1646 + $0x18] sm:$0xf]
        %v2011 = vld [vmem:[%s1646 + $0x1c] sm:$0x1]
        %v2012 = vld [vmem:[%s1646 + $0x20] sm:$0xf]
        %v2013 = vld [vmem:[%s1646 + $0x24] sm:$0x1]
        %v2014 = vld [vmem:[%s1646 + $0x28] sm:$0xf]
        %v2015 = vld [vmem:[%s1646 + $0x2c] sm:$0x1]
        %v2016 = vld [vmem:[%s1646 + $0x30] sm:$0xf]
        %v2017 = vld [vmem:[%s1646 + $0x34] sm:$0x1]
        %v2018 = vld [vmem:[%s1646 + $0x38] sm:$0xf]
        %v2019 = vld [vmem:[%s1646 + $0x3c] sm:$0x1]
        %v2021 = vshrl.u32 %v2004, 16
        %v2023 = vrot.slane %v2021, 4
        %v2024 = vshll.u32 %v2004, 16
        %v2026 = vrot.slane %v2024, 5
        %v2027 = vor.u32 %v2023, %v2026
        %v2028 = vrot.slane %v2027, 4
        %v2030 = vshll.u32 %v2005, 16
        %v2032 = vrot.slane %v2030, 5
        %v2033 = vsel %vm325, %v2028, %v2032
        %v2035 = vshrl.u32 %v2006, 16
        %v2037 = vrot.slane %v2035, 4
        %v2038 = vshll.u32 %v2006, 16
        %v2040 = vrot.slane %v2038, 5
        %v2041 = vor.u32 %v2037, %v2040
        %v2042 = vrot.slane %v2041, 4
        %v2044 = vshll.u32 %v2007, 16
        %v2046 = vrot.slane %v2044, 5
        %v2047 = vsel %vm325, %v2042, %v2046
        %v2049 = vshrl.u32 %v2008, 16
        %v2051 = vrot.slane %v2049, 4
        %v2052 = vshll.u32 %v2008, 16
        %v2054 = vrot.slane %v2052, 5
        %v2055 = vor.u32 %v2051, %v2054
        %v2056 = vrot.slane %v2055, 4
        %v2058 = vshll.u32 %v2009, 16
        %v2060 = vrot.slane %v2058, 5
        %v2061 = vsel %vm325, %v2056, %v2060
        %v2063 = vshrl.u32 %v2010, 16
        %v2065 = vrot.slane %v2063, 4
        %v2066 = vshll.u32 %v2010, 16
        %v2068 = vrot.slane %v2066, 5
        %v2069 = vor.u32 %v2065, %v2068
        %v2070 = vrot.slane %v2069, 4
        %v2072 = vshll.u32 %v2011, 16
        %v2074 = vrot.slane %v2072, 5
        %v2075 = vsel %vm325, %v2070, %v2074
        %v2077 = vshrl.u32 %v2012, 16
        %v2079 = vrot.slane %v2077, 4
        %v2080 = vshll.u32 %v2012, 16
        %v2082 = vrot.slane %v2080, 5
        %v2083 = vor.u32 %v2079, %v2082
        %v2084 = vrot.slane %v2083, 4
        %v2086 = vshll.u32 %v2013, 16
        %v2088 = vrot.slane %v2086, 5
        %v2089 = vsel %vm325, %v2084, %v2088
        %v2091 = vshrl.u32 %v2014, 16
        %v2093 = vrot.slane %v2091, 4
        %v2094 = vshll.u32 %v2014, 16
        %v2096 = vrot.slane %v2094, 5
        %v2097 = vor.u32 %v2093, %v2096
        %v2098 = vrot.slane %v2097, 4
        %v2100 = vshll.u32 %v2015, 16
        %v2102 = vrot.slane %v2100, 5
        %v2103 = vsel %vm325, %v2098, %v2102
        %v2105 = vshrl.u32 %v2016, 16
        %v2107 = vrot.slane %v2105, 4
        %v2108 = vshll.u32 %v2016, 16
        %v2110 = vrot.slane %v2108, 5
        %v2111 = vor.u32 %v2107, %v2110
        %v2112 = vrot.slane %v2111, 4
        %v2114 = vshll.u32 %v2017, 16
        %v2116 = vrot.slane %v2114, 5
        %v2117 = vsel %vm325, %v2112, %v2116
        %v2119 = vshrl.u32 %v2018, 16
        %v2121 = vrot.slane %v2119, 4
        %v2122 = vshll.u32 %v2018, 16
        %v2124 = vrot.slane %v2122, 5
        %v2125 = vor.u32 %v2121, %v2124
        %v2126 = vrot.slane %v2125, 4
        %v2128 = vshll.u32 %v2019, 16
        %v2130 = vrot.slane %v2128, 5
        %v2131 = vsel %vm325, %v2126, %v2130
        %v2132 = vunpack.c.l.b16 %v2033
        %v2133 = vunpack.c.l.b16 %v2047
        %v2134 = vunpack.c.l.b16 %v2061
        %v2135 = vunpack.c.l.b16 %v2075
        %v2136 = vunpack.c.l.b16 %v2089
        %v2137 = vunpack.c.l.b16 %v2103
        %v2138 = vunpack.c.l.b16 %v2117
        %v2139 = vunpack.c.l.b16 %v2131
        %v2140 = vpack.c.b16 %v2133, %v2132
        %v2141 = vpack.c.b16 %v2135, %v2134
        %v2142 = vpack.c.b16 %v2137, %v2136
        %v2143 = vpack.c.b16 %v2139, %v2138
        %2148 = vst [vmem:[#allocation4 + $0x20] sm:$0xff] %v2140
        %2149 = vst [vmem:[#allocation4 + $0x68] sm:$0xff] %v2141
        %2150 = vst [vmem:[#allocation4 + $0xb0] sm:$0xff] %v2142
        %2151 = vst [vmem:[#allocation4 + $0xf8] sm:$0xff] %v2143
        %v2152 = vld [vmem:[%s1646] sm:$0xe]
        %v2153 = vld [vmem:[%s1646 + $0x4] sm:$0x1]
        %v2154 = vld [vmem:[%s1646 + $0x8] sm:$0xe]
        %v2155 = vld [vmem:[%s1646 + $0xc] sm:$0x1]
        %v2156 = vld [vmem:[%s1646 + $0x10] sm:$0xe]
        %v2157 = vld [vmem:[%s1646 + $0x14] sm:$0x1]
        %v2158 = vld [vmem:[%s1646 + $0x18] sm:$0xe]
        %v2159 = vld [vmem:[%s1646 + $0x1c] sm:$0x1]
        %v2160 = vld [vmem:[%s1646 + $0x20] sm:$0xe]
        %v2161 = vld [vmem:[%s1646 + $0x24] sm:$0x1]
        %v2162 = vld [vmem:[%s1646 + $0x28] sm:$0xe]
        %v2163 = vld [vmem:[%s1646 + $0x2c] sm:$0x1]
        %v2164 = vld [vmem:[%s1646 + $0x30] sm:$0xe]
        %v2165 = vld [vmem:[%s1646 + $0x34] sm:$0x1]
        %v2166 = vld [vmem:[%s1646 + $0x38] sm:$0xe]
        %v2167 = vld [vmem:[%s1646 + $0x3c] sm:$0x1]
        %v2184 = vrot.slane %v2152, 5
        %v2185 = vrot.slane %v2184, 4
        %v2186 = vrot.slane %v2153, 5
        %v2187 = vsel %vm1915, %v2185, %v2186
        %v2188 = vrot.slane %v2154, 5
        %v2189 = vrot.slane %v2188, 4
        %v2190 = vrot.slane %v2155, 5
        %v2191 = vsel %vm1915, %v2189, %v2190
        %v2192 = vrot.slane %v2156, 5
        %v2193 = vrot.slane %v2192, 4
        %v2194 = vrot.slane %v2157, 5
        %v2195 = vsel %vm1915, %v2193, %v2194
        %v2196 = vrot.slane %v2158, 5
        %v2197 = vrot.slane %v2196, 4
        %v2198 = vrot.slane %v2159, 5
        %v2199 = vsel %vm1915, %v2197, %v2198
        %v2200 = vrot.slane %v2160, 5
        %v2201 = vrot.slane %v2200, 4
        %v2202 = vrot.slane %v2161, 5
        %v2203 = vsel %vm1915, %v2201, %v2202
        %v2204 = vrot.slane %v2162, 5
        %v2205 = vrot.slane %v2204, 4
        %v2206 = vrot.slane %v2163, 5
        %v2207 = vsel %vm1915, %v2205, %v2206
        %v2208 = vrot.slane %v2164, 5
        %v2209 = vrot.slane %v2208, 4
        %v2210 = vrot.slane %v2165, 5
        %v2211 = vsel %vm1915, %v2209, %v2210
        %v2212 = vrot.slane %v2166, 5
        %v2213 = vrot.slane %v2212, 4
        %v2214 = vrot.slane %v2167, 5
        %v2215 = vsel %vm1915, %v2213, %v2214
        %v2216 = vunpack.c.l.b16 %v2187
        %v2217 = vunpack.c.l.b16 %v2191
        %v2218 = vunpack.c.l.b16 %v2195
        %v2219 = vunpack.c.l.b16 %v2199
        %v2220 = vunpack.c.l.b16 %v2203
        %v2221 = vunpack.c.l.b16 %v2207
        %v2222 = vunpack.c.l.b16 %v2211
        %v2223 = vunpack.c.l.b16 %v2215
        %v2224 = vpack.c.b16 %v2217, %v2216
        %v2225 = vpack.c.b16 %v2219, %v2218
        %v2226 = vpack.c.b16 %v2221, %v2220
        %v2227 = vpack.c.b16 %v2223, %v2222
        %2232 = vst [vmem:[#allocation4 + $0x28] sm:$0xff] %v2224
        %2233 = vst [vmem:[#allocation4 + $0x70] sm:$0xff] %v2225
        %2234 = vst [vmem:[#allocation4 + $0xb8] sm:$0xff] %v2226
        %2235 = vst [vmem:[#allocation4 + $0x100] sm:$0xff] %v2227
        %s2236 = scalar_lea.vmem [#allocation3], 16
        %v2237 = vld [vmem:[%s2236] sm:$0xf]
        %v2238 = vld [vmem:[%s2236 + $0x8] sm:$0xf]
        %v2239 = vld [vmem:[%s2236 + $0x10] sm:$0xf]
        %v2240 = vld [vmem:[%s2236 + $0x18] sm:$0xf]
        %v2241 = vld [vmem:[%s2236 + $0x20] sm:$0xf]
        %v2242 = vld [vmem:[%s2236 + $0x28] sm:$0xf]
        %v2243 = vld [vmem:[%s2236 + $0x30] sm:$0xf]
        %v2244 = vld [vmem:[%s2236 + $0x38] sm:$0xf]
        %v2253 = vunpack.c.l.b16 %v2237
        %v2254 = vunpack.c.l.b16 %v2238
        %v2255 = vunpack.c.l.b16 %v2239
        %v2256 = vunpack.c.l.b16 %v2240
        %v2257 = vunpack.c.l.b16 %v2241
        %v2258 = vunpack.c.l.b16 %v2242
        %v2259 = vunpack.c.l.b16 %v2243
        %v2260 = vunpack.c.l.b16 %v2244
        %v2261 = vpack.c.b16 %v2254, %v2253
        %v2262 = vpack.c.b16 %v2256, %v2255
        %v2263 = vpack.c.b16 %v2258, %v2257
        %v2264 = vpack.c.b16 %v2260, %v2259
        %2269 = vst [vmem:[#allocation4 + $0x30] sm:$0xff] %v2261
        %2270 = vst [vmem:[#allocation4 + $0x78] sm:$0xff] %v2262
        %2271 = vst [vmem:[#allocation4 + $0xc0] sm:$0xff] %v2263
        %2272 = vst [vmem:[#allocation4 + $0x108] sm:$0xff] %v2264
        %v2273 = vld [vmem:[%s2236] sm:$0xf]
        %v2274 = vld [vmem:[%s2236 + $0x4] sm:$0x1]
        %v2275 = vld [vmem:[%s2236 + $0x8] sm:$0xf]
        %v2276 = vld [vmem:[%s2236 + $0xc] sm:$0x1]
        %v2277 = vld [vmem:[%s2236 + $0x10] sm:$0xf]
        %v2278 = vld [vmem:[%s2236 + $0x14] sm:$0x1]
        %v2279 = vld [vmem:[%s2236 + $0x18] sm:$0xf]
        %v2280 = vld [vmem:[%s2236 + $0x1c] sm:$0x1]
        %v2281 = vld [vmem:[%s2236 + $0x20] sm:$0xf]
        %v2282 = vld [vmem:[%s2236 + $0x24] sm:$0x1]
        %v2283 = vld [vmem:[%s2236 + $0x28] sm:$0xf]
        %v2284 = vld [vmem:[%s2236 + $0x2c] sm:$0x1]
        %v2285 = vld [vmem:[%s2236 + $0x30] sm:$0xf]
        %v2286 = vld [vmem:[%s2236 + $0x34] sm:$0x1]
        %v2287 = vld [vmem:[%s2236 + $0x38] sm:$0xf]
        %v2288 = vld [vmem:[%s2236 + $0x3c] sm:$0x1]
        %v2290 = vshrl.u32 %v2273, 16
        %v2292 = vrot.slane %v2290, 4
        %v2293 = vshll.u32 %v2273, 16
        %v2295 = vrot.slane %v2293, 5
        %v2296 = vor.u32 %v2292, %v2295
        %v2297 = vrot.slane %v2296, 4
        %v2299 = vshll.u32 %v2274, 16
        %v2301 = vrot.slane %v2299, 5
        %v2302 = vsel %vm325, %v2297, %v2301
        %v2304 = vshrl.u32 %v2275, 16
        %v2306 = vrot.slane %v2304, 4
        %v2307 = vshll.u32 %v2275, 16
        %v2309 = vrot.slane %v2307, 5
        %v2310 = vor.u32 %v2306, %v2309
        %v2311 = vrot.slane %v2310, 4
        %v2313 = vshll.u32 %v2276, 16
        %v2315 = vrot.slane %v2313, 5
        %v2316 = vsel %vm325, %v2311, %v2315
        %v2318 = vshrl.u32 %v2277, 16
        %v2320 = vrot.slane %v2318, 4
        %v2321 = vshll.u32 %v2277, 16
        %v2323 = vrot.slane %v2321, 5
        %v2324 = vor.u32 %v2320, %v2323
        %v2325 = vrot.slane %v2324, 4
        %v2327 = vshll.u32 %v2278, 16
        %v2329 = vrot.slane %v2327, 5
        %v2330 = vsel %vm325, %v2325, %v2329
        %v2332 = vshrl.u32 %v2279, 16
        %v2334 = vrot.slane %v2332, 4
        %v2335 = vshll.u32 %v2279, 16
        %v2337 = vrot.slane %v2335, 5
        %v2338 = vor.u32 %v2334, %v2337
        %v2339 = vrot.slane %v2338, 4
        %v2341 = vshll.u32 %v2280, 16
        %v2343 = vrot.slane %v2341, 5
        %v2344 = vsel %vm325, %v2339, %v2343
        %v2346 = vshrl.u32 %v2281, 16
        %v2348 = vrot.slane %v2346, 4
        %v2349 = vshll.u32 %v2281, 16
        %v2351 = vrot.slane %v2349, 5
        %v2352 = vor.u32 %v2348, %v2351
        %v2353 = vrot.slane %v2352, 4
        %v2355 = vshll.u32 %v2282, 16
        %v2357 = vrot.slane %v2355, 5
        %v2358 = vsel %vm325, %v2353, %v2357
        %v2360 = vshrl.u32 %v2283, 16
        %v2362 = vrot.slane %v2360, 4
        %v2363 = vshll.u32 %v2283, 16
        %v2365 = vrot.slane %v2363, 5
        %v2366 = vor.u32 %v2362, %v2365
        %v2367 = vrot.slane %v2366, 4
        %v2369 = vshll.u32 %v2284, 16
        %v2371 = vrot.slane %v2369, 5
        %v2372 = vsel %vm325, %v2367, %v2371
        %v2374 = vshrl.u32 %v2285, 16
        %v2376 = vrot.slane %v2374, 4
        %v2377 = vshll.u32 %v2285, 16
        %v2379 = vrot.slane %v2377, 5
        %v2380 = vor.u32 %v2376, %v2379
        %v2381 = vrot.slane %v2380, 4
        %v2383 = vshll.u32 %v2286, 16
        %v2385 = vrot.slane %v2383, 5
        %v2386 = vsel %vm325, %v2381, %v2385
        %v2388 = vshrl.u32 %v2287, 16
        %v2390 = vrot.slane %v2388, 4
        %v2391 = vshll.u32 %v2287, 16
        %v2393 = vrot.slane %v2391, 5
        %v2394 = vor.u32 %v2390, %v2393
        %v2395 = vrot.slane %v2394, 4
        %v2397 = vshll.u32 %v2288, 16
        %v2399 = vrot.slane %v2397, 5
        %v2400 = vsel %vm325, %v2395, %v2399
        %v2401 = vunpack.c.l.b16 %v2302
        %v2402 = vunpack.c.l.b16 %v2316
        %v2403 = vunpack.c.l.b16 %v2330
        %v2404 = vunpack.c.l.b16 %v2344
        %v2405 = vunpack.c.l.b16 %v2358
        %v2406 = vunpack.c.l.b16 %v2372
        %v2407 = vunpack.c.l.b16 %v2386
        %v2408 = vunpack.c.l.b16 %v2400
        %v2409 = vpack.c.b16 %v2402, %v2401
        %v2410 = vpack.c.b16 %v2404, %v2403
        %v2411 = vpack.c.b16 %v2406, %v2405
        %v2412 = vpack.c.b16 %v2408, %v2407
        %2417 = vst [vmem:[#allocation4 + $0x38] sm:$0xff] %v2409
        %2418 = vst [vmem:[#allocation4 + $0x80] sm:$0xff] %v2410
        %2419 = vst [vmem:[#allocation4 + $0xc8] sm:$0xff] %v2411
        %2420 = vst [vmem:[#allocation4 + $0x110] sm:$0xff] %v2412
        %v2421 = vld [vmem:[%s2236] sm:$0xe]
        %v2422 = vld [vmem:[%s2236 + $0x4] sm:$0x1]
        %v2423 = vld [vmem:[%s2236 + $0x8] sm:$0xe]
        %v2424 = vld [vmem:[%s2236 + $0xc] sm:$0x1]
        %v2425 = vld [vmem:[%s2236 + $0x10] sm:$0xe]
        %v2426 = vld [vmem:[%s2236 + $0x14] sm:$0x1]
        %v2427 = vld [vmem:[%s2236 + $0x18] sm:$0xe]
        %v2428 = vld [vmem:[%s2236 + $0x1c] sm:$0x1]
        %v2429 = vld [vmem:[%s2236 + $0x20] sm:$0xe]
        %v2430 = vld [vmem:[%s2236 + $0x24] sm:$0x1]
        %v2431 = vld [vmem:[%s2236 + $0x28] sm:$0xe]
        %v2432 = vld [vmem:[%s2236 + $0x2c] sm:$0x1]
        %v2433 = vld [vmem:[%s2236 + $0x30] sm:$0xe]
        %v2434 = vld [vmem:[%s2236 + $0x34] sm:$0x1]
        %v2435 = vld [vmem:[%s2236 + $0x38] sm:$0xe]
        %v2436 = vld [vmem:[%s2236 + $0x3c] sm:$0x1]
        %v2453 = vrot.slane %v2421, 5
        %v2454 = vrot.slane %v2453, 4
        %v2455 = vrot.slane %v2422, 5
        %v2456 = vsel %vm1915, %v2454, %v2455
        %v2457 = vrot.slane %v2423, 5
        %v2458 = vrot.slane %v2457, 4
        %v2459 = vrot.slane %v2424, 5
        %v2460 = vsel %vm1915, %v2458, %v2459
        %v2461 = vrot.slane %v2425, 5
        %v2462 = vrot.slane %v2461, 4
        %v2463 = vrot.slane %v2426, 5
        %v2464 = vsel %vm1915, %v2462, %v2463
        %v2465 = vrot.slane %v2427, 5
        %v2466 = vrot.slane %v2465, 4
        %v2467 = vrot.slane %v2428, 5
        %v2468 = vsel %vm1915, %v2466, %v2467
        %v2469 = vrot.slane %v2429, 5
        %v2470 = vrot.slane %v2469, 4
        %v2471 = vrot.slane %v2430, 5
        %v2472 = vsel %vm1915, %v2470, %v2471
        %v2473 = vrot.slane %v2431, 5
        %v2474 = vrot.slane %v2473, 4
        %v2475 = vrot.slane %v2432, 5
        %v2476 = vsel %vm1915, %v2474, %v2475
        %v2477 = vrot.slane %v2433, 5
        %v2478 = vrot.slane %v2477, 4
        %v2479 = vrot.slane %v2434, 5
        %v2480 = vsel %vm1915, %v2478, %v2479
        %v2481 = vrot.slane %v2435, 5
        %v2482 = vrot.slane %v2481, 4
        %v2483 = vrot.slane %v2436, 5
        %v2484 = vsel %vm1915, %v2482, %v2483
        %v2485 = vunpack.c.l.b16 %v2456
        %v2486 = vunpack.c.l.b16 %v2460
        %v2487 = vunpack.c.l.b16 %v2464
        %v2488 = vunpack.c.l.b16 %v2468
        %v2489 = vunpack.c.l.b16 %v2472
        %v2490 = vunpack.c.l.b16 %v2476
        %v2491 = vunpack.c.l.b16 %v2480
        %v2492 = vunpack.c.l.b16 %v2484
        %v2493 = vpack.c.b16 %v2486, %v2485
        %v2494 = vpack.c.b16 %v2488, %v2487
        %v2495 = vpack.c.b16 %v2490, %v2489
        %v2496 = vpack.c.b16 %v2492, %v2491
        %2501 = vst [vmem:[#allocation4 + $0x40] sm:$0xff] %v2493
        %2502 = vst [vmem:[#allocation4 + $0x88] sm:$0xff] %v2494
        %2503 = vst [vmem:[#allocation4 + $0xd0] sm:$0xff] %v2495
        %2504 = vst [vmem:[#allocation4 + $0x118] sm:$0xff] %v2496
        %v2505 = vld [vmem:[#allocation4] sm:$0xff]
        %v2506 = vld [vmem:[#allocation4 + $0x8] sm:$0xff]
        %v2507 = vld [vmem:[#allocation4 + $0x10] sm:$0xff]
        %v2508 = vld [vmem:[#allocation4 + $0x18] sm:$0xff]
        %v2509 = vld [vmem:[#allocation4 + $0x20] sm:$0xff]
        %v2510 = vld [vmem:[#allocation4 + $0x28] sm:$0xff]
        %v2511 = vld [vmem:[#allocation4 + $0x30] sm:$0xff]
        %v2512 = vld [vmem:[#allocation4 + $0x38] sm:$0xff]
        %v2513 = vld [vmem:[#allocation4 + $0x40] sm:$0xff]
        %v2514 = vld [vmem:[#allocation4 + $0x48] sm:$0xff]
        %v2515 = vld [vmem:[#allocation4 + $0x50] sm:$0xff]
        %v2516 = vld [vmem:[#allocation4 + $0x58] sm:$0xff]
        %v2517 = vld [vmem:[#allocation4 + $0x60] sm:$0xff]
        %v2518 = vld [vmem:[#allocation4 + $0x68] sm:$0xff]
        %v2519 = vld [vmem:[#allocation4 + $0x70] sm:$0xff]
        %v2520 = vld [vmem:[#allocation4 + $0x78] sm:$0xff]
        %v2521 = vld [vmem:[#allocation4 + $0x80] sm:$0xff]
        %v2522 = vld [vmem:[#allocation4 + $0x88] sm:$0xff]
        %v2523 = vld [vmem:[#allocation4 + $0x90] sm:$0xff]
        %v2524 = vld [vmem:[#allocation4 + $0x98] sm:$0xff]
        %v2525 = vld [vmem:[#allocation4 + $0xa0] sm:$0xff]
        %v2526 = vld [vmem:[#allocation4 + $0xa8] sm:$0xff]
        %v2527 = vld [vmem:[#allocation4 + $0xb0] sm:$0xff]
        %v2528 = vld [vmem:[#allocation4 + $0xb8] sm:$0xff]
        %v2529 = vld [vmem:[#allocation4 + $0xc0] sm:$0xff]
        %v2530 = vld [vmem:[#allocation4 + $0xc8] sm:$0xff]
        %v2531 = vld [vmem:[#allocation4 + $0xd0] sm:$0xff]
        %v2532 = vld [vmem:[#allocation4 + $0xd8] sm:$0xff]
        %v2533 = vld [vmem:[#allocation4 + $0xe0] sm:$0xff]
        %v2534 = vld [vmem:[#allocation4 + $0xe8] sm:$0xff]
        %v2535 = vld [vmem:[#allocation4 + $0xf0] sm:$0xff]
        %v2536 = vld [vmem:[#allocation4 + $0xf8] sm:$0xff]
        %v2537 = vld [vmem:[#allocation4 + $0x100] sm:$0xff]
        %v2538 = vld [vmem:[#allocation4 + $0x108] sm:$0xff]
        %v2539 = vld [vmem:[#allocation4 + $0x110] sm:$0xff]
        %v2540 = vld [vmem:[#allocation4 + $0x118] sm:$0xff]
        %v2541 = vld [vmem:[%s3] sm:$0xf]
        %v2542 = vld [vmem:[%s3 + $0x4] sm:$0xf]
        %v2543 = vld [vmem:[%s3 + $0x8] sm:$0xf]
        %v2544 = vld [vmem:[%s3 + $0xc] sm:$0xf]
        %v2545 = vld [vmem:[%s3 + $0x10] sm:$0xf]
        %v2546 = vld [vmem:[%s3 + $0x14] sm:$0xf]
        %v2547 = vld [vmem:[%s3 + $0x18] sm:$0xf]
        %v2548 = vld [vmem:[%s3 + $0x1c] sm:$0xf]
        %v2549 = vld [vmem:[%s3 + $0x20] sm:$0xf]
        %v2550 = vld [vmem:[%s3 + $0x24] sm:$0xf]
        %v2551 = vld [vmem:[%s3 + $0x28] sm:$0xf]
        %v2552 = vld [vmem:[%s3 + $0x2c] sm:$0xf]
        %v2553 = vld [vmem:[%s3 + $0x30] sm:$0xf]
        %v2554 = vld [vmem:[%s3 + $0x34] sm:$0xf]
        %v2555 = vld [vmem:[%s3 + $0x38] sm:$0xf]
        %v2556 = vld [vmem:[%s3 + $0x3c] sm:$0xf]
        %v2557 = vld [vmem:[%s3 + $0x40] sm:$0xf]
        %v2558 = vld [vmem:[%s3 + $0x44] sm:$0xf]
        %v2559 = vld [vmem:[%s3 + $0x48] sm:$0xf]
        %v2560 = vld [vmem:[%s3 + $0x4c] sm:$0xf]
        %v2561 = vld [vmem:[%s3 + $0x50] sm:$0xf]
        %v2562 = vld [vmem:[%s3 + $0x54] sm:$0xf]
        %v2563 = vld [vmem:[%s3 + $0x58] sm:$0xf]
        %v2564 = vld [vmem:[%s3 + $0x5c] sm:$0xf]
        %v2565 = vld [vmem:[%s3 + $0x60] sm:$0xf]
        %v2566 = vld [vmem:[%s3 + $0x64] sm:$0xf]
        %v2567 = vld [vmem:[%s3 + $0x68] sm:$0xf]
        %v2568 = vld [vmem:[%s3 + $0x6c] sm:$0xf]
        %v2569 = vld [vmem:[%s3 + $0x70] sm:$0xf]
        %v2570 = vld [vmem:[%s3 + $0x74] sm:$0xf]
        %v2571 = vld [vmem:[%s3 + $0x78] sm:$0xf]
        %v2572 = vld [vmem:[%s3 + $0x7c] sm:$0xf]
        %v2573 = vld [vmem:[%s3 + $0x80] sm:$0xf]
        %v2574 = vld [vmem:[%s3 + $0x84] sm:$0xf]
        %v2575 = vld [vmem:[%s3 + $0x88] sm:$0xf]
        %v2576 = vld [vmem:[%s3 + $0x8c] sm:$0xf]
        %v2577 = vld [vmem:[%s3 + $0x90] sm:$0xf]
        %v2578 = vld [vmem:[%s3 + $0x94] sm:$0xf]
        %v2579 = vld [vmem:[%s3 + $0x98] sm:$0xf]
        %v2580 = vld [vmem:[%s3 + $0x9c] sm:$0xf]
        %v2581 = vld [vmem:[%s3 + $0xa0] sm:$0xf]
        %v2582 = vld [vmem:[%s3 + $0xa4] sm:$0xf]
        %v2583 = vld [vmem:[%s3 + $0xa8] sm:$0xf]
        %v2584 = vld [vmem:[%s3 + $0xac] sm:$0xf]
        %v2585 = vld [vmem:[%s3 + $0xb0] sm:$0xf]
        %v2586 = vld [vmem:[%s3 + $0xb4] sm:$0xf]
        %v2587 = vld [vmem:[%s3 + $0xb8] sm:$0xf]
        %v2588 = vld [vmem:[%s3 + $0xbc] sm:$0xf]
        %v2589 = vld [vmem:[%s3 + $0xc0] sm:$0xf]
        %v2590 = vld [vmem:[%s3 + $0xc4] sm:$0xf]
        %v2591 = vld [vmem:[%s3 + $0xc8] sm:$0xf]
        %v2592 = vld [vmem:[%s3 + $0xcc] sm:$0xf]
        %v2593 = vld [vmem:[%s3 + $0xd0] sm:$0xf]
        %v2594 = vld [vmem:[%s3 + $0xd4] sm:$0xf]
        %v2595 = vld [vmem:[%s3 + $0xd8] sm:$0xf]
        %v2596 = vld [vmem:[%s3 + $0xdc] sm:$0xf]
        %v2597 = vld [vmem:[%s3 + $0xe0] sm:$0xf]
        %v2598 = vld [vmem:[%s3 + $0xe4] sm:$0xf]
        %v2599 = vld [vmem:[%s3 + $0xe8] sm:$0xf]
        %v2600 = vld [vmem:[%s3 + $0xec] sm:$0xf]
        %v2601 = vld [vmem:[%s3 + $0xf0] sm:$0xf]
        %v2602 = vld [vmem:[%s3 + $0xf4] sm:$0xf]
        %v2603 = vld [vmem:[%s3 + $0xf8] sm:$0xf]
        %v2604 = vld [vmem:[%s3 + $0xfc] sm:$0xf]
        %v2605 = vld [vmem:[%s3 + $0x100] sm:$0xf]
        %v2606 = vld [vmem:[%s3 + $0x104] sm:$0xf]
        %v2607 = vld [vmem:[%s3 + $0x108] sm:$0xf]
        %v2608 = vld [vmem:[%s3 + $0x10c] sm:$0xf]
        %v2609 = vld [vmem:[%s3 + $0x110] sm:$0xf]
        %v2610 = vld [vmem:[%s3 + $0x114] sm:$0xf]
        %v2611 = vld [vmem:[%s3 + $0x118] sm:$0xf]
        %v2612 = vld [vmem:[%s3 + $0x11c] sm:$0xf]
        %v2613 = vld [vmem:[%s3 + $0x120] sm:$0xf]
        %v2614 = vld [vmem:[%s3 + $0x124] sm:$0xf]
        %v2615 = vld [vmem:[%s3 + $0x128] sm:$0xf]
        %v2616 = vld [vmem:[%s3 + $0x12c] sm:$0xf]
        %v2617 = vld [vmem:[%s3 + $0x130] sm:$0xf]
        %v2618 = vld [vmem:[%s3 + $0x134] sm:$0xf]
        %v2619 = vld [vmem:[%s3 + $0x138] sm:$0xf]
        %v2620 = vld [vmem:[%s3 + $0x13c] sm:$0xf]
        %v2621 = vld [vmem:[%s3 + $0x140] sm:$0xf]
        %v2622 = vld [vmem:[%s3 + $0x144] sm:$0xf]
        %v2623 = vld [vmem:[%s3 + $0x148] sm:$0xf]
        %v2624 = vld [vmem:[%s3 + $0x14c] sm:$0xf]
        %v2625 = vld [vmem:[%s3 + $0x150] sm:$0xf]
        %v2626 = vld [vmem:[%s3 + $0x154] sm:$0xf]
        %v2627 = vld [vmem:[%s3 + $0x158] sm:$0xf]
        %v2628 = vld [vmem:[%s3 + $0x15c] sm:$0xf]
        %v2629 = vld [vmem:[%s3 + $0x160] sm:$0xf]
        %v2630 = vld [vmem:[%s3 + $0x164] sm:$0xf]
        %v2631 = vld [vmem:[%s3 + $0x168] sm:$0xf]
        %v2632 = vld [vmem:[%s3 + $0x16c] sm:$0xf]
        %v2633 = vld [vmem:[%s3 + $0x170] sm:$0xf]
        %v2634 = vld [vmem:[%s3 + $0x174] sm:$0xf]
        %v2635 = vld [vmem:[%s3 + $0x178] sm:$0xf]
        %v2636 = vld [vmem:[%s3 + $0x17c] sm:$0xf]
        %v2637 = vld [vmem:[%s3 + $0x180] sm:$0xf]
        %v2638 = vld [vmem:[%s3 + $0x184] sm:$0xf]
        %v2639 = vld [vmem:[%s3 + $0x188] sm:$0xf]
        %v2640 = vld [vmem:[%s3 + $0x18c] sm:$0xf]
        %v2641 = vld [vmem:[%s3 + $0x190] sm:$0xf]
        %v2642 = vld [vmem:[%s3 + $0x194] sm:$0xf]
        %v2643 = vld [vmem:[%s3 + $0x198] sm:$0xf]
        %v2644 = vld [vmem:[%s3 + $0x19c] sm:$0xf]
        %v2645 = vld [vmem:[%s3 + $0x1a0] sm:$0xf]
        %v2646 = vld [vmem:[%s3 + $0x1a4] sm:$0xf]
        %v2647 = vld [vmem:[%s3 + $0x1a8] sm:$0xf]
        %v2648 = vld [vmem:[%s3 + $0x1ac] sm:$0xf]
        %v2649 = vld [vmem:[%s3 + $0x1b0] sm:$0xf]
        %v2650 = vld [vmem:[%s3 + $0x1b4] sm:$0xf]
        %v2651 = vld [vmem:[%s3 + $0x1b8] sm:$0xf]
        %v2652 = vld [vmem:[%s3 + $0x1bc] sm:$0xf]
        %v2653 = vld [vmem:[%s3 + $0x1c0] sm:$0xf]
        %v2654 = vld [vmem:[%s3 + $0x1c4] sm:$0xf]
        %v2655 = vld [vmem:[%s3 + $0x1c8] sm:$0xf]
        %v2656 = vld [vmem:[%s3 + $0x1cc] sm:$0xf]
        %v2657 = vld [vmem:[%s3 + $0x1d0] sm:$0xf]
        %v2658 = vld [vmem:[%s3 + $0x1d4] sm:$0xf]
        %v2659 = vld [vmem:[%s3 + $0x1d8] sm:$0xf]
        %v2660 = vld [vmem:[%s3 + $0x1dc] sm:$0xf]
        %v2661 = vld [vmem:[%s3 + $0x1e0] sm:$0xf]
        %v2662 = vld [vmem:[%s3 + $0x1e4] sm:$0xf]
        %v2663 = vld [vmem:[%s3 + $0x1e8] sm:$0xf]
        %v2664 = vld [vmem:[%s3 + $0x1ec] sm:$0xf]
        %v2665 = vld [vmem:[%s3 + $0x1f0] sm:$0xf]
        %v2666 = vld [vmem:[%s3 + $0x1f4] sm:$0xf]
        %v2667 = vld [vmem:[%s3 + $0x1f8] sm:$0xf]
        %v2668 = vld [vmem:[%s3 + $0x1fc] sm:$0xf]
        %v2669 = vld [vmem:[%s3 + $0x200] sm:$0xf]
        %v2670 = vld [vmem:[%s3 + $0x204] sm:$0xf]
        %v2671 = vld [vmem:[%s3 + $0x208] sm:$0xf]
        %v2672 = vld [vmem:[%s3 + $0x20c] sm:$0xf]
        %v2673 = vld [vmem:[%s3 + $0x210] sm:$0xf]
        %v2674 = vld [vmem:[%s3 + $0x214] sm:$0xf]
        %v2675 = vld [vmem:[%s3 + $0x218] sm:$0xf]
        %v2676 = vld [vmem:[%s3 + $0x21c] sm:$0xf]
        %v2677 = vld [vmem:[%s3 + $0x220] sm:$0xf]
        %v2678 = vld [vmem:[%s3 + $0x224] sm:$0xf]
        %v2679 = vld [vmem:[%s3 + $0x228] sm:$0xf]
        %v2680 = vld [vmem:[%s3 + $0x22c] sm:$0xf]
        %v2681 = vld [vmem:[%s3 + $0x230] sm:$0xf]
        %v2682 = vld [vmem:[%s3 + $0x234] sm:$0xf]
        %v2683 = vld [vmem:[%s3 + $0x238] sm:$0xf]
        %v2684 = vld [vmem:[%s3 + $0x23c] sm:$0xf]
        %v2685 = vld [vmem:[%s4] sm:$0x1]
        %v2687 = vlaneseq
        %v2688 = vshrl.u32 %v2687, 7
        %v2689 = vsub.s32 0, %v2688
        %v2690 = vrot.slane %v2685, %v2689
        %v2836 = vunpack.c.l.b16 %v2541
        %v2837 = vunpack.c.l.b16 %v2542
        %v2838 = vunpack.c.l.b16 %v2543
        %v2839 = vunpack.c.l.b16 %v2544
        %v2840 = vunpack.c.l.b16 %v2545
        %v2841 = vunpack.c.l.b16 %v2546
        %v2842 = vunpack.c.l.b16 %v2547
        %v2843 = vunpack.c.l.b16 %v2548
        %v2844 = vunpack.c.l.b16 %v2549
        %v2845 = vunpack.c.l.b16 %v2550
        %v2846 = vunpack.c.l.b16 %v2551
        %v2847 = vunpack.c.l.b16 %v2552
        %v2848 = vunpack.c.l.b16 %v2553
        %v2849 = vunpack.c.l.b16 %v2554
        %v2850 = vunpack.c.l.b16 %v2555
        %v2851 = vunpack.c.l.b16 %v2556
        %v2852 = vunpack.c.l.b16 %v2557
        %v2853 = vunpack.c.l.b16 %v2558
        %v2854 = vunpack.c.l.b16 %v2559
        %v2855 = vunpack.c.l.b16 %v2560
        %v2856 = vunpack.c.l.b16 %v2561
        %v2857 = vunpack.c.l.b16 %v2562
        %v2858 = vunpack.c.l.b16 %v2563
        %v2859 = vunpack.c.l.b16 %v2564
        %v2860 = vunpack.c.l.b16 %v2565
        %v2861 = vunpack.c.l.b16 %v2566
        %v2862 = vunpack.c.l.b16 %v2567
        %v2863 = vunpack.c.l.b16 %v2568
        %v2864 = vunpack.c.l.b16 %v2569
        %v2865 = vunpack.c.l.b16 %v2570
        %v2866 = vunpack.c.l.b16 %v2571
        %v2867 = vunpack.c.l.b16 %v2572
        %v2868 = vunpack.c.l.b16 %v2573
        %v2869 = vunpack.c.l.b16 %v2574
        %v2870 = vunpack.c.l.b16 %v2575
        %v2871 = vunpack.c.l.b16 %v2576
        %v2872 = vunpack.c.l.b16 %v2577
        %v2873 = vunpack.c.l.b16 %v2578
        %v2874 = vunpack.c.l.b16 %v2579
        %v2875 = vunpack.c.l.b16 %v2580
        %v2876 = vunpack.c.l.b16 %v2581
        %v2877 = vunpack.c.l.b16 %v2582
        %v2878 = vunpack.c.l.b16 %v2583
        %v2879 = vunpack.c.l.b16 %v2584
        %v2880 = vunpack.c.l.b16 %v2585
        %v2881 = vunpack.c.l.b16 %v2586
        %v2882 = vunpack.c.l.b16 %v2587
        %v2883 = vunpack.c.l.b16 %v2588
        %v2884 = vunpack.c.l.b16 %v2589
        %v2885 = vunpack.c.l.b16 %v2590
        %v2886 = vunpack.c.l.b16 %v2591
        %v2887 = vunpack.c.l.b16 %v2592
        %v2888 = vunpack.c.l.b16 %v2593
        %v2889 = vunpack.c.l.b16 %v2594
        %v2890 = vunpack.c.l.b16 %v2595
        %v2891 = vunpack.c.l.b16 %v2596
        %v2892 = vunpack.c.l.b16 %v2597
        %v2893 = vunpack.c.l.b16 %v2598
        %v2894 = vunpack.c.l.b16 %v2599
        %v2895 = vunpack.c.l.b16 %v2600
        %v2896 = vunpack.c.l.b16 %v2601
        %v2897 = vunpack.c.l.b16 %v2602
        %v2898 = vunpack.c.l.b16 %v2603
        %v2899 = vunpack.c.l.b16 %v2604
        %v2900 = vunpack.c.l.b16 %v2605
        %v2901 = vunpack.c.l.b16 %v2606
        %v2902 = vunpack.c.l.b16 %v2607
        %v2903 = vunpack.c.l.b16 %v2608
        %v2904 = vunpack.c.l.b16 %v2609
        %v2905 = vunpack.c.l.b16 %v2610
        %v2906 = vunpack.c.l.b16 %v2611
        %v2907 = vunpack.c.l.b16 %v2612
        %v2908 = vunpack.c.l.b16 %v2613
        %v2909 = vunpack.c.l.b16 %v2614
        %v2910 = vunpack.c.l.b16 %v2615
        %v2911 = vunpack.c.l.b16 %v2616
        %v2912 = vunpack.c.l.b16 %v2617
        %v2913 = vunpack.c.l.b16 %v2618
        %v2914 = vunpack.c.l.b16 %v2619
        %v2915 = vunpack.c.l.b16 %v2620
        %v2916 = vunpack.c.l.b16 %v2621
        %v2917 = vunpack.c.l.b16 %v2622
        %v2918 = vunpack.c.l.b16 %v2623
        %v2919 = vunpack.c.l.b16 %v2624
        %v2920 = vunpack.c.l.b16 %v2625
        %v2921 = vunpack.c.l.b16 %v2626
        %v2922 = vunpack.c.l.b16 %v2627
        %v2923 = vunpack.c.l.b16 %v2628
        %v2924 = vunpack.c.l.b16 %v2629
        %v2925 = vunpack.c.l.b16 %v2630
        %v2926 = vunpack.c.l.b16 %v2631
        %v2927 = vunpack.c.l.b16 %v2632
        %v2928 = vunpack.c.l.b16 %v2633
        %v2929 = vunpack.c.l.b16 %v2634
        %v2930 = vunpack.c.l.b16 %v2635
        %v2931 = vunpack.c.l.b16 %v2636
        %v2932 = vunpack.c.l.b16 %v2637
        %v2933 = vunpack.c.l.b16 %v2638
        %v2934 = vunpack.c.l.b16 %v2639
        %v2935 = vunpack.c.l.b16 %v2640
        %v2936 = vunpack.c.l.b16 %v2641
        %v2937 = vunpack.c.l.b16 %v2642
        %v2938 = vunpack.c.l.b16 %v2643
        %v2939 = vunpack.c.l.b16 %v2644
        %v2940 = vunpack.c.l.b16 %v2645
        %v2941 = vunpack.c.l.b16 %v2646
        %v2942 = vunpack.c.l.b16 %v2647
        %v2943 = vunpack.c.l.b16 %v2648
        %v2944 = vunpack.c.l.b16 %v2649
        %v2945 = vunpack.c.l.b16 %v2650
        %v2946 = vunpack.c.l.b16 %v2651
        %v2947 = vunpack.c.l.b16 %v2652
        %v2948 = vunpack.c.l.b16 %v2653
        %v2949 = vunpack.c.l.b16 %v2654
        %v2950 = vunpack.c.l.b16 %v2655
        %v2951 = vunpack.c.l.b16 %v2656
        %v2952 = vunpack.c.l.b16 %v2657
        %v2953 = vunpack.c.l.b16 %v2658
        %v2954 = vunpack.c.l.b16 %v2659
        %v2955 = vunpack.c.l.b16 %v2660
        %v2956 = vunpack.c.l.b16 %v2661
        %v2957 = vunpack.c.l.b16 %v2662
        %v2958 = vunpack.c.l.b16 %v2663
        %v2959 = vunpack.c.l.b16 %v2664
        %v2960 = vunpack.c.l.b16 %v2665
        %v2961 = vunpack.c.l.b16 %v2666
        %v2962 = vunpack.c.l.b16 %v2667
        %v2963 = vunpack.c.l.b16 %v2668
        %v2964 = vunpack.c.l.b16 %v2669
        %v2965 = vunpack.c.l.b16 %v2670
        %v2966 = vunpack.c.l.b16 %v2671
        %v2967 = vunpack.c.l.b16 %v2672
        %v2968 = vunpack.c.l.b16 %v2673
        %v2969 = vunpack.c.l.b16 %v2674
        %v2970 = vunpack.c.l.b16 %v2675
        %v2971 = vunpack.c.l.b16 %v2676
        %v2972 = vunpack.c.l.b16 %v2677
        %v2973 = vunpack.c.l.b16 %v2678
        %v2974 = vunpack.c.l.b16 %v2679
        %v2975 = vunpack.c.l.b16 %v2680
        %v2976 = vunpack.c.l.b16 %v2681
        %v2977 = vunpack.c.l.b16 %v2682
        %v2978 = vunpack.c.l.b16 %v2683
        %v2979 = vunpack.c.l.b16 %v2684
        %v2980 = vpack.c.b16 %v2837, %v2836
        %v2981 = vpack.c.b16 %v2839, %v2838
        %v2982 = vpack.c.b16 %v2841, %v2840
        %v2983 = vpack.c.b16 %v2843, %v2842
        %v2984 = vpack.c.b16 %v2845, %v2844
        %v2985 = vpack.c.b16 %v2847, %v2846
        %v2986 = vpack.c.b16 %v2849, %v2848
        %v2987 = vpack.c.b16 %v2851, %v2850
        %v2988 = vpack.c.b16 %v2853, %v2852
        %v2989 = vpack.c.b16 %v2855, %v2854
        %v2990 = vpack.c.b16 %v2857, %v2856
        %v2991 = vpack.c.b16 %v2859, %v2858
        %v2992 = vpack.c.b16 %v2861, %v2860
        %v2993 = vpack.c.b16 %v2863, %v2862
        %v2994 = vpack.c.b16 %v2865, %v2864
        %v2995 = vpack.c.b16 %v2867, %v2866
        %v2996 = vpack.c.b16 %v2869, %v2868
        %v2997 = vpack.c.b16 %v2871, %v2870
        %v2998 = vpack.c.b16 %v2873, %v2872
        %v2999 = vpack.c.b16 %v2875, %v2874
        %v3000 = vpack.c.b16 %v2877, %v2876
        %v3001 = vpack.c.b16 %v2879, %v2878
        %v3002 = vpack.c.b16 %v2881, %v2880
        %v3003 = vpack.c.b16 %v2883, %v2882
        %v3004 = vpack.c.b16 %v2885, %v2884
        %v3005 = vpack.c.b16 %v2887, %v2886
        %v3006 = vpack.c.b16 %v2889, %v2888
        %v3007 = vpack.c.b16 %v2891, %v2890
        %v3008 = vpack.c.b16 %v2893, %v2892
        %v3009 = vpack.c.b16 %v2895, %v2894
        %v3010 = vpack.c.b16 %v2897, %v2896
        %v3011 = vpack.c.b16 %v2899, %v2898
        %v3012 = vpack.c.b16 %v2901, %v2900
        %v3013 = vpack.c.b16 %v2903, %v2902
        %v3014 = vpack.c.b16 %v2905, %v2904
        %v3015 = vpack.c.b16 %v2907, %v2906
        %v3016 = vpack.c.b16 %v2909, %v2908
        %v3017 = vpack.c.b16 %v2911, %v2910
        %v3018 = vpack.c.b16 %v2913, %v2912
        %v3019 = vpack.c.b16 %v2915, %v2914
        %v3020 = vpack.c.b16 %v2917, %v2916
        %v3021 = vpack.c.b16 %v2919, %v2918
        %v3022 = vpack.c.b16 %v2921, %v2920
        %v3023 = vpack.c.b16 %v2923, %v2922
        %v3024 = vpack.c.b16 %v2925, %v2924
        %v3025 = vpack.c.b16 %v2927, %v2926
        %v3026 = vpack.c.b16 %v2929, %v2928
        %v3027 = vpack.c.b16 %v2931, %v2930
        %v3028 = vpack.c.b16 %v2933, %v2932
        %v3029 = vpack.c.b16 %v2935, %v2934
        %v3030 = vpack.c.b16 %v2937, %v2936
        %v3031 = vpack.c.b16 %v2939, %v2938
        %v3032 = vpack.c.b16 %v2941, %v2940
        %v3033 = vpack.c.b16 %v2943, %v2942
        %v3034 = vpack.c.b16 %v2945, %v2944
        %v3035 = vpack.c.b16 %v2947, %v2946
        %v3036 = vpack.c.b16 %v2949, %v2948
        %v3037 = vpack.c.b16 %v2951, %v2950
        %v3038 = vpack.c.b16 %v2953, %v2952
        %v3039 = vpack.c.b16 %v2955, %v2954
        %v3040 = vpack.c.b16 %v2957, %v2956
        %v3041 = vpack.c.b16 %v2959, %v2958
        %v3042 = vpack.c.b16 %v2961, %v2960
        %v3043 = vpack.c.b16 %v2963, %v2962
        %v3044 = vpack.c.b16 %v2965, %v2964
        %v3045 = vpack.c.b16 %v2967, %v2966
        %v3046 = vpack.c.b16 %v2969, %v2968
        %v3047 = vpack.c.b16 %v2971, %v2970
        %v3048 = vpack.c.b16 %v2973, %v2972
        %v3049 = vpack.c.b16 %v2975, %v2974
        %v3050 = vpack.c.b16 %v2977, %v2976
        %v3051 = vpack.c.b16 %v2979, %v2978
        %3124 = vmatprep.subr.bf16.mxu0 0
        %3125 = vmatpush1.bf16.msra.mxu0 %v2980
        %3126 = vmatprep.subr.bf16.mxu0 0
        %3127 = vmatpush1.bf16.msra.mxu0 %v2981
        %3128 = vmatprep.subr.bf16.mxu0 0
        %3129 = vmatpush1.bf16.msra.mxu0 %v2982
        %3130 = vmatprep.subr.bf16.mxu0 0
        %3131 = vmatpush1.bf16.msra.mxu0 %v2983
        %3132 = vmatprep.subr.bf16.mxu0 0
        %3133 = vmatpush1.bf16.msra.mxu0 %v2984
        %3134 = vmatprep.subr.bf16.mxu0 0
        %3135 = vmatpush1.bf16.msra.mxu0 %v2985
        %3136 = vmatprep.subr.bf16.mxu0 0
        %3137 = vmatpush1.bf16.msra.mxu0 %v2986
        %3138 = vmatprep.subr.bf16.mxu0 0
        %3139 = vmatpush1.bf16.msra.mxu0 %v2987
        %3140 = vmatprep.subr.bf16.mxu0 0
        %3141 = vmatpush1.bf16.msra.mxu0 %v2988
        %3142 = vmatprep.subr.bf16.mxu0 0
        %3143 = vmatpush1.bf16.msra.mxu0 %v2989
        %3144 = vmatprep.subr.bf16.mxu0 0
        %3145 = vmatpush1.bf16.msra.mxu0 %v2990
        %3146 = vmatprep.subr.bf16.mxu0 0
        %3147 = vmatpush1.bf16.msra.mxu0 %v2991
        %3148 = vmatprep.subr.bf16.mxu0 0
        %3149 = vmatpush1.bf16.msra.mxu0 %v2992
        %3150 = vmatprep.subr.bf16.mxu0 0
        %3151 = vmatpush1.bf16.msra.mxu0 %v2993
        %3152 = vmatprep.subr.bf16.mxu0 0
        %3153 = vmatpush1.bf16.msra.mxu0 %v2994
        %3154 = vmatprep.subr.bf16.mxu0 0
        %3155 = vmatpush1.bf16.msra.mxu0 %v2995
        %3156 = vmatprep.mubr.bf16.mxu0 %v2506
        %3157 = vmatmul.mubr.bf16.gmra.mrb[0].mxu0 %v2505
        %v3158 = vpop.f32.mrb[0].mxu0
        %v3159 = vadd.f32 %v2690, %v3158
        %v3160 = vpop.f32.mrb[0].mxu0
        %v3161 = vpop.f32.mrb[0].mxu0
        %v3162 = vadd.f32 %v2690, %v3161
        %v3163 = vpop.f32.mrb[0].mxu0
        %3164 = vmatprep.mubr.bf16.mxu0 %v2515
        %3165 = vmatmul.mubr.bf16.gmra.mrb[0].mxu0 %v2514
        %v3166 = vpop.f32.mrb[0].mxu0
        %v3167 = vadd.f32 %v2690, %v3166
        %v3168 = vpop.f32.mrb[0].mxu0
        %v3169 = vpop.f32.mrb[0].mxu0
        %v3170 = vadd.f32 %v2690, %v3169
        %v3171 = vpop.f32.mrb[0].mxu0
        %3172 = vmatprep.mubr.bf16.mxu0 %v2524
        %3173 = vmatmul.mubr.bf16.gmra.mrb[0].mxu0 %v2523
        %v3174 = vpop.f32.mrb[0].mxu0
        %v3175 = vadd.f32 %v2690, %v3174
        %v3176 = vpop.f32.mrb[0].mxu0
        %v3177 = vpop.f32.mrb[0].mxu0
        %v3178 = vadd.f32 %v2690, %v3177
        %v3179 = vpop.f32.mrb[0].mxu0
        %3180 = vmatprep.mubr.bf16.mxu0 %v2533
        %3181 = vmatmul.mubr.bf16.gmra.mrb[0].mxu0 %v2532
        %v3182 = vpop.f32.mrb[0].mxu0
        %v3183 = vadd.f32 %v2690, %v3182
        %v3184 = vpop.f32.mrb[0].mxu0
        %v3185 = vpop.f32.mrb[0].mxu0
        %v3186 = vadd.f32 %v2690, %v3185
        %v3187 = vpop.f32.mrb[0].mxu0
        %3188 = vdwg.mxu0
        %3189 = vmatprep.subr.bf16.mxu0 0
        %3190 = vmatpush1.bf16.msra.mxu0 %v2996
        %3191 = vmatprep.subr.bf16.mxu0 0
        %3192 = vmatpush1.bf16.msra.mxu0 %v2997
        %3193 = vmatprep.subr.bf16.mxu0 0
        %3194 = vmatpush1.bf16.msra.mxu0 %v2998
        %3195 = vmatprep.subr.bf16.mxu0 0
        %3196 = vmatpush1.bf16.msra.mxu0 %v2999
        %3197 = vmatprep.subr.bf16.mxu0 0
        %3198 = vmatpush1.bf16.msra.mxu0 %v3000
        %3199 = vmatprep.subr.bf16.mxu0 0
        %3200 = vmatpush1.bf16.msra.mxu0 %v3001
        %3201 = vmatprep.subr.bf16.mxu0 0
        %3202 = vmatpush1.bf16.msra.mxu0 %v3002
        %3203 = vmatprep.subr.bf16.mxu0 0
        %3204 = vmatpush1.bf16.msra.mxu0 %v3003
        %3205 = vmatprep.subr.bf16.mxu0 0
        %3206 = vmatpush1.bf16.msra.mxu0 %v3004
        %3207 = vmatprep.subr.bf16.mxu0 0
        %3208 = vmatpush1.bf16.msra.mxu0 %v3005
        %3209 = vmatprep.subr.bf16.mxu0 0
        %3210 = vmatpush1.bf16.msra.mxu0 %v3006
        %3211 = vmatprep.subr.bf16.mxu0 0
        %3212 = vmatpush1.bf16.msra.mxu0 %v3007
        %3213 = vmatprep.subr.bf16.mxu0 0
        %3214 = vmatpush1.bf16.msra.mxu0 %v3008
        %3215 = vmatprep.subr.bf16.mxu0 0
        %3216 = vmatpush1.bf16.msra.mxu0 %v3009
        %3217 = vmatprep.subr.bf16.mxu0 0
        %3218 = vmatpush1.bf16.msra.mxu0 %v3010
        %3219 = vmatprep.subr.bf16.mxu0 0
        %3220 = vmatpush1.bf16.msra.mxu0 %v3011
        %3221 = vmatprep.mubr.bf16.mxu0 %v2508
        %3222 = vmatmul.mubr.bf16.gmra.mrb[0].mxu0 %v2507
        %v3223 = vpop.f32.mrb[0].mxu0
        %v3224 = vadd.f32 %v3159, %v3223
        %v3225 = vpop.f32.mrb[0].mxu0
        %v3226 = vpop.f32.mrb[0].mxu0
        %v3227 = vadd.f32 %v3162, %v3226
        %v3228 = vpop.f32.mrb[0].mxu0
        %3229 = vmatprep.mubr.bf16.mxu0 %v2517
        %3230 = vmatmul.mubr.bf16.gmra.mrb[0].mxu0 %v2516
        %v3231 = vpop.f32.mrb[0].mxu0
        %v3232 = vadd.f32 %v3167, %v3231
        %v3233 = vpop.f32.mrb[0].mxu0
        %v3234 = vpop.f32.mrb[0].mxu0
        %v3235 = vadd.f32 %v3170, %v3234
        %v3236 = vpop.f32.mrb[0].mxu0
        %3237 = vmatprep.mubr.bf16.mxu0 %v2526
        %3238 = vmatmul.mubr.bf16.gmra.mrb[0].mxu0 %v2525
        %v3239 = vpop.f32.mrb[0].mxu0
        %v3240 = vadd.f32 %v3175, %v3239
        %v3241 = vpop.f32.mrb[0].mxu0
        %v3242 = vpop.f32.mrb[0].mxu0
        %v3243 = vadd.f32 %v3178, %v3242
        %v3244 = vpop.f32.mrb[0].mxu0
        %3245 = vmatprep.mubr.bf16.mxu0 %v2535
        %3246 = vmatmul.mubr.bf16.gmra.mrb[0].mxu0 %v2534
        %v3247 = vpop.f32.mrb[0].mxu0
        %v3248 = vadd.f32 %v3183, %v3247
        %v3249 = vpop.f32.mrb[0].mxu0
        %v3250 = vpop.f32.mrb[0].mxu0
        %v3251 = vadd.f32 %v3186, %v3250
        %v3252 = vpop.f32.mrb[0].mxu0
        %3253 = vdwg.mxu0
        %3254 = vmatprep.subr.bf16.mxu0 0
        %3255 = vmatpush1.bf16.msra.mxu0 %v3012
        %3256 = vmatprep.subr.bf16.mxu0 0
        %3257 = vmatpush1.bf16.msra.mxu0 %v3013
        %3258 = vmatprep.subr.bf16.mxu0 0
        %3259 = vmatpush1.bf16.msra.mxu0 %v3014
        %3260 = vmatprep.subr.bf16.mxu0 0
        %3261 = vmatpush1.bf16.msra.mxu0 %v3015
        %3262 = vmatprep.subr.bf16.mxu0 0
        %3263 = vmatpush1.bf16.msra.mxu0 %v3016
        %3264 = vmatprep.subr.bf16.mxu0 0
        %3265 = vmatpush1.bf16.msra.mxu0 %v3017
        %3266 = vmatprep.subr.bf16.mxu0 0
        %3267 = vmatpush1.bf16.msra.mxu0 %v3018
        %3268 = vmatprep.subr.bf16.mxu0 0
        %3269 = vmatpush1.bf16.msra.mxu0 %v3019
        %3270 = vmatprep.subr.bf16.mxu0 0
        %3271 = vmatpush1.bf16.msra.mxu0 %v3020
        %3272 = vmatprep.subr.bf16.mxu0 0
        %3273 = vmatpush1.bf16.msra.mxu0 %v3021
        %3274 = vmatprep.subr.bf16.mxu0 0
        %3275 = vmatpush1.bf16.msra.mxu0 %v3022
        %3276 = vmatprep.subr.bf16.mxu0 0
        %3277 = vmatpush1.bf16.msra.mxu0 %v3023
        %3278 = vmatprep.subr.bf16.mxu0 0
        %3279 = vmatpush1.bf16.msra.mxu0 %v3024
        %3280 = vmatprep.subr.bf16.mxu0 0
        %3281 = vmatpush1.bf16.msra.mxu0 %v3025
        %3282 = vmatprep.subr.bf16.mxu0 0
        %3283 = vmatpush1.bf16.msra.mxu0 %v3026
        %3284 = vmatprep.subr.bf16.mxu0 0
        %3285 = vmatpush1.bf16.msra.mxu0 %v3027
        %3286 = vmatprep.mubr.bf16.mxu0 %v2510
        %3287 = vmatmul.mubr.bf16.gmra.mrb[0].mxu0 %v2509
        %v3288 = vpop.f32.mrb[0].mxu0
        %v3289 = vadd.f32 %v3224, %v3288
        %v3290 = vpop.f32.mrb[0].mxu0
        %v3291 = vpop.f32.mrb[0].mxu0
        %v3292 = vadd.f32 %v3227, %v3291
        %v3293 = vpop.f32.mrb[0].mxu0
        %3294 = vmatprep.mubr.bf16.mxu0 %v2519
        %3295 = vmatmul.mubr.bf16.gmra.mrb[0].mxu0 %v2518
        %v3296 = vpop.f32.mrb[0].mxu0
        %v3297 = vadd.f32 %v3232, %v3296
        %v3298 = vpop.f32.mrb[0].mxu0
        %v3299 = vpop.f32.mrb[0].mxu0
        %v3300 = vadd.f32 %v3235, %v3299
        %v3301 = vpop.f32.mrb[0].mxu0
        %3302 = vmatprep.mubr.bf16.mxu0 %v2528
        %3303 = vmatmul.mubr.bf16.gmra.mrb[0].mxu0 %v2527
        %v3304 = vpop.f32.mrb[0].mxu0
        %v3305 = vadd.f32 %v3240, %v3304
        %v3306 = vpop.f32.mrb[0].mxu0
        %v3307 = vpop.f32.mrb[0].mxu0
        %v3308 = vadd.f32 %v3243, %v3307
        %v3309 = vpop.f32.mrb[0].mxu0
        %3310 = vmatprep.mubr.bf16.mxu0 %v2537
        %3311 = vmatmul.mubr.bf16.gmra.mrb[0].mxu0 %v2536
        %v3312 = vpop.f32.mrb[0].mxu0
        %v3313 = vadd.f32 %v3248, %v3312
        %v3314 = vpop.f32.mrb[0].mxu0
        %v3315 = vpop.f32.mrb[0].mxu0
        %v3316 = vadd.f32 %v3251, %v3315
        %v3317 = vpop.f32.mrb[0].mxu0
        %3318 = vdwg.mxu0
        %3319 = vmatprep.subr.bf16.mxu0 0
        %3320 = vmatpush1.bf16.msra.mxu0 %v3028
        %3321 = vmatprep.subr.bf16.mxu0 0
        %3322 = vmatpush1.bf16.msra.mxu0 %v3029
        %3323 = vmatprep.subr.bf16.mxu0 0
        %3324 = vmatpush1.bf16.msra.mxu0 %v3030
        %3325 = vmatprep.subr.bf16.mxu0 0
        %3326 = vmatpush1.bf16.msra.mxu0 %v3031
        %3327 = vmatprep.subr.bf16.mxu0 0
        %3328 = vmatpush1.bf16.msra.mxu0 %v3032
        %3329 = vmatprep.subr.bf16.mxu0 0
        %3330 = vmatpush1.bf16.msra.mxu0 %v3033
        %3331 = vmatprep.subr.bf16.mxu0 0
        %3332 = vmatpush1.bf16.msra.mxu0 %v3034
        %3333 = vmatprep.subr.bf16.mxu0 0
        %3334 = vmatpush1.bf16.msra.mxu0 %v3035
        %3335 = vmatprep.subr.bf16.mxu0 0
        %3336 = vmatpush1.bf16.msra.mxu0 %v3036
        %3337 = vmatprep.subr.bf16.mxu0 0
        %3338 = vmatpush1.bf16.msra.mxu0 %v3037
        %3339 = vmatprep.subr.bf16.mxu0 0
        %3340 = vmatpush1.bf16.msra.mxu0 %v3038
        %3341 = vmatprep.subr.bf16.mxu0 0
        %3342 = vmatpush1.bf16.msra.mxu0 %v3039
        %3343 = vmatprep.subr.bf16.mxu0 0
        %3344 = vmatpush1.bf16.msra.mxu0 %v3040
        %3345 = vmatprep.subr.bf16.mxu0 0
        %3346 = vmatpush1.bf16.msra.mxu0 %v3041
        %3347 = vmatprep.subr.bf16.mxu0 0
        %3348 = vmatpush1.bf16.msra.mxu0 %v3042
        %3349 = vmatprep.subr.bf16.mxu0 0
        %3350 = vmatpush1.bf16.msra.mxu0 %v3043
        %3351 = vmatprep.mubr.bf16.mxu0 %v2512
        %3352 = vmatmul.mubr.bf16.gmra.mrb[0].mxu0 %v2511
        %v3353 = vpop.f32.mrb[0].mxu0
        %v3354 = vadd.f32 %v3289, %v3353
        %v3355 = vpop.f32.mrb[0].mxu0
        %v3356 = vpop.f32.mrb[0].mxu0
        %v3357 = vadd.f32 %v3292, %v3356
        %v3358 = vpop.f32.mrb[0].mxu0
        %3359 = vmatprep.mubr.bf16.mxu0 %v2521
        %3360 = vmatmul.mubr.bf16.gmra.mrb[0].mxu0 %v2520
        %v3361 = vpop.f32.mrb[0].mxu0
        %v3362 = vadd.f32 %v3297, %v3361
        %v3363 = vpop.f32.mrb[0].mxu0
        %v3364 = vpop.f32.mrb[0].mxu0
        %v3365 = vadd.f32 %v3300, %v3364
        %v3366 = vpop.f32.mrb[0].mxu0
        %3367 = vmatprep.mubr.bf16.mxu0 %v2530
        %3368 = vmatmul.mubr.bf16.gmra.mrb[0].mxu0 %v2529
        %v3369 = vpop.f32.mrb[0].mxu0
        %v3370 = vadd.f32 %v3305, %v3369
        %v3371 = vpop.f32.mrb[0].mxu0
        %v3372 = vpop.f32.mrb[0].mxu0
        %v3373 = vadd.f32 %v3308, %v3372
        %v3374 = vpop.f32.mrb[0].mxu0
        %3375 = vmatprep.mubr.bf16.mxu0 %v2539
        %3376 = vmatmul.mubr.bf16.gmra.mrb[0].mxu0 %v2538
        %v3377 = vpop.f32.mrb[0].mxu0
        %v3378 = vadd.f32 %v3313, %v3377
        %v3379 = vpop.f32.mrb[0].mxu0
        %v3380 = vpop.f32.mrb[0].mxu0
        %v3381 = vadd.f32 %v3316, %v3380
        %v3382 = vpop.f32.mrb[0].mxu0
        %3383 = vdwg.mxu0
        %3384 = vmatprep.subr.bf16.mxu0 0
        %3385 = vmatpush1.bf16.msra.mxu0 %v3044
        %3386 = vmatprep.subr.bf16.mxu0 0
        %3387 = vmatpush1.bf16.msra.mxu0 %v3045
        %3388 = vmatprep.subr.bf16.mxu0 0
        %3389 = vmatpush1.bf16.msra.mxu0 %v3046
        %3390 = vmatprep.subr.bf16.mxu0 0
        %3391 = vmatpush1.bf16.msra.mxu0 %v3047
        %3392 = vmatprep.subr.bf16.mxu0 0
        %3393 = vmatpush1.bf16.msra.mxu0 %v3048
        %3394 = vmatprep.subr.bf16.mxu0 0
        %3395 = vmatpush1.bf16.msra.mxu0 %v3049
        %3396 = vmatprep.subr.bf16.mxu0 0
        %3397 = vmatpush1.bf16.msra.mxu0 %v3050
        %3398 = vmatprep.subr.bf16.mxu0 0
        %3399 = vmatpush1.bf16.msra.mxu0 %v3051
        %3400 = vmatprep.subr.bf16.mxu0 0
        %3401 = vmatpush1.bf16.msra.mxu0 0
        %3402 = vmatprep.subr.bf16.mxu0 0
        %3403 = vmatpush1.bf16.msra.mxu0 0
        %3404 = vmatprep.subr.bf16.mxu0 0
        %3405 = vmatpush1.bf16.msra.mxu0 0
        %3406 = vmatprep.subr.bf16.mxu0 0
        %3407 = vmatpush1.bf16.msra.mxu0 0
        %3408 = vmatprep.subr.bf16.mxu0 0
        %3409 = vmatpush1.bf16.msra.mxu0 0
        %3410 = vmatprep.subr.bf16.mxu0 0
        %3411 = vmatpush1.bf16.msra.mxu0 0
        %3412 = vmatprep.subr.bf16.mxu0 0
        %3413 = vmatpush1.bf16.msra.mxu0 0
        %3414 = vmatprep.subr.bf16.mxu0 0
        %3415 = vmatpush1.bf16.msra.mxu0 0
        %3416 = vmatprep.mubr.bf16.mxu0 0
        %3417 = vmatmul.mubr.bf16.gmra.mrb[0].mxu0 %v2513
        %v3418 = vpop.f32.mrb[0].mxu0
        %v3419 = vadd.f32 %v3354, %v3418
        %v3420 = vpop.f32.mrb[0].mxu0
        %v3421 = vpop.f32.mrb[0].mxu0
        %v3422 = vadd.f32 %v3357, %v3421
        %v3423 = vpop.f32.mrb[0].mxu0
        %3424 = vmatprep.mubr.bf16.mxu0 0
        %3425 = vmatmul.mubr.bf16.gmra.mrb[0].mxu0 %v2522
        %v3426 = vpop.f32.mrb[0].mxu0
        %v3427 = vadd.f32 %v3362, %v3426
        %v3428 = vpop.f32.mrb[0].mxu0
        %v3429 = vpop.f32.mrb[0].mxu0
        %v3430 = vadd.f32 %v3365, %v3429
        %v3431 = vpop.f32.mrb[0].mxu0
        %3432 = vmatprep.mubr.bf16.mxu0 0
        %3433 = vmatmul.mubr.bf16.gmra.mrb[0].mxu0 %v2531
        %v3434 = vpop.f32.mrb[0].mxu0
        %v3435 = vadd.f32 %v3370, %v3434
        %v3436 = vpop.f32.mrb[0].mxu0
        %v3437 = vpop.f32.mrb[0].mxu0
        %v3438 = vadd.f32 %v3373, %v3437
        %v3439 = vpop.f32.mrb[0].mxu0
        %3440 = vmatprep.mubr.bf16.mxu0 0
        %3441 = vmatmul.mubr.bf16.gmra.mrb[0].mxu0 %v2540
        %v3442 = vpop.f32.mrb[0].mxu0
        %v3443 = vadd.f32 %v3378, %v3442
        %v3444 = vpop.f32.mrb[0].mxu0
        %v3445 = vpop.f32.mrb[0].mxu0
        %v3446 = vadd.f32 %v3381, %v3445
        %v3447 = vpop.f32.mrb[0].mxu0
        %3448 = vdwg.mxu0
        %v3449 = vmul.f32 %v3419, 0.01
        %v3450 = vmul.f32 %v3422, 0.01
        %v3451 = vmul.f32 %v3427, 0.01
        %v3452 = vmul.f32 %v3430, 0.01
        %v3453 = vmul.f32 %v3435, 0.01
        %v3454 = vmul.f32 %v3438, 0.01
        %v3455 = vmul.f32 %v3443, 0.01
        %v3456 = vmul.f32 %v3446, 0.01
        %v3457 = vmax.f32 %v3419, %v3449
        %v3458 = vmax.f32 %v3422, %v3450
        %v3459 = vmax.f32 %v3427, %v3451
        %v3460 = vmax.f32 %v3430, %v3452
        %v3461 = vmax.f32 %v3435, %v3453
        %v3462 = vmax.f32 %v3438, %v3454
        %v3463 = vmax.f32 %v3443, %v3455
        %v3464 = vmax.f32 %v3446, %v3456
        %3465 = vst [vmem:[%s217] sm:$0xff] %v3457
        %3466 = vst [vmem:[%s217 + $0x8] sm:$0xff] %v3458
        %3467 = vst [vmem:[%s217 + $0x10] sm:$0xff] %v3459
        %3468 = vst [vmem:[%s217 + $0x18] sm:$0xff] %v3460
        %3469 = vst [vmem:[%s217 + $0x20] sm:$0xff] %v3461
        %3470 = vst [vmem:[%s217 + $0x28] sm:$0xff] %v3462
        %3471 = vst [vmem:[%s217 + $0x30] sm:$0xff] %v3463
        %3472 = vst [vmem:[%s217 + $0x38] sm:$0xff] %v3464
        %s3473 = sand.u32 %s137, 1
        %s3474 = scalar_lea.sflag [#allocation6], %s3473
        %s3475 = sand.u32 %s137, 1
        %s3476 = smul.addr %s3475, 64
        %s3477 = scalar_lea.vmem [#allocation5], %s3476
        // Predicated region
        $region41: #{tpu_custom_call.1} parent=39 // pred_check
          %p3478 = pneg %p147
        $region42: #{tpu_custom_call.1} parent=39 // pred_check_branch
          %3480 = sbr.rel (%p3478) target = $region44
        $region43: #{tpu_custom_call.1} parent=39 // pred_region
          %s3482 = ssub.s32 1024, 1024
          %3483 = vsyncadd %s3474, %s3482
          %s3484 = smul.addr %s19, 8
          %s3485 = smul.addr %s3484, 128
          %s3486 = scalar_lea.hbm %s5, %s3485
          %s3487 = sshll.u32 %s3477, 4
          %s3488 = int_to_ptr.vmem [resolvable:$true] %s3487
          %3493 = dma.vmem_to_hbm [thread:$0]  %s3488, 1024, %s3486, %s3474, 128, 128, 8
        $region44: #{tpu_custom_call.1} parent=39 // pred_fallthru
          _
      $region40: #{tpu_custom_call.1} parent=5 // pred_fallthru
        _
      %p3494 = scmp.le.s32.totalorder 2, %s14
      // Predicated region
      $region45: #{tpu_custom_call.1} parent=5 // pred_check
        %p3495 = pneg %p3494
      $region46: #{tpu_custom_call.1} parent=5 // pred_check_branch
        %3497 = sbr.rel (%p3495) target = $region48
      $region47: #{tpu_custom_call.1} parent=5 // pred_region
        %s3498 = ssub.s32 %s14, 2
        // Predicated region
        $region49: #{tpu_custom_call.1} parent=47 // pred_check
          %p3499 = pneg %p153
        $region50: #{tpu_custom_call.1} parent=47 // pred_check_branch
          %3501 = sbr.rel (%p3499) target = $region52
        $region51: #{tpu_custom_call.1} parent=47 // pred_region
          %s3502 = sand.u32 %s138, 1
          %s3503 = scalar_lea.sflag [#allocation6], %s3502
          %s3504 = sand.u32 %s138, 1
          %s3505 = smul.addr %s3504, 64
          %s3506 = scalar_lea.vmem [#allocation5], %s3505
          %3507 = dma.done %s3503, 1024
        $region52: #{tpu_custom_call.1} parent=47 // pred_fallthru
          _
      $region48: #{tpu_custom_call.1} parent=5 // pred_fallthru
        _
    $region6: #{tpu_custom_call.1} parent=1 // loop_footer
      %s18 = sadd.s32 1, %s14
    $region7: #{tpu_custom_call.1} parent=1 // loop_footer_branch
      %13 = sbr.rel target = $region3
    $region8: #{tpu_custom_call.1} parent=1 // loop_exit
      _
    %3508 = vsyncpa [#allocation6], 1
    %s3509 = scalar_lea.sflag [#allocation6], 1
    %3510 = vsyncpa %s3509, 1

</llo_original>
